<compile_context>
chip_gen: v6e
topology: v6e:2x2x1
jax: 0.10.0
libtpu: 0.0.40
codegen_flags: <defaults>
</compile_context>

<pallas_src>
import math
import jax
import jax.numpy as jnp
from jax.experimental import pallas as pl
from jax.experimental.pallas import tpu as pltpu

LEAKY_ALPHA = 0.33
BN_EPS = 1e-5


def _leaky(x):
    return jnp.where(x > 0, x, LEAKY_ALPHA * x)


# ----------------------------- fused Pallas kernel -----------------------------

def make_fused_kernel(B, N, n_e2e):
    """Builds the fused BrainNetCNN kernel for static (batch, n_nodes, #e2e layers)."""

    def lane_flatten(m):
        # (B*N, F) with rows (b, k)  ->  (B, N*F) with [b, k*F + f] = m[b*N + k, f]
        per_b = []
        for b in range(B):
            blk = m[b * N:(b + 1) * N, :]
            per_b.append(
                jnp.concatenate([blk[k:k + 1, :] for k in range(N)], axis=-1))
        return per_b[0] if B == 1 else jnp.concatenate(per_b, axis=0)

    def rows_broadcast(m):
        # (B, L) -> (B*N, L) with out[b*N + k, :] = m[b, :]
        per_b = [jnp.broadcast_to(m[b:b + 1, :], (N, m.shape[-1])) for b in range(B)]
        return per_b[0] if B == 1 else jnp.concatenate(per_b, axis=0)

    def kernel(*refs):
        out_ref = refs[-1]
        # a_r: rows (b, i);  a_c: rows (b, j); lanes are the per-layer contraction dim.
        a_r = refs[0][...]
        a_c = refs[1][...]
        pos = 2
        for l in range(n_e2e):
            wr = refs[pos][...]
            br = refs[pos + 1][...]
            wc = refs[pos + 2][...]
            bc = refs[pos + 3][...]
            pos += 4
            row = jnp.dot(a_r, wr, preferred_element_type=jnp.float32) + br  # (B*N, F) rows (b,i)
            col = jnp.dot(a_c, wc, preferred_element_type=jnp.float32) + bc  # (B*N, F) rows (b,j)
            F = row.shape[-1]
            # Lane-dense combine:
            #   a_r[(b,i), j*F+f] = leaky(row[(b,i),f] + col[(b,j),f])
            row_tile = jnp.concatenate([row] * N, axis=-1)          # (B*N, N*F)
            col_bcast = rows_broadcast(lane_flatten(col))           # (B*N, N*F)
            a_r = _leaky(row_tile + col_bcast)                      # rows (b,i), lanes (j,f)
            if l + 1 < n_e2e:
                col_tile = jnp.concatenate([col] * N, axis=-1)
                row_bcast = rows_broadcast(lane_flatten(row))
                a_c = _leaky(col_tile + row_bcast)                  # rows (b,j), lanes (i,f)
            del F

        we2n = refs[pos][...]
        be2n = refs[pos + 1][...]
        wn2g = refs[pos + 2][...]
        bn2g = refs[pos + 3][...]
        w1 = refs[pos + 4][...]
        b1 = refs[pos + 5][...]
        w2 = refs[pos + 6][...]
        b2 = refs[pos + 7][...]
        w3 = refs[pos + 8][...]
        b3 = refs[pos + 9][...]

        # Edge2Node (1,N) conv + LeakyReLU (+ eval-mode dropout = identity)
        e2n = _leaky(jnp.dot(a_r, we2n, preferred_element_type=jnp.float32) + be2n)  # (B*N, G)
        # Node2Graph (N,1) conv + LeakyReLU, consuming the lane-dense (B, N*G) slab
        g = _leaky(jnp.dot(lane_flatten(e2n), wn2g,
                           preferred_element_type=jnp.float32) + bn2g)               # (B, Q)
        # Dense MLP; BatchNorm1d eval with freshly-initialized running stats.
        s = 1.0 / math.sqrt(1.0 + BN_EPS)
        h = _leaky(jnp.dot(g, w1, preferred_element_type=jnp.float32) + b1) * s
        h = _leaky(jnp.dot(h, w2, preferred_element_type=jnp.float32) + b2) * s
        out_ref[...] = jnp.dot(h, w3, preferred_element_type=jnp.float32) + b3

    return kernel


# ----------------------------- wrapper (glue) -----------------------------

def brainnet_cnn_forward(x, params):
    """Full BrainNetCNN forward (eval mode), one fused Pallas call."""
    B, C, N, _ = x.shape
    e2e = params["e2e"]
    L = len(e2e)
    n_out = params["d3_w"].shape[0]

    # Single tiny transpose of the input; all other layout permutes are folded
    # into the constant (weight-side) flattenings below.
    xr = x.transpose(0, 2, 1, 3).reshape(B * N, C * N)   # rows (b,i), lanes (c,j)
    xc = x.transpose(0, 3, 1, 2).reshape(B * N, C * N)   # rows (b,j), lanes (c,i)

    args = [xr, xc]
    c_in = C
    for l, (wr, br, wc, bc) in enumerate(e2e):
        F = wr.shape[0]
        if l == 0:
            # layer-1 activations have lanes (channel-major, node-minor)
            wrf = wr.reshape(F, c_in * N).T                               # [(c,j), f]
            wcf = wc.reshape(F, c_in * N).T                               # [(c,i), f]
        else:
            # later activations are lane-dense (node-major, filter-minor) slabs
            wrf = wr[:, :, 0, :].transpose(2, 1, 0).reshape(N * c_in, F)  # [(j,f_in), f]
            wcf = wc[:, :, :, 0].transpose(2, 1, 0).reshape(N * c_in, F)  # [(i,f_in), f]
        args += [wrf, br.reshape(1, F), wcf, bc.reshape(1, F)]
        c_in = F

    e2n_w, e2n_b = params["e2n_w"], params["e2n_b"]
    G = e2n_w.shape[0]
    we2nf = e2n_w[:, :, 0, :].transpose(2, 1, 0).reshape(N * c_in, G)      # [(j,f), g]
    n2g_w, n2g_b = params["n2g_w"], params["n2g_b"]
    Q = n2g_w.shape[0]
    wn2gf = n2g_w[:, :, :, 0].transpose(2, 1, 0).reshape(N * G, Q)         # [(i,g), q]

    args += [we2nf, e2n_b.reshape(1, G), wn2gf, n2g_b.reshape(1, Q),
             params["d1_w"].T, params["d1_b"].reshape(1, -1),
             params["d2_w"].T, params["d2_b"].reshape(1, -1),
             params["d3_w"].T, params["d3_b"].reshape(1, -1)]

    out = pl.pallas_call(
        make_fused_kernel(B, N, L),
        out_shape=jax.ShapeDtypeStruct((B, n_out), jnp.float32),
        in_specs=[pl.BlockSpec(memory_space=pltpu.MemorySpace.VMEM)] * len(args),
        out_specs=pl.BlockSpec(memory_space=pltpu.MemorySpace.VMEM),
    )(*args)
    return out   # classification=False -> raw output


# ----------------------------- params & reference -----------------------------

def xavier_uniform(key, shape, fan_in, fan_out):
    bound = math.sqrt(6.0 / (fan_in + fan_out))
    return jax.random.uniform(key, shape, jnp.float32, -bound, bound)


def init_params(key, n_nodes, in_channels, e2e_layers=2, e2e_filters=32,
                e2n_filters=64, n2g_filters=256, n_outputs=1):
    keys = list(jax.random.split(key, 2 * e2e_layers + 5))
    ki = iter(keys)
    e2e = []
    c = in_channels
    for _ in range(e2e_layers):
        wr = xavier_uniform(next(ki), (e2e_filters, c, 1, n_nodes),
                            c * n_nodes, e2e_filters * n_nodes)
        wc = xavier_uniform(next(ki), (e2e_filters, c, n_nodes, 1),
                            c * n_nodes, e2e_filters * n_nodes)
        e2e.append((wr, jnp.zeros((e2e_filters,), jnp.float32),
                    wc, jnp.zeros((e2e_filters,), jnp.float32)))
        c = e2e_filters
    p = {"e2e": e2e}
    p["e2n_w"] = xavier_uniform(next(ki), (e2n_filters, e2e_filters, 1, n_nodes),
                                e2e_filters * n_nodes, e2n_filters * n_nodes)
    p["e2n_b"] = jnp.zeros((e2n_filters,), jnp.float32)
    p["n2g_w"] = xavier_uniform(next(ki), (n2g_filters, e2n_filters, n_nodes, 1),
                                e2n_filters * n_nodes, n2g_filters * n_nodes)
    p["n2g_b"] = jnp.zeros((n2g_filters,), jnp.float32)
    p["d1_w"] = xavier_uniform(next(ki), (128, n2g_filters), n2g_filters, 128)
    p["d1_b"] = jnp.zeros((128,), jnp.float32)
    p["d2_w"] = xavier_uniform(next(ki), (30, 128), 128, 30)
    p["d2_b"] = jnp.zeros((30,), jnp.float32)
    p["d3_w"] = xavier_uniform(next(ki), (n_outputs, 30), 30, n_outputs)
    p["d3_b"] = jnp.zeros((n_outputs,), jnp.float32)
    return p


def ref_forward(x, params):
    """Pure-JAX reference of the same (eval-mode) forward pass."""
    with jax.default_matmul_precision("highest"):
        act = x
        for (wr, br, wc, bc) in params["e2e"]:
            row = jnp.einsum("bcij,fcj->bfi", act, wr[:, :, 0, :]) + br[None, :, None]
            col = jnp.einsum("bcij,fci->bfj", act, wc[:, :, :, 0]) + bc[None, :, None]
            act = _leaky(row[:, :, :, None] + col[:, :, None, :])
        e2n = _leaky(jnp.einsum("bcij,fcj->bfi", act, params["e2n_w"][:, :, 0, :])
                     + params["e2n_b"][None, :, None])
        g = _leaky(jnp.einsum("bfi,gfi->bg", e2n, params["n2g_w"][:, :, :, 0])
                   + params["n2g_b"])
        s = 1.0 / math.sqrt(1.0 + BN_EPS)
        h = _leaky(g @ params["d1_w"].T + params["d1_b"]) * s
        h = _leaky(h @ params["d2_w"].T + params["d2_b"]) * s
        return h @ params["d3_w"].T + params["d3_b"]


# ----------------------------- main -----------------------------

if __name__ == "__main__":
    key = jax.random.PRNGKey(0)
    kx, kp = jax.random.split(key)
    B, C, N = 2, 4, 16           # batch, in_channels (connectivity matrices), n_nodes
    x = jax.random.normal(kx, (B, C, N, N), jnp.float32)
    params = init_params(kp, n_nodes=N, in_channels=C,
                         e2e_layers=2, e2e_filters=32,
                         e2n_filters=64, n2g_filters=256, n_outputs=1)

    out = jax.jit(brainnet_cnn_forward)(x, params)
    out = jax.block_until_ready(out)

    ref = ref_forward(x, params)
    assert out.shape == (B, 1), out.shape
    assert bool(jnp.all(jnp.isfinite(out)))
    assert bool(jnp.allclose(out, ref, rtol=2e-2, atol=2e-2)), (out, ref)
    print("KERNEL_OK")
</pallas_src>

<mosaic_0001>
module attributes {stable_mosaic.version = 11 : i64} {
  func.func @kernel(%arg0: memref<32x64xf32, #tpu.memory_space<vmem>>, %arg1: memref<32x64xf32, #tpu.memory_space<vmem>>, %arg2: memref<64x32xf32, #tpu.memory_space<vmem>>, %arg3: memref<1x32xf32, #tpu.memory_space<vmem>>, %arg4: memref<64x32xf32, #tpu.memory_space<vmem>>, %arg5: memref<1x32xf32, #tpu.memory_space<vmem>>, %arg6: memref<512x32xf32, #tpu.memory_space<vmem>>, %arg7: memref<1x32xf32, #tpu.memory_space<vmem>>, %arg8: memref<512x32xf32, #tpu.memory_space<vmem>>, %arg9: memref<1x32xf32, #tpu.memory_space<vmem>>, %arg10: memref<512x64xf32, #tpu.memory_space<vmem>>, %arg11: memref<1x64xf32, #tpu.memory_space<vmem>>, %arg12: memref<1024x256xf32, #tpu.memory_space<vmem>>, %arg13: memref<1x256xf32, #tpu.memory_space<vmem>>, %arg14: memref<256x128xf32, #tpu.memory_space<vmem>>, %arg15: memref<1x128xf32, #tpu.memory_space<vmem>>, %arg16: memref<128x30xf32, #tpu.memory_space<vmem>>, %arg17: memref<1x30xf32, #tpu.memory_space<vmem>>, %arg18: memref<30x1xf32, #tpu.memory_space<vmem>>, %arg19: memref<1x1xf32, #tpu.memory_space<vmem>>, %arg20: memref<2x1xf32, #tpu.memory_space<vmem>>) attributes {dimension_semantics = [], scalar_prefetch = 0 : i64, scratch_operands = 0 : i64, tpu.core_type = #tpu.core_type<tc>} {
    %c0 = arith.constant 0 : index
    %c0_0 = arith.constant 0 : index
    %0 = vector.load %arg0[%c0, %c0_0] : memref<32x64xf32, #tpu.memory_space<vmem>>, vector<32x64xf32>
    %c0_1 = arith.constant 0 : index
    %c0_2 = arith.constant 0 : index
    %1 = vector.load %arg1[%c0_1, %c0_2] : memref<32x64xf32, #tpu.memory_space<vmem>>, vector<32x64xf32>
    %c0_3 = arith.constant 0 : index
    %c0_4 = arith.constant 0 : index
    %2 = vector.load %arg2[%c0_3, %c0_4] : memref<64x32xf32, #tpu.memory_space<vmem>>, vector<64x32xf32>
    %c0_5 = arith.constant 0 : index
    %c0_6 = arith.constant 0 : index
    %3 = vector.load %arg3[%c0_5, %c0_6] : memref<1x32xf32, #tpu.memory_space<vmem>>, vector<1x32xf32>
    %c0_7 = arith.constant 0 : index
    %c0_8 = arith.constant 0 : index
    %4 = vector.load %arg4[%c0_7, %c0_8] : memref<64x32xf32, #tpu.memory_space<vmem>>, vector<64x32xf32>
    %c0_9 = arith.constant 0 : index
    %c0_10 = arith.constant 0 : index
    %5 = vector.load %arg5[%c0_9, %c0_10] : memref<1x32xf32, #tpu.memory_space<vmem>>, vector<1x32xf32>
    %cst = arith.constant dense<0.000000e+00> : vector<32x32xf32>
    %6 = tpu.matmul %0, %2, %cst {dimension_numbers = #tpu.dot_dimension_numbers<[1], [0], [0], [1], [0, 0, 1, 1], [], []>} : vector<32x64xf32>, vector<64x32xf32>, vector<32x32xf32> -> vector<32x32xf32>
    %7 = vector.broadcast %3 : vector<1x32xf32> to vector<32x32xf32>
    %8 = arith.addf %6, %7 : vector<32x32xf32>
    %cst_11 = arith.constant dense<0.000000e+00> : vector<32x32xf32>
    %9 = tpu.matmul %1, %4, %cst_11 {dimension_numbers = #tpu.dot_dimension_numbers<[1], [0], [0], [1], [0, 0, 1, 1], [], []>} : vector<32x64xf32>, vector<64x32xf32>, vector<32x32xf32> -> vector<32x32xf32>
    %10 = vector.broadcast %5 : vector<1x32xf32> to vector<32x32xf32>
    %11 = arith.addf %9, %10 : vector<32x32xf32>
    %12 = tpu.concatenate %8, %8, %8, %8, %8, %8, %8, %8, %8, %8, %8, %8, %8, %8, %8, %8 in 1 : vector<32x32xf32>, vector<32x32xf32>, vector<32x32xf32>, vector<32x32xf32>, vector<32x32xf32>, vector<32x32xf32>, vector<32x32xf32>, vector<32x32xf32>, vector<32x32xf32>, vector<32x32xf32>, vector<32x32xf32>, vector<32x32xf32>, vector<32x32xf32>, vector<32x32xf32>, vector<32x32xf32>, vector<32x32xf32> -> vector<32x512xf32>
    %13 = vector.extract_strided_slice %11 {offsets = [0, 0], sizes = [16, 32], strides = [1, 1]} : vector<32x32xf32> to vector<16x32xf32>
    %14 = vector.extract_strided_slice %13 {offsets = [0, 0], sizes = [1, 32], strides = [1, 1]} : vector<16x32xf32> to vector<1x32xf32>
    %15 = vector.extract_strided_slice %13 {offsets = [1, 0], sizes = [1, 32], strides = [1, 1]} : vector<16x32xf32> to vector<1x32xf32>
    %16 = vector.extract_strided_slice %13 {offsets = [2, 0], sizes = [1, 32], strides = [1, 1]} : vector<16x32xf32> to vector<1x32xf32>
    %17 = vector.extract_strided_slice %13 {offsets = [3, 0], sizes = [1, 32], strides = [1, 1]} : vector<16x32xf32> to vector<1x32xf32>
    %18 = vector.extract_strided_slice %13 {offsets = [4, 0], sizes = [1, 32], strides = [1, 1]} : vector<16x32xf32> to vector<1x32xf32>
    %19 = vector.extract_strided_slice %13 {offsets = [5, 0], sizes = [1, 32], strides = [1, 1]} : vector<16x32xf32> to vector<1x32xf32>
    %20 = vector.extract_strided_slice %13 {offsets = [6, 0], sizes = [1, 32], strides = [1, 1]} : vector<16x32xf32> to vector<1x32xf32>
    %21 = vector.extract_strided_slice %13 {offsets = [7, 0], sizes = [1, 32], strides = [1, 1]} : vector<16x32xf32> to vector<1x32xf32>
    %22 = vector.extract_strided_slice %13 {offsets = [8, 0], sizes = [1, 32], strides = [1, 1]} : vector<16x32xf32> to vector<1x32xf32>
    %23 = vector.extract_strided_slice %13 {offsets = [9, 0], sizes = [1, 32], strides = [1, 1]} : vector<16x32xf32> to vector<1x32xf32>
    %24 = vector.extract_strided_slice %13 {offsets = [10, 0], sizes = [1, 32], strides = [1, 1]} : vector<16x32xf32> to vector<1x32xf32>
    %25 = vector.extract_strided_slice %13 {offsets = [11, 0], sizes = [1, 32], strides = [1, 1]} : vector<16x32xf32> to vector<1x32xf32>
    %26 = vector.extract_strided_slice %13 {offsets = [12, 0], sizes = [1, 32], strides = [1, 1]} : vector<16x32xf32> to vector<1x32xf32>
    %27 = vector.extract_strided_slice %13 {offsets = [13, 0], sizes = [1, 32], strides = [1, 1]} : vector<16x32xf32> to vector<1x32xf32>
    %28 = vector.extract_strided_slice %13 {offsets = [14, 0], sizes = [1, 32], strides = [1, 1]} : vector<16x32xf32> to vector<1x32xf32>
    %29 = vector.extract_strided_slice %13 {offsets = [15, 0], sizes = [1, 32], strides = [1, 1]} : vector<16x32xf32> to vector<1x32xf32>
    %30 = tpu.concatenate %14, %15, %16, %17, %18, %19, %20, %21, %22, %23, %24, %25, %26, %27, %28, %29 in 1 : vector<1x32xf32>, vector<1x32xf32>, vector<1x32xf32>, vector<1x32xf32>, vector<1x32xf32>, vector<1x32xf32>, vector<1x32xf32>, vector<1x32xf32>, vector<1x32xf32>, vector<1x32xf32>, vector<1x32xf32>, vector<1x32xf32>, vector<1x32xf32>, vector<1x32xf32>, vector<1x32xf32>, vector<1x32xf32> -> vector<1x512xf32>
    %31 = vector.extract_strided_slice %11 {offsets = [16, 0], sizes = [16, 32], strides = [1, 1]} : vector<32x32xf32> to vector<16x32xf32>
    %32 = vector.extract_strided_slice %31 {offsets = [0, 0], sizes = [1, 32], strides = [1, 1]} : vector<16x32xf32> to vector<1x32xf32>
    %33 = vector.extract_strided_slice %31 {offsets = [1, 0], sizes = [1, 32], strides = [1, 1]} : vector<16x32xf32> to vector<1x32xf32>
    %34 = vector.extract_strided_slice %31 {offsets = [2, 0], sizes = [1, 32], strides = [1, 1]} : vector<16x32xf32> to vector<1x32xf32>
    %35 = vector.extract_strided_slice %31 {offsets = [3, 0], sizes = [1, 32], strides = [1, 1]} : vector<16x32xf32> to vector<1x32xf32>
    %36 = vector.extract_strided_slice %31 {offsets = [4, 0], sizes = [1, 32], strides = [1, 1]} : vector<16x32xf32> to vector<1x32xf32>
    %37 = vector.extract_strided_slice %31 {offsets = [5, 0], sizes = [1, 32], strides = [1, 1]} : vector<16x32xf32> to vector<1x32xf32>
    %38 = vector.extract_strided_slice %31 {offsets = [6, 0], sizes = [1, 32], strides = [1, 1]} : vector<16x32xf32> to vector<1x32xf32>
    %39 = vector.extract_strided_slice %31 {offsets = [7, 0], sizes = [1, 32], strides = [1, 1]} : vector<16x32xf32> to vector<1x32xf32>
    %40 = vector.extract_strided_slice %31 {offsets = [8, 0], sizes = [1, 32], strides = [1, 1]} : vector<16x32xf32> to vector<1x32xf32>
    %41 = vector.extract_strided_slice %31 {offsets = [9, 0], sizes = [1, 32], strides = [1, 1]} : vector<16x32xf32> to vector<1x32xf32>
    %42 = vector.extract_strided_slice %31 {offsets = [10, 0], sizes = [1, 32], strides = [1, 1]} : vector<16x32xf32> to vector<1x32xf32>
    %43 = vector.extract_strided_slice %31 {offsets = [11, 0], sizes = [1, 32], strides = [1, 1]} : vector<16x32xf32> to vector<1x32xf32>
    %44 = vector.extract_strided_slice %31 {offsets = [12, 0], sizes = [1, 32], strides = [1, 1]} : vector<16x32xf32> to vector<1x32xf32>
    %45 = vector.extract_strided_slice %31 {offsets = [13, 0], sizes = [1, 32], strides = [1, 1]} : vector<16x32xf32> to vector<1x32xf32>
    %46 = vector.extract_strided_slice %31 {offsets = [14, 0], sizes = [1, 32], strides = [1, 1]} : vector<16x32xf32> to vector<1x32xf32>
    %47 = vector.extract_strided_slice %31 {offsets = [15, 0], sizes = [1, 32], strides = [1, 1]} : vector<16x32xf32> to vector<1x32xf32>
    %48 = tpu.concatenate %32, %33, %34, %35, %36, %37, %38, %39, %40, %41, %42, %43, %44, %45, %46, %47 in 1 : vector<1x32xf32>, vector<1x32xf32>, vector<1x32xf32>, vector<1x32xf32>, vector<1x32xf32>, vector<1x32xf32>, vector<1x32xf32>, vector<1x32xf32>, vector<1x32xf32>, vector<1x32xf32>, vector<1x32xf32>, vector<1x32xf32>, vector<1x32xf32>, vector<1x32xf32>, vector<1x32xf32>, vector<1x32xf32> -> vector<1x512xf32>
    %49 = tpu.concatenate %30, %48 in 0 : vector<1x512xf32>, vector<1x512xf32> -> vector<2x512xf32>
    %50 = vector.extract_strided_slice %49 {offsets = [0, 0], sizes = [1, 512], strides = [1, 1]} : vector<2x512xf32> to vector<1x512xf32>
    %51 = vector.shape_cast %50 : vector<1x512xf32> to vector<1x512xf32>
    %52 = vector.broadcast %51 : vector<1x512xf32> to vector<16x512xf32>
    %53 = vector.extract_strided_slice %49 {offsets = [1, 0], sizes = [1, 512], strides = [1, 1]} : vector<2x512xf32> to vector<1x512xf32>
    %54 = vector.shape_cast %53 : vector<1x512xf32> to vector<1x512xf32>
    %55 = vector.broadcast %54 : vector<1x512xf32> to vector<16x512xf32>
    %56 = tpu.concatenate %52, %55 in 0 : vector<16x512xf32>, vector<16x512xf32> -> vector<32x512xf32>
    %57 = arith.addf %12, %56 : vector<32x512xf32>
    %cst_12 = arith.constant 0.000000e+00 : f32
    %58 = vector.broadcast %cst_12 : f32 to vector<32x512xf32>
    %59 = arith.cmpf ogt, %57, %58 : vector<32x512xf32>
    %cst_13 = arith.constant 3.300000e-01 : f32
    %60 = vector.broadcast %cst_13 : f32 to vector<32x512xf32>
    %61 = arith.mulf %60, %57 : vector<32x512xf32>
    %62 = arith.select %59, %57, %61 : vector<32x512xi1>, vector<32x512xf32>
    %63 = tpu.concatenate %11, %11, %11, %11, %11, %11, %11, %11, %11, %11, %11, %11, %11, %11, %11, %11 in 1 : vector<32x32xf32>, vector<32x32xf32>, vector<32x32xf32>, vector<32x32xf32>, vector<32x32xf32>, vector<32x32xf32>, vector<32x32xf32>, vector<32x32xf32>, vector<32x32xf32>, vector<32x32xf32>, vector<32x32xf32>, vector<32x32xf32>, vector<32x32xf32>, vector<32x32xf32>, vector<32x32xf32>, vector<32x32xf32> -> vector<32x512xf32>
    %64 = vector.extract_strided_slice %8 {offsets = [0, 0], sizes = [16, 32], strides = [1, 1]} : vector<32x32xf32> to vector<16x32xf32>
    %65 = vector.extract_strided_slice %64 {offsets = [0, 0], sizes = [1, 32], strides = [1, 1]} : vector<16x32xf32> to vector<1x32xf32>
    %66 = vector.extract_strided_slice %64 {offsets = [1, 0], sizes = [1, 32], strides = [1, 1]} : vector<16x32xf32> to vector<1x32xf32>
    %67 = vector.extract_strided_slice %64 {offsets = [2, 0], sizes = [1, 32], strides = [1, 1]} : vector<16x32xf32> to vector<1x32xf32>
    %68 = vector.extract_strided_slice %64 {offsets = [3, 0], sizes = [1, 32], strides = [1, 1]} : vector<16x32xf32> to vector<1x32xf32>
    %69 = vector.extract_strided_slice %64 {offsets = [4, 0], sizes = [1, 32], strides = [1, 1]} : vector<16x32xf32> to vector<1x32xf32>
    %70 = vector.extract_strided_slice %64 {offsets = [5, 0], sizes = [1, 32], strides = [1, 1]} : vector<16x32xf32> to vector<1x32xf32>
    %71 = vector.extract_strided_slice %64 {offsets = [6, 0], sizes = [1, 32], strides = [1, 1]} : vector<16x32xf32> to vector<1x32xf32>
    %72 = vector.extract_strided_slice %64 {offsets = [7, 0], sizes = [1, 32], strides = [1, 1]} : vector<16x32xf32> to vector<1x32xf32>
    %73 = vector.extract_strided_slice %64 {offsets = [8, 0], sizes = [1, 32], strides = [1, 1]} : vector<16x32xf32> to vector<1x32xf32>
    %74 = vector.extract_strided_slice %64 {offsets = [9, 0], sizes = [1, 32], strides = [1, 1]} : vector<16x32xf32> to vector<1x32xf32>
    %75 = vector.extract_strided_slice %64 {offsets = [10, 0], sizes = [1, 32], strides = [1, 1]} : vector<16x32xf32> to vector<1x32xf32>
    %76 = vector.extract_strided_slice %64 {offsets = [11, 0], sizes = [1, 32], strides = [1, 1]} : vector<16x32xf32> to vector<1x32xf32>
    %77 = vector.extract_strided_slice %64 {offsets = [12, 0], sizes = [1, 32], strides = [1, 1]} : vector<16x32xf32> to vector<1x32xf32>
    %78 = vector.extract_strided_slice %64 {offsets = [13, 0], sizes = [1, 32], strides = [1, 1]} : vector<16x32xf32> to vector<1x32xf32>
    %79 = vector.extract_strided_slice %64 {offsets = [14, 0], sizes = [1, 32], strides = [1, 1]} : vector<16x32xf32> to vector<1x32xf32>
    %80 = vector.extract_strided_slice %64 {offsets = [15, 0], sizes = [1, 32], strides = [1, 1]} : vector<16x32xf32> to vector<1x32xf32>
    %81 = tpu.concatenate %65, %66, %67, %68, %69, %70, %71, %72, %73, %74, %75, %76, %77, %78, %79, %80 in 1 : vector<1x32xf32>, vector<1x32xf32>, vector<1x32xf32>, vector<1x32xf32>, vector<1x32xf32>, vector<1x32xf32>, vector<1x32xf32>, vector<1x32xf32>, vector<1x32xf32>, vector<1x32xf32>, vector<1x32xf32>, vector<1x32xf32>, vector<1x32xf32>, vector<1x32xf32>, vector<1x32xf32>, vector<1x32xf32> -> vector<1x512xf32>
    %82 = vector.extract_strided_slice %8 {offsets = [16, 0], sizes = [16, 32], strides = [1, 1]} : vector<32x32xf32> to vector<16x32xf32>
    %83 = vector.extract_strided_slice %82 {offsets = [0, 0], sizes = [1, 32], strides = [1, 1]} : vector<16x32xf32> to vector<1x32xf32>
    %84 = vector.extract_strided_slice %82 {offsets = [1, 0], sizes = [1, 32], strides = [1, 1]} : vector<16x32xf32> to vector<1x32xf32>
    %85 = vector.extract_strided_slice %82 {offsets = [2, 0], sizes = [1, 32], strides = [1, 1]} : vector<16x32xf32> to vector<1x32xf32>
    %86 = vector.extract_strided_slice %82 {offsets = [3, 0], sizes = [1, 32], strides = [1, 1]} : vector<16x32xf32> to vector<1x32xf32>
    %87 = vector.extract_strided_slice %82 {offsets = [4, 0], sizes = [1, 32], strides = [1, 1]} : vector<16x32xf32> to vector<1x32xf32>
    %88 = vector.extract_strided_slice %82 {offsets = [5, 0], sizes = [1, 32], strides = [1, 1]} : vector<16x32xf32> to vector<1x32xf32>
    %89 = vector.extract_strided_slice %82 {offsets = [6, 0], sizes = [1, 32], strides = [1, 1]} : vector<16x32xf32> to vector<1x32xf32>
    %90 = vector.extract_strided_slice %82 {offsets = [7, 0], sizes = [1, 32], strides = [1, 1]} : vector<16x32xf32> to vector<1x32xf32>
    %91 = vector.extract_strided_slice %82 {offsets = [8, 0], sizes = [1, 32], strides = [1, 1]} : vector<16x32xf32> to vector<1x32xf32>
    %92 = vector.extract_strided_slice %82 {offsets = [9, 0], sizes = [1, 32], strides = [1, 1]} : vector<16x32xf32> to vector<1x32xf32>
    %93 = vector.extract_strided_slice %82 {offsets = [10, 0], sizes = [1, 32], strides = [1, 1]} : vector<16x32xf32> to vector<1x32xf32>
    %94 = vector.extract_strided_slice %82 {offsets = [11, 0], sizes = [1, 32], strides = [1, 1]} : vector<16x32xf32> to vector<1x32xf32>
    %95 = vector.extract_strided_slice %82 {offsets = [12, 0], sizes = [1, 32], strides = [1, 1]} : vector<16x32xf32> to vector<1x32xf32>
    %96 = vector.extract_strided_slice %82 {offsets = [13, 0], sizes = [1, 32], strides = [1, 1]} : vector<16x32xf32> to vector<1x32xf32>
    %97 = vector.extract_strided_slice %82 {offsets = [14, 0], sizes = [1, 32], strides = [1, 1]} : vector<16x32xf32> to vector<1x32xf32>
    %98 = vector.extract_strided_slice %82 {offsets = [15, 0], sizes = [1, 32], strides = [1, 1]} : vector<16x32xf32> to vector<1x32xf32>
    %99 = tpu.concatenate %83, %84, %85, %86, %87, %88, %89, %90, %91, %92, %93, %94, %95, %96, %97, %98 in 1 : vector<1x32xf32>, vector<1x32xf32>, vector<1x32xf32>, vector<1x32xf32>, vector<1x32xf32>, vector<1x32xf32>, vector<1x32xf32>, vector<1x32xf32>, vector<1x32xf32>, vector<1x32xf32>, vector<1x32xf32>, vector<1x32xf32>, vector<1x32xf32>, vector<1x32xf32>, vector<1x32xf32>, vector<1x32xf32> -> vector<1x512xf32>
    %100 = tpu.concatenate %81, %99 in 0 : vector<1x512xf32>, vector<1x512xf32> -> vector<2x512xf32>
    %101 = vector.extract_strided_slice %100 {offsets = [0, 0], sizes = [1, 512], strides = [1, 1]} : vector<2x512xf32> to vector<1x512xf32>
    %102 = vector.shape_cast %101 : vector<1x512xf32> to vector<1x512xf32>
    %103 = vector.broadcast %102 : vector<1x512xf32> to vector<16x512xf32>
    %104 = vector.extract_strided_slice %100 {offsets = [1, 0], sizes = [1, 512], strides = [1, 1]} : vector<2x512xf32> to vector<1x512xf32>
    %105 = vector.shape_cast %104 : vector<1x512xf32> to vector<1x512xf32>
    %106 = vector.broadcast %105 : vector<1x512xf32> to vector<16x512xf32>
    %107 = tpu.concatenate %103, %106 in 0 : vector<16x512xf32>, vector<16x512xf32> -> vector<32x512xf32>
    %108 = arith.addf %63, %107 : vector<32x512xf32>
    %cst_14 = arith.constant 0.000000e+00 : f32
    %109 = vector.broadcast %cst_14 : f32 to vector<32x512xf32>
    %110 = arith.cmpf ogt, %108, %109 : vector<32x512xf32>
    %cst_15 = arith.constant 3.300000e-01 : f32
    %111 = vector.broadcast %cst_15 : f32 to vector<32x512xf32>
    %112 = arith.mulf %111, %108 : vector<32x512xf32>
    %113 = arith.select %110, %108, %112 : vector<32x512xi1>, vector<32x512xf32>
    %c0_16 = arith.constant 0 : index
    %c0_17 = arith.constant 0 : index
    %114 = vector.load %arg6[%c0_16, %c0_17] : memref<512x32xf32, #tpu.memory_space<vmem>>, vector<512x32xf32>
    %c0_18 = arith.constant 0 : index
    %c0_19 = arith.constant 0 : index
    %115 = vector.load %arg7[%c0_18, %c0_19] : memref<1x32xf32, #tpu.memory_space<vmem>>, vector<1x32xf32>
    %c0_20 = arith.constant 0 : index
    %c0_21 = arith.constant 0 : index
    %116 = vector.load %arg8[%c0_20, %c0_21] : memref<512x32xf32, #tpu.memory_space<vmem>>, vector<512x32xf32>
    %c0_22 = arith.constant 0 : index
    %c0_23 = arith.constant 0 : index
    %117 = vector.load %arg9[%c0_22, %c0_23] : memref<1x32xf32, #tpu.memory_space<vmem>>, vector<1x32xf32>
    %cst_24 = arith.constant dense<0.000000e+00> : vector<32x32xf32>
    %118 = tpu.matmul %62, %114, %cst_24 {dimension_numbers = #tpu.dot_dimension_numbers<[1], [0], [0], [1], [0, 0, 1, 1], [], []>} : vector<32x512xf32>, vector<512x32xf32>, vector<32x32xf32> -> vector<32x32xf32>
    %119 = vector.broadcast %115 : vector<1x32xf32> to vector<32x32xf32>
    %120 = arith.addf %118, %119 : vector<32x32xf32>
    %cst_25 = arith.constant dense<0.000000e+00> : vector<32x32xf32>
    %121 = tpu.matmul %113, %116, %cst_25 {dimension_numbers = #tpu.dot_dimension_numbers<[1], [0], [0], [1], [0, 0, 1, 1], [], []>} : vector<32x512xf32>, vector<512x32xf32>, vector<32x32xf32> -> vector<32x32xf32>
    %122 = vector.broadcast %117 : vector<1x32xf32> to vector<32x32xf32>
    %123 = arith.addf %121, %122 : vector<32x32xf32>
    %124 = tpu.concatenate %120, %120, %120, %120, %120, %120, %120, %120, %120, %120, %120, %120, %120, %120, %120, %120 in 1 : vector<32x32xf32>, vector<32x32xf32>, vector<32x32xf32>, vector<32x32xf32>, vector<32x32xf32>, vector<32x32xf32>, vector<32x32xf32>, vector<32x32xf32>, vector<32x32xf32>, vector<32x32xf32>, vector<32x32xf32>, vector<32x32xf32>, vector<32x32xf32>, vector<32x32xf32>, vector<32x32xf32>, vector<32x32xf32> -> vector<32x512xf32>
    %125 = vector.extract_strided_slice %123 {offsets = [0, 0], sizes = [16, 32], strides = [1, 1]} : vector<32x32xf32> to vector<16x32xf32>
    %126 = vector.extract_strided_slice %125 {offsets = [0, 0], sizes = [1, 32], strides = [1, 1]} : vector<16x32xf32> to vector<1x32xf32>
    %127 = vector.extract_strided_slice %125 {offsets = [1, 0], sizes = [1, 32], strides = [1, 1]} : vector<16x32xf32> to vector<1x32xf32>
    %128 = vector.extract_strided_slice %125 {offsets = [2, 0], sizes = [1, 32], strides = [1, 1]} : vector<16x32xf32> to vector<1x32xf32>
    %129 = vector.extract_strided_slice %125 {offsets = [3, 0], sizes = [1, 32], strides = [1, 1]} : vector<16x32xf32> to vector<1x32xf32>
    %130 = vector.extract_strided_slice %125 {offsets = [4, 0], sizes = [1, 32], strides = [1, 1]} : vector<16x32xf32> to vector<1x32xf32>
    %131 = vector.extract_strided_slice %125 {offsets = [5, 0], sizes = [1, 32], strides = [1, 1]} : vector<16x32xf32> to vector<1x32xf32>
    %132 = vector.extract_strided_slice %125 {offsets = [6, 0], sizes = [1, 32], strides = [1, 1]} : vector<16x32xf32> to vector<1x32xf32>
    %133 = vector.extract_strided_slice %125 {offsets = [7, 0], sizes = [1, 32], strides = [1, 1]} : vector<16x32xf32> to vector<1x32xf32>
    %134 = vector.extract_strided_slice %125 {offsets = [8, 0], sizes = [1, 32], strides = [1, 1]} : vector<16x32xf32> to vector<1x32xf32>
    %135 = vector.extract_strided_slice %125 {offsets = [9, 0], sizes = [1, 32], strides = [1, 1]} : vector<16x32xf32> to vector<1x32xf32>
    %136 = vector.extract_strided_slice %125 {offsets = [10, 0], sizes = [1, 32], strides = [1, 1]} : vector<16x32xf32> to vector<1x32xf32>
    %137 = vector.extract_strided_slice %125 {offsets = [11, 0], sizes = [1, 32], strides = [1, 1]} : vector<16x32xf32> to vector<1x32xf32>
    %138 = vector.extract_strided_slice %125 {offsets = [12, 0], sizes = [1, 32], strides = [1, 1]} : vector<16x32xf32> to vector<1x32xf32>
    %139 = vector.extract_strided_slice %125 {offsets = [13, 0], sizes = [1, 32], strides = [1, 1]} : vector<16x32xf32> to vector<1x32xf32>
    %140 = vector.extract_strided_slice %125 {offsets = [14, 0], sizes = [1, 32], strides = [1, 1]} : vector<16x32xf32> to vector<1x32xf32>
    %141 = vector.extract_strided_slice %125 {offsets = [15, 0], sizes = [1, 32], strides = [1, 1]} : vector<16x32xf32> to vector<1x32xf32>
    %142 = tpu.concatenate %126, %127, %128, %129, %130, %131, %132, %133, %134, %135, %136, %137, %138, %139, %140, %141 in 1 : vector<1x32xf32>, vector<1x32xf32>, vector<1x32xf32>, vector<1x32xf32>, vector<1x32xf32>, vector<1x32xf32>, vector<1x32xf32>, vector<1x32xf32>, vector<1x32xf32>, vector<1x32xf32>, vector<1x32xf32>, vector<1x32xf32>, vector<1x32xf32>, vector<1x32xf32>, vector<1x32xf32>, vector<1x32xf32> -> vector<1x512xf32>
    %143 = vector.extract_strided_slice %123 {offsets = [16, 0], sizes = [16, 32], strides = [1, 1]} : vector<32x32xf32> to vector<16x32xf32>
    %144 = vector.extract_strided_slice %143 {offsets = [0, 0], sizes = [1, 32], strides = [1, 1]} : vector<16x32xf32> to vector<1x32xf32>
    %145 = vector.extract_strided_slice %143 {offsets = [1, 0], sizes = [1, 32], strides = [1, 1]} : vector<16x32xf32> to vector<1x32xf32>
    %146 = vector.extract_strided_slice %143 {offsets = [2, 0], sizes = [1, 32], strides = [1, 1]} : vector<16x32xf32> to vector<1x32xf32>
    %147 = vector.extract_strided_slice %143 {offsets = [3, 0], sizes = [1, 32], strides = [1, 1]} : vector<16x32xf32> to vector<1x32xf32>
    %148 = vector.extract_strided_slice %143 {offsets = [4, 0], sizes = [1, 32], strides = [1, 1]} : vector<16x32xf32> to vector<1x32xf32>
    %149 = vector.extract_strided_slice %143 {offsets = [5, 0], sizes = [1, 32], strides = [1, 1]} : vector<16x32xf32> to vector<1x32xf32>
    %150 = vector.extract_strided_slice %143 {offsets = [6, 0], sizes = [1, 32], strides = [1, 1]} : vector<16x32xf32> to vector<1x32xf32>
    %151 = vector.extract_strided_slice %143 {offsets = [7, 0], sizes = [1, 32], strides = [1, 1]} : vector<16x32xf32> to vector<1x32xf32>
    %152 = vector.extract_strided_slice %143 {offsets = [8, 0], sizes = [1, 32], strides = [1, 1]} : vector<16x32xf32> to vector<1x32xf32>
    %153 = vector.extract_strided_slice %143 {offsets = [9, 0], sizes = [1, 32], strides = [1, 1]} : vector<16x32xf32> to vector<1x32xf32>
    %154 = vector.extract_strided_slice %143 {offsets = [10, 0], sizes = [1, 32], strides = [1, 1]} : vector<16x32xf32> to vector<1x32xf32>
    %155 = vector.extract_strided_slice %143 {offsets = [11, 0], sizes = [1, 32], strides = [1, 1]} : vector<16x32xf32> to vector<1x32xf32>
    %156 = vector.extract_strided_slice %143 {offsets = [12, 0], sizes = [1, 32], strides = [1, 1]} : vector<16x32xf32> to vector<1x32xf32>
    %157 = vector.extract_strided_slice %143 {offsets = [13, 0], sizes = [1, 32], strides = [1, 1]} : vector<16x32xf32> to vector<1x32xf32>
    %158 = vector.extract_strided_slice %143 {offsets = [14, 0], sizes = [1, 32], strides = [1, 1]} : vector<16x32xf32> to vector<1x32xf32>
    %159 = vector.extract_strided_slice %143 {offsets = [15, 0], sizes = [1, 32], strides = [1, 1]} : vector<16x32xf32> to vector<1x32xf32>
    %160 = tpu.concatenate %144, %145, %146, %147, %148, %149, %150, %151, %152, %153, %154, %155, %156, %157, %158, %159 in 1 : vector<1x32xf32>, vector<1x32xf32>, vector<1x32xf32>, vector<1x32xf32>, vector<1x32xf32>, vector<1x32xf32>, vector<1x32xf32>, vector<1x32xf32>, vector<1x32xf32>, vector<1x32xf32>, vector<1x32xf32>, vector<1x32xf32>, vector<1x32xf32>, vector<1x32xf32>, vector<1x32xf32>, vector<1x32xf32> -> vector<1x512xf32>
    %161 = tpu.concatenate %142, %160 in 0 : vector<1x512xf32>, vector<1x512xf32> -> vector<2x512xf32>
    %162 = vector.extract_strided_slice %161 {offsets = [0, 0], sizes = [1, 512], strides = [1, 1]} : vector<2x512xf32> to vector<1x512xf32>
    %163 = vector.shape_cast %162 : vector<1x512xf32> to vector<1x512xf32>
    %164 = vector.broadcast %163 : vector<1x512xf32> to vector<16x512xf32>
    %165 = vector.extract_strided_slice %161 {offsets = [1, 0], sizes = [1, 512], strides = [1, 1]} : vector<2x512xf32> to vector<1x512xf32>
    %166 = vector.shape_cast %165 : vector<1x512xf32> to vector<1x512xf32>
    %167 = vector.broadcast %166 : vector<1x512xf32> to vector<16x512xf32>
    %168 = tpu.concatenate %164, %167 in 0 : vector<16x512xf32>, vector<16x512xf32> -> vector<32x512xf32>
    %169 = arith.addf %124, %168 : vector<32x512xf32>
    %cst_26 = arith.constant 0.000000e+00 : f32
    %170 = vector.broadcast %cst_26 : f32 to vector<32x512xf32>
    %171 = arith.cmpf ogt, %169, %170 : vector<32x512xf32>
    %cst_27 = arith.constant 3.300000e-01 : f32
    %172 = vector.broadcast %cst_27 : f32 to vector<32x512xf32>
    %173 = arith.mulf %172, %169 : vector<32x512xf32>
    %174 = arith.select %171, %169, %173 : vector<32x512xi1>, vector<32x512xf32>
    %c0_28 = arith.constant 0 : index
    %c0_29 = arith.constant 0 : index
    %175 = vector.load %arg10[%c0_28, %c0_29] : memref<512x64xf32, #tpu.memory_space<vmem>>, vector<512x64xf32>
    %c0_30 = arith.constant 0 : index
    %c0_31 = arith.constant 0 : index
    %176 = vector.load %arg11[%c0_30, %c0_31] : memref<1x64xf32, #tpu.memory_space<vmem>>, vector<1x64xf32>
    %c0_32 = arith.constant 0 : index
    %c0_33 = arith.constant 0 : index
    %177 = vector.load %arg12[%c0_32, %c0_33] : memref<1024x256xf32, #tpu.memory_space<vmem>>, vector<1024x256xf32>
    %c0_34 = arith.constant 0 : index
    %c0_35 = arith.constant 0 : index
    %178 = vector.load %arg13[%c0_34, %c0_35] : memref<1x256xf32, #tpu.memory_space<vmem>>, vector<1x256xf32>
    %c0_36 = arith.constant 0 : index
    %c0_37 = arith.constant 0 : index
    %179 = vector.load %arg14[%c0_36, %c0_37] : memref<256x128xf32, #tpu.memory_space<vmem>>, vector<256x128xf32>
    %c0_38 = arith.constant 0 : index
    %c0_39 = arith.constant 0 : index
    %180 = vector.load %arg15[%c0_38, %c0_39] : memref<1x128xf32, #tpu.memory_space<vmem>>, vector<1x128xf32>
    %c0_40 = arith.constant 0 : index
    %c0_41 = arith.constant 0 : index
    %181 = vector.load %arg16[%c0_40, %c0_41] : memref<128x30xf32, #tpu.memory_space<vmem>>, vector<128x30xf32>
    %c0_42 = arith.constant 0 : index
    %c0_43 = arith.constant 0 : index
    %182 = vector.load %arg17[%c0_42, %c0_43] : memref<1x30xf32, #tpu.memory_space<vmem>>, vector<1x30xf32>
    %c0_44 = arith.constant 0 : index
    %c0_45 = arith.constant 0 : index
    %183 = vector.load %arg18[%c0_44, %c0_45] : memref<30x1xf32, #tpu.memory_space<vmem>>, vector<30x1xf32>
    %c0_46 = arith.constant 0 : index
    %c0_47 = arith.constant 0 : index
    %184 = vector.load %arg19[%c0_46, %c0_47] : memref<1x1xf32, #tpu.memory_space<vmem>>, vector<1x1xf32>
    %cst_48 = arith.constant dense<0.000000e+00> : vector<32x64xf32>
    %185 = tpu.matmul %174, %175, %cst_48 {dimension_numbers = #tpu.dot_dimension_numbers<[1], [0], [0], [1], [0, 0, 1, 1], [], []>} : vector<32x512xf32>, vector<512x64xf32>, vector<32x64xf32> -> vector<32x64xf32>
    %186 = vector.broadcast %176 : vector<1x64xf32> to vector<32x64xf32>
    %187 = arith.addf %185, %186 : vector<32x64xf32>
    %cst_49 = arith.constant 0.000000e+00 : f32
    %188 = vector.broadcast %cst_49 : f32 to vector<32x64xf32>
    %189 = arith.cmpf ogt, %187, %188 : vector<32x64xf32>
    %cst_50 = arith.constant 3.300000e-01 : f32
    %190 = vector.broadcast %cst_50 : f32 to vector<32x64xf32>
    %191 = arith.mulf %190, %187 : vector<32x64xf32>
    %192 = arith.select %189, %187, %191 : vector<32x64xi1>, vector<32x64xf32>
    %193 = vector.extract_strided_slice %192 {offsets = [0, 0], sizes = [16, 64], strides = [1, 1]} : vector<32x64xf32> to vector<16x64xf32>
    %194 = vector.extract_strided_slice %193 {offsets = [0, 0], sizes = [1, 64], strides = [1, 1]} : vector<16x64xf32> to vector<1x64xf32>
    %195 = vector.extract_strided_slice %193 {offsets = [1, 0], sizes = [1, 64], strides = [1, 1]} : vector<16x64xf32> to vector<1x64xf32>
    %196 = vector.extract_strided_slice %193 {offsets = [2, 0], sizes = [1, 64], strides = [1, 1]} : vector<16x64xf32> to vector<1x64xf32>
    %197 = vector.extract_strided_slice %193 {offsets = [3, 0], sizes = [1, 64], strides = [1, 1]} : vector<16x64xf32> to vector<1x64xf32>
    %198 = vector.extract_strided_slice %193 {offsets = [4, 0], sizes = [1, 64], strides = [1, 1]} : vector<16x64xf32> to vector<1x64xf32>
    %199 = vector.extract_strided_slice %193 {offsets = [5, 0], sizes = [1, 64], strides = [1, 1]} : vector<16x64xf32> to vector<1x64xf32>
    %200 = vector.extract_strided_slice %193 {offsets = [6, 0], sizes = [1, 64], strides = [1, 1]} : vector<16x64xf32> to vector<1x64xf32>
    %201 = vector.extract_strided_slice %193 {offsets = [7, 0], sizes = [1, 64], strides = [1, 1]} : vector<16x64xf32> to vector<1x64xf32>
    %202 = vector.extract_strided_slice %193 {offsets = [8, 0], sizes = [1, 64], strides = [1, 1]} : vector<16x64xf32> to vector<1x64xf32>
    %203 = vector.extract_strided_slice %193 {offsets = [9, 0], sizes = [1, 64], strides = [1, 1]} : vector<16x64xf32> to vector<1x64xf32>
    %204 = vector.extract_strided_slice %193 {offsets = [10, 0], sizes = [1, 64], strides = [1, 1]} : vector<16x64xf32> to vector<1x64xf32>
    %205 = vector.extract_strided_slice %193 {offsets = [11, 0], sizes = [1, 64], strides = [1, 1]} : vector<16x64xf32> to vector<1x64xf32>
    %206 = vector.extract_strided_slice %193 {offsets = [12, 0], sizes = [1, 64], strides = [1, 1]} : vector<16x64xf32> to vector<1x64xf32>
    %207 = vector.extract_strided_slice %193 {offsets = [13, 0], sizes = [1, 64], strides = [1, 1]} : vector<16x64xf32> to vector<1x64xf32>
    %208 = vector.extract_strided_slice %193 {offsets = [14, 0], sizes = [1, 64], strides = [1, 1]} : vector<16x64xf32> to vector<1x64xf32>
    %209 = vector.extract_strided_slice %193 {offsets = [15, 0], sizes = [1, 64], strides = [1, 1]} : vector<16x64xf32> to vector<1x64xf32>
    %210 = tpu.concatenate %194, %195, %196, %197, %198, %199, %200, %201, %202, %203, %204, %205, %206, %207, %208, %209 in 1 : vector<1x64xf32>, vector<1x64xf32>, vector<1x64xf32>, vector<1x64xf32>, vector<1x64xf32>, vector<1x64xf32>, vector<1x64xf32>, vector<1x64xf32>, vector<1x64xf32>, vector<1x64xf32>, vector<1x64xf32>, vector<1x64xf32>, vector<1x64xf32>, vector<1x64xf32>, vector<1x64xf32>, vector<1x64xf32> -> vector<1x1024xf32>
    %211 = vector.extract_strided_slice %192 {offsets = [16, 0], sizes = [16, 64], strides = [1, 1]} : vector<32x64xf32> to vector<16x64xf32>
    %212 = vector.extract_strided_slice %211 {offsets = [0, 0], sizes = [1, 64], strides = [1, 1]} : vector<16x64xf32> to vector<1x64xf32>
    %213 = vector.extract_strided_slice %211 {offsets = [1, 0], sizes = [1, 64], strides = [1, 1]} : vector<16x64xf32> to vector<1x64xf32>
    %214 = vector.extract_strided_slice %211 {offsets = [2, 0], sizes = [1, 64], strides = [1, 1]} : vector<16x64xf32> to vector<1x64xf32>
    %215 = vector.extract_strided_slice %211 {offsets = [3, 0], sizes = [1, 64], strides = [1, 1]} : vector<16x64xf32> to vector<1x64xf32>
    %216 = vector.extract_strided_slice %211 {offsets = [4, 0], sizes = [1, 64], strides = [1, 1]} : vector<16x64xf32> to vector<1x64xf32>
    %217 = vector.extract_strided_slice %211 {offsets = [5, 0], sizes = [1, 64], strides = [1, 1]} : vector<16x64xf32> to vector<1x64xf32>
    %218 = vector.extract_strided_slice %211 {offsets = [6, 0], sizes = [1, 64], strides = [1, 1]} : vector<16x64xf32> to vector<1x64xf32>
    %219 = vector.extract_strided_slice %211 {offsets = [7, 0], sizes = [1, 64], strides = [1, 1]} : vector<16x64xf32> to vector<1x64xf32>
    %220 = vector.extract_strided_slice %211 {offsets = [8, 0], sizes = [1, 64], strides = [1, 1]} : vector<16x64xf32> to vector<1x64xf32>
    %221 = vector.extract_strided_slice %211 {offsets = [9, 0], sizes = [1, 64], strides = [1, 1]} : vector<16x64xf32> to vector<1x64xf32>
    %222 = vector.extract_strided_slice %211 {offsets = [10, 0], sizes = [1, 64], strides = [1, 1]} : vector<16x64xf32> to vector<1x64xf32>
    %223 = vector.extract_strided_slice %211 {offsets = [11, 0], sizes = [1, 64], strides = [1, 1]} : vector<16x64xf32> to vector<1x64xf32>
    %224 = vector.extract_strided_slice %211 {offsets = [12, 0], sizes = [1, 64], strides = [1, 1]} : vector<16x64xf32> to vector<1x64xf32>
    %225 = vector.extract_strided_slice %211 {offsets = [13, 0], sizes = [1, 64], strides = [1, 1]} : vector<16x64xf32> to vector<1x64xf32>
    %226 = vector.extract_strided_slice %211 {offsets = [14, 0], sizes = [1, 64], strides = [1, 1]} : vector<16x64xf32> to vector<1x64xf32>
    %227 = vector.extract_strided_slice %211 {offsets = [15, 0], sizes = [1, 64], strides = [1, 1]} : vector<16x64xf32> to vector<1x64xf32>
    %228 = tpu.concatenate %212, %213, %214, %215, %216, %217, %218, %219, %220, %221, %222, %223, %224, %225, %226, %227 in 1 : vector<1x64xf32>, vector<1x64xf32>, vector<1x64xf32>, vector<1x64xf32>, vector<1x64xf32>, vector<1x64xf32>, vector<1x64xf32>, vector<1x64xf32>, vector<1x64xf32>, vector<1x64xf32>, vector<1x64xf32>, vector<1x64xf32>, vector<1x64xf32>, vector<1x64xf32>, vector<1x64xf32>, vector<1x64xf32> -> vector<1x1024xf32>
    %229 = tpu.concatenate %210, %228 in 0 : vector<1x1024xf32>, vector<1x1024xf32> -> vector<2x1024xf32>
    %cst_51 = arith.constant dense<0.000000e+00> : vector<2x256xf32>
    %230 = tpu.matmul %229, %177, %cst_51 {dimension_numbers = #tpu.dot_dimension_numbers<[1], [0], [0], [1], [0, 0, 1, 1], [], []>} : vector<2x1024xf32>, vector<1024x256xf32>, vector<2x256xf32> -> vector<2x256xf32>
    %231 = vector.broadcast %178 : vector<1x256xf32> to vector<2x256xf32>
    %232 = arith.addf %230, %231 : vector<2x256xf32>
    %cst_52 = arith.constant 0.000000e+00 : f32
    %233 = vector.broadcast %cst_52 : f32 to vector<2x256xf32>
    %234 = arith.cmpf ogt, %232, %233 : vector<2x256xf32>
    %cst_53 = arith.constant 3.300000e-01 : f32
    %235 = vector.broadcast %cst_53 : f32 to vector<2x256xf32>
    %236 = arith.mulf %235, %232 : vector<2x256xf32>
    %237 = arith.select %234, %232, %236 : vector<2x256xi1>, vector<2x256xf32>
    %cst_54 = arith.constant dense<0.000000e+00> : vector<2x128xf32>
    %238 = tpu.matmul %237, %179, %cst_54 {dimension_numbers = #tpu.dot_dimension_numbers<[1], [0], [0], [1], [0, 0, 1, 1], [], []>} : vector<2x256xf32>, vector<256x128xf32>, vector<2x128xf32> -> vector<2x128xf32>
    %239 = vector.broadcast %180 : vector<1x128xf32> to vector<2x128xf32>
    %240 = arith.addf %238, %239 : vector<2x128xf32>
    %cst_55 = arith.constant 0.000000e+00 : f32
    %241 = vector.broadcast %cst_55 : f32 to vector<2x128xf32>
    %242 = arith.cmpf ogt, %240, %241 : vector<2x128xf32>
    %cst_56 = arith.constant 3.300000e-01 : f32
    %243 = vector.broadcast %cst_56 : f32 to vector<2x128xf32>
    %244 = arith.mulf %243, %240 : vector<2x128xf32>
    %245 = arith.select %242, %240, %244 : vector<2x128xi1>, vector<2x128xf32>
    %cst_57 = arith.constant 0.999994993 : f32
    %246 = vector.broadcast %cst_57 : f32 to vector<2x128xf32>
    %247 = arith.mulf %245, %246 : vector<2x128xf32>
    %cst_58 = arith.constant dense<0.000000e+00> : vector<2x30xf32>
    %248 = tpu.matmul %247, %181, %cst_58 {dimension_numbers = #tpu.dot_dimension_numbers<[1], [0], [0], [1], [0, 0, 1, 1], [], []>} : vector<2x128xf32>, vector<128x30xf32>, vector<2x30xf32> -> vector<2x30xf32>
    %249 = vector.broadcast %182 : vector<1x30xf32> to vector<2x30xf32>
    %250 = arith.addf %248, %249 : vector<2x30xf32>
    %cst_59 = arith.constant 0.000000e+00 : f32
    %251 = vector.broadcast %cst_59 : f32 to vector<2x30xf32>
    %252 = arith.cmpf ogt, %250, %251 : vector<2x30xf32>
    %cst_60 = arith.constant 3.300000e-01 : f32
    %253 = vector.broadcast %cst_60 : f32 to vector<2x30xf32>
    %254 = arith.mulf %253, %250 : vector<2x30xf32>
    %255 = arith.select %252, %250, %254 : vector<2x30xi1>, vector<2x30xf32>
    %cst_61 = arith.constant 0.999994993 : f32
    %256 = vector.broadcast %cst_61 : f32 to vector<2x30xf32>
    %257 = arith.mulf %255, %256 : vector<2x30xf32>
    %cst_62 = arith.constant dense<0.000000e+00> : vector<2x1xf32>
    %258 = tpu.matmul %257, %183, %cst_62 {dimension_numbers = #tpu.dot_dimension_numbers<[1], [0], [0], [1], [0, 0, 1, 1], [], []>} : vector<2x30xf32>, vector<30x1xf32>, vector<2x1xf32> -> vector<2x1xf32>
    %259 = vector.broadcast %184 : vector<1x1xf32> to vector<2x1xf32>
    %260 = arith.addf %258, %259 : vector<2x1xf32>
    %c0_63 = arith.constant 0 : index
    %c0_64 = arith.constant 0 : index
    %261 = vector.load %arg20[%c0_63, %c0_64] : memref<2x1xf32, #tpu.memory_space<vmem>>, vector<2x1xf32>
    tpu.vector_store %arg20[%c0_63, %c0_64], %260 {strides = array<i32>} : memref<2x1xf32, #tpu.memory_space<vmem>>, vector<2x1xf32>,
    return
  }
}

</mosaic_0001>

<llo_original>
// kernel: brainnet_cnn_forward.1
$region0: #{brainnet_cnn_forward.1}
  #allocation0 [shape = 'u32[]', space=smem, size = 0x4, offset = 0x4, fixed_abs, tag = 'smem constant byte address 0x4 - core index']
  #allocation1 [shape = 'u32[144,128]{1,0:T(1,128)}', space=vmem, size = 0x12000, scoped, tag = 'internal scratch']
  #allocation2 [shape = 'f32[1,1]{1,0:T(1,128)S(1)}', space=vmem, size = 0x200, scoped, tag = 'scoped memory for brainnet_cnn_forward.1']
  %s0 = inlined_call_operand.vmem [shape: f32[32,64], index: 0, kind: input, shape index: {}]
  %s1 = inlined_call_operand.vmem [shape: f32[32,64], index: 1, kind: input, shape index: {}]
  %s2 = inlined_call_operand.vmem [shape: f32[64,32], index: 2, kind: input, shape index: {}]
  %s3 = inlined_call_operand.vmem [shape: f32[1,32], index: 3, kind: input, shape index: {}]
  %s4 = inlined_call_operand.vmem [shape: f32[64,32], index: 4, kind: input, shape index: {}]
  %s5 = inlined_call_operand.vmem [shape: f32[1,32], index: 5, kind: input, shape index: {}]
  %s6 = inlined_call_operand.vmem [shape: f32[512,32], index: 6, kind: input, shape index: {}]
  %s7 = inlined_call_operand.vmem [shape: f32[1,32], index: 7, kind: input, shape index: {}]
  %s8 = inlined_call_operand.vmem [shape: f32[512,32], index: 8, kind: input, shape index: {}]
  %s9 = inlined_call_operand.vmem [shape: f32[1,32], index: 9, kind: input, shape index: {}]
  %s10 = inlined_call_operand.vmem [shape: f32[512,64], index: 10, kind: input, shape index: {}]
  %s11 = inlined_call_operand.vmem [shape: f32[1,64], index: 11, kind: input, shape index: {}]
  %s12 = inlined_call_operand.vmem [shape: f32[1024,256], index: 12, kind: input, shape index: {}]
  %s13 = inlined_call_operand.vmem [shape: f32[1,256], index: 13, kind: input, shape index: {}]
  %s14 = inlined_call_operand.vmem [shape: f32[256,128], index: 14, kind: input, shape index: {}]
  %s15 = inlined_call_operand.vmem [shape: f32[1,128], index: 15, kind: input, shape index: {}]
  %s16 = inlined_call_operand.vmem [shape: f32[128,30], index: 16, kind: input, shape index: {}]
  %s17 = inlined_call_operand.vmem [shape: f32[1,30], index: 17, kind: input, shape index: {}]
  %s18 = inlined_call_operand.vmem [shape: f32[30,1], index: 18, kind: input, shape index: {}]
  %s19 = inlined_call_operand.<no memory space> [shape: f32[1,1], index: 19, kind: input, shape index: {}]
  %s20 = inlined_call_operand.vmem [shape: f32[2,1], index: 20, kind: output, shape index: {}]
  %s21 = sld [smem:[#allocation0]]
  $region90: #{brainnet_cnn_forward.1} parent=0
    _
  %s23 = ssub.s32 1, %s21
  %s24 = scalar_select 0, %s23, %s21
  %v25 = vstv %s19
  %26 = vst [vmem:[#allocation2] sm:$0x1] %v25
  // Predicated region
  $region2: #{brainnet_cnn_forward.1} parent=0 // pred_check
    _
  $region3: #{brainnet_cnn_forward.1} parent=0 // pred_check_branch
    %28 = sbr.rel (0) target = $region5
  $region4: #{brainnet_cnn_forward.1} parent=0 // pred_region
    _
  $region5: #{brainnet_cnn_forward.1} parent=0 // pred_fallthru
    _
  // Predicated region
  $region6: #{brainnet_cnn_forward.1} parent=0 // pred_check
    _
  $region7: #{brainnet_cnn_forward.1} parent=0 // pred_check_branch
    %30 = sbr.rel (0) target = $region9
  $region8: #{brainnet_cnn_forward.1} parent=0 // pred_region
    _
  $region9: #{brainnet_cnn_forward.1} parent=0 // pred_fallthru
    _
  // Predicated region
  $region10: #{brainnet_cnn_forward.1} parent=0 // pred_check
    _
  $region11: #{brainnet_cnn_forward.1} parent=0 // pred_check_branch
    %32 = sbr.rel (0) target = $region13
  $region12: #{brainnet_cnn_forward.1} parent=0 // pred_region
    _
  $region13: #{brainnet_cnn_forward.1} parent=0 // pred_fallthru
    _
  // Predicated region
  $region14: #{brainnet_cnn_forward.1} parent=0 // pred_check
    _
  $region15: #{brainnet_cnn_forward.1} parent=0 // pred_check_branch
    %34 = sbr.rel (0) target = $region17
  $region16: #{brainnet_cnn_forward.1} parent=0 // pred_region
    _
  $region17: #{brainnet_cnn_forward.1} parent=0 // pred_fallthru
    _
  // Predicated region
  $region18: #{brainnet_cnn_forward.1} parent=0 // pred_check
    _
  $region19: #{brainnet_cnn_forward.1} parent=0 // pred_check_branch
    %36 = sbr.rel (0) target = $region21
  $region20: #{brainnet_cnn_forward.1} parent=0 // pred_region
    _
  $region21: #{brainnet_cnn_forward.1} parent=0 // pred_fallthru
    _
  // Predicated region
  $region22: #{brainnet_cnn_forward.1} parent=0 // pred_check
    _
  $region23: #{brainnet_cnn_forward.1} parent=0 // pred_check_branch
    %38 = sbr.rel (0) target = $region25
  $region24: #{brainnet_cnn_forward.1} parent=0 // pred_region
    _
  $region25: #{brainnet_cnn_forward.1} parent=0 // pred_fallthru
    _
  // Predicated region
  $region26: #{brainnet_cnn_forward.1} parent=0 // pred_check
    _
  $region27: #{brainnet_cnn_forward.1} parent=0 // pred_check_branch
    %40 = sbr.rel (0) target = $region29
  $region28: #{brainnet_cnn_forward.1} parent=0 // pred_region
    _
  $region29: #{brainnet_cnn_forward.1} parent=0 // pred_fallthru
    _
  // Predicated region
  $region30: #{brainnet_cnn_forward.1} parent=0 // pred_check
    _
  $region31: #{brainnet_cnn_forward.1} parent=0 // pred_check_branch
    %42 = sbr.rel (0) target = $region33
  $region32: #{brainnet_cnn_forward.1} parent=0 // pred_region
    _
  $region33: #{brainnet_cnn_forward.1} parent=0 // pred_fallthru
    _
  // Predicated region
  $region34: #{brainnet_cnn_forward.1} parent=0 // pred_check
    _
  $region35: #{brainnet_cnn_forward.1} parent=0 // pred_check_branch
    %44 = sbr.rel (0) target = $region37
  $region36: #{brainnet_cnn_forward.1} parent=0 // pred_region
    _
  $region37: #{brainnet_cnn_forward.1} parent=0 // pred_fallthru
    _
  // Predicated region
  $region38: #{brainnet_cnn_forward.1} parent=0 // pred_check
    _
  $region39: #{brainnet_cnn_forward.1} parent=0 // pred_check_branch
    %46 = sbr.rel (0) target = $region41
  $region40: #{brainnet_cnn_forward.1} parent=0 // pred_region
    _
  $region41: #{brainnet_cnn_forward.1} parent=0 // pred_fallthru
    _
  // Predicated region
  $region42: #{brainnet_cnn_forward.1} parent=0 // pred_check
    _
  $region43: #{brainnet_cnn_forward.1} parent=0 // pred_check_branch
    %48 = sbr.rel (0) target = $region45
  $region44: #{brainnet_cnn_forward.1} parent=0 // pred_region
    _
  $region45: #{brainnet_cnn_forward.1} parent=0 // pred_fallthru
    _
  // Predicated region
  $region46: #{brainnet_cnn_forward.1} parent=0 // pred_check
    _
  $region47: #{brainnet_cnn_forward.1} parent=0 // pred_check_branch
    %50 = sbr.rel (0) target = $region49
  $region48: #{brainnet_cnn_forward.1} parent=0 // pred_region
    _
  $region49: #{brainnet_cnn_forward.1} parent=0 // pred_fallthru
    _
  // Predicated region
  $region50: #{brainnet_cnn_forward.1} parent=0 // pred_check
    _
  $region51: #{brainnet_cnn_forward.1} parent=0 // pred_check_branch
    %52 = sbr.rel (0) target = $region53
  $region52: #{brainnet_cnn_forward.1} parent=0 // pred_region
    _
  $region53: #{brainnet_cnn_forward.1} parent=0 // pred_fallthru
    _
  // Predicated region
  $region54: #{brainnet_cnn_forward.1} parent=0 // pred_check
    _
  $region55: #{brainnet_cnn_forward.1} parent=0 // pred_check_branch
    %54 = sbr.rel (0) target = $region57
  $region56: #{brainnet_cnn_forward.1} parent=0 // pred_region
    _
  $region57: #{brainnet_cnn_forward.1} parent=0 // pred_fallthru
    _
  // Predicated region
  $region58: #{brainnet_cnn_forward.1} parent=0 // pred_check
    _
  $region59: #{brainnet_cnn_forward.1} parent=0 // pred_check_branch
    %56 = sbr.rel (0) target = $region61
  $region60: #{brainnet_cnn_forward.1} parent=0 // pred_region
    _
  $region61: #{brainnet_cnn_forward.1} parent=0 // pred_fallthru
    _
  // Predicated region
  $region62: #{brainnet_cnn_forward.1} parent=0 // pred_check
    _
  $region63: #{brainnet_cnn_forward.1} parent=0 // pred_check_branch
    %58 = sbr.rel (0) target = $region65
  $region64: #{brainnet_cnn_forward.1} parent=0 // pred_region
    _
  $region65: #{brainnet_cnn_forward.1} parent=0 // pred_fallthru
    _
  // Predicated region
  $region66: #{brainnet_cnn_forward.1} parent=0 // pred_check
    _
  $region67: #{brainnet_cnn_forward.1} parent=0 // pred_check_branch
    %60 = sbr.rel (0) target = $region69
  $region68: #{brainnet_cnn_forward.1} parent=0 // pred_region
    _
  $region69: #{brainnet_cnn_forward.1} parent=0 // pred_fallthru
    _
  // Predicated region
  $region70: #{brainnet_cnn_forward.1} parent=0 // pred_check
    _
  $region71: #{brainnet_cnn_forward.1} parent=0 // pred_check_branch
    %62 = sbr.rel (0) target = $region73
  $region72: #{brainnet_cnn_forward.1} parent=0 // pred_region
    _
  $region73: #{brainnet_cnn_forward.1} parent=0 // pred_fallthru
    _
  // Predicated region
  $region74: #{brainnet_cnn_forward.1} parent=0 // pred_check
    _
  $region75: #{brainnet_cnn_forward.1} parent=0 // pred_check_branch
    %64 = sbr.rel (0) target = $region77
  $region76: #{brainnet_cnn_forward.1} parent=0 // pred_region
    _
  $region77: #{brainnet_cnn_forward.1} parent=0 // pred_fallthru
    _
  // Predicated region
  $region78: #{brainnet_cnn_forward.1} parent=0 // pred_check
    _
  $region79: #{brainnet_cnn_forward.1} parent=0 // pred_check_branch
    %66 = sbr.rel (0) target = $region81
  $region80: #{brainnet_cnn_forward.1} parent=0 // pred_region
    _
  $region81: #{brainnet_cnn_forward.1} parent=0 // pred_fallthru
    _
  %v67 = vld [vmem:[%s0] sm:$0xff]
  %v68 = vld [vmem:[%s0 + $0x8] sm:$0xff]
  %v69 = vld [vmem:[%s0 + $0x10] sm:$0xff]
  %v70 = vld [vmem:[%s0 + $0x18] sm:$0xff]
  %v71 = vld [vmem:[%s1] sm:$0xff]
  %v72 = vld [vmem:[%s1 + $0x8] sm:$0xff]
  %v73 = vld [vmem:[%s1 + $0x10] sm:$0xff]
  %v74 = vld [vmem:[%s1 + $0x18] sm:$0xff]
  %v75 = vld [vmem:[%s2] sm:$0xff]
  %v76 = vld [vmem:[%s2 + $0x8] sm:$0xff]
  %v77 = vld [vmem:[%s2 + $0x10] sm:$0xff]
  %v78 = vld [vmem:[%s2 + $0x18] sm:$0xff]
  %v79 = vld [vmem:[%s2 + $0x20] sm:$0xff]
  %v80 = vld [vmem:[%s2 + $0x28] sm:$0xff]
  %v81 = vld [vmem:[%s2 + $0x30] sm:$0xff]
  %v82 = vld [vmem:[%s2 + $0x38] sm:$0xff]
  %v83 = vld [vmem:[%s3] sm:$0x1]
  %v84 = vld [vmem:[%s4] sm:$0xff]
  %v85 = vld [vmem:[%s4 + $0x8] sm:$0xff]
  %v86 = vld [vmem:[%s4 + $0x10] sm:$0xff]
  %v87 = vld [vmem:[%s4 + $0x18] sm:$0xff]
  %v88 = vld [vmem:[%s4 + $0x20] sm:$0xff]
  %v89 = vld [vmem:[%s4 + $0x28] sm:$0xff]
  %v90 = vld [vmem:[%s4 + $0x30] sm:$0xff]
  %v91 = vld [vmem:[%s4 + $0x38] sm:$0xff]
  %v92 = vld [vmem:[%s5] sm:$0x1]
  %v94 = vlaneseq
  %v95 = vshrl.u32 %v94, 7
  %v96 = vsub.s32 0, %v95
  %v97 = vrot.slane %v83, %v96
  %vm99 = vcmask 523264
  %v101 = vsel %vm99, %v67, 0
  %v104 = vsel %vm99, %v68, 0
  %v107 = vsel %vm99, %v69, 0
  %v110 = vsel %vm99, %v70, 0
  %112 = vmatprep.subr.mxu0 0.0
  %113 = vmatpush1.msra.mxu0 0.0
  %114 = vmatprep.subr.mxu0 0.0
  %115 = vmatpush1.msra.mxu0 0.0
  %116 = vmatprep.subr.mxu0 0.0
  %117 = vmatpush1.msra.mxu0 0.0
  %118 = vmatprep.subr.mxu0 0.0
  %119 = vmatpush1.msra.mxu0 0.0
  %120 = vmatprep.subr.mxu0 0.0
  %121 = vmatpush1.msra.mxu0 0.0
  %122 = vmatprep.subr.mxu0 0.0
  %123 = vmatpush1.msra.mxu0 0.0
  %124 = vmatprep.subr.mxu0 0.0
  %125 = vmatpush1.msra.mxu0 0.0
  %126 = vmatprep.subr.mxu0 0.0
  %127 = vmatpush1.msra.mxu0 0.0
  %128 = vmatprep.subr.mxu0 0.0
  %129 = vmatpush1.msra.mxu0 %v82
  %130 = vmatprep.subr.mxu0 0.0
  %131 = vmatpush1.msra.mxu0 %v81
  %132 = vmatprep.subr.mxu0 0.0
  %133 = vmatpush1.msra.mxu0 %v80
  %134 = vmatprep.subr.mxu0 0.0
  %135 = vmatpush1.msra.mxu0 %v79
  %136 = vmatprep.subr.mxu0 0.0
  %137 = vmatpush1.msra.mxu0 %v78
  %138 = vmatprep.subr.mxu0 0.0
  %139 = vmatpush1.msra.mxu0 %v77
  %140 = vmatprep.subr.mxu0 0.0
  %141 = vmatpush1.msra.mxu0 %v76
  %142 = vmatprep.subr.mxu0 0.0
  %143 = vmatpush1.msra.mxu0 %v75
  %144 = vmatprep.subr.mxu0 0.0
  %145 = vmatpush2.msra.mxu0 0.0
  %146 = vmatprep.subr.mxu0 0.0
  %147 = vmatpush2.msra.mxu0 0.0
  %148 = vmatprep.subr.mxu0 0.0
  %149 = vmatpush2.msra.mxu0 0.0
  %150 = vmatprep.subr.mxu0 0.0
  %151 = vmatpush2.msra.mxu0 0.0
  %152 = vmatprep.subr.mxu0 0.0
  %153 = vmatpush2.msra.mxu0 0.0
  %154 = vmatprep.subr.mxu0 0.0
  %155 = vmatpush2.msra.mxu0 0.0
  %156 = vmatprep.subr.mxu0 0.0
  %157 = vmatpush2.msra.mxu0 0.0
  %158 = vmatprep.subr.mxu0 0.0
  %159 = vmatpush2.msra.mxu0 0.0
  %160 = vmatprep.subr.mxu0 0.0
  %161 = vmatpush2.msra.mxu0 0.0
  %162 = vmatprep.subr.mxu0 0.0
  %163 = vmatpush2.msra.mxu0 0.0
  %164 = vmatprep.subr.mxu0 0.0
  %165 = vmatpush2.msra.mxu0 0.0
  %166 = vmatprep.subr.mxu0 0.0
  %167 = vmatpush2.msra.mxu0 0.0
  %168 = vmatprep.subr.mxu0 0.0
  %169 = vmatpush2.msra.mxu0 0.0
  %170 = vmatprep.subr.mxu0 0.0
  %171 = vmatpush2.msra.mxu0 0.0
  %172 = vmatprep.subr.mxu0 0.0
  %173 = vmatpush2.msra.mxu0 0.0
  %174 = vmatprep.subr.mxu0 0.0
  %175 = vmatpush2.msra.mxu0 0.0
  %176 = vmatprep.mubr.f32.mxu0 0.0
  %177 = vmatmul.mubr.f32.gmra.mxu0 %v101
  %v178 = vpop.f32.mrf.mxu0
  %v179 = vadd.f32 %v97, %v178
  %v180 = vpop.f32.mrf.mxu0
  %181 = vmatprep.mubr.f32.mxu0 0.0
  %182 = vmatmul.mubr.f32.gmra.mxu0 %v104
  %v183 = vpop.f32.mrf.mxu0
  %v184 = vadd.f32 %v97, %v183
  %v185 = vpop.f32.mrf.mxu0
  %186 = vmatprep.mubr.f32.mxu0 0.0
  %187 = vmatmul.mubr.f32.gmra.mxu0 %v107
  %v188 = vpop.f32.mrf.mxu0
  %v189 = vadd.f32 %v97, %v188
  %v190 = vpop.f32.mrf.mxu0
  %191 = vmatprep.mubr.f32.mxu0 0.0
  %192 = vmatmul.mubr.f32.gmra.mxu0 %v110
  %v193 = vpop.f32.mrf.mxu0
  %v194 = vadd.f32 %v97, %v193
  %v195 = vpop.f32.mrf.mxu0
  %196 = vdwg.mxu0
  %v198 = vlaneseq
  %v199 = vshrl.u32 %v198, 7
  %v200 = vsub.s32 0, %v199
  %v201 = vrot.slane %v92, %v200
  %v204 = vsel %vm99, %v71, 0
  %v207 = vsel %vm99, %v72, 0
  %v210 = vsel %vm99, %v73, 0
  %v213 = vsel %vm99, %v74, 0
  %215 = vmatprep.subr.mxu0 0.0
  %216 = vmatpush1.msra.mxu0 0.0
  %217 = vmatprep.subr.mxu0 0.0
  %218 = vmatpush1.msra.mxu0 0.0
  %219 = vmatprep.subr.mxu0 0.0
  %220 = vmatpush1.msra.mxu0 0.0
  %221 = vmatprep.subr.mxu0 0.0
  %222 = vmatpush1.msra.mxu0 0.0
  %223 = vmatprep.subr.mxu0 0.0
  %224 = vmatpush1.msra.mxu0 0.0
  %225 = vmatprep.subr.mxu0 0.0
  %226 = vmatpush1.msra.mxu0 0.0
  %227 = vmatprep.subr.mxu0 0.0
  %228 = vmatpush1.msra.mxu0 0.0
  %229 = vmatprep.subr.mxu0 0.0
  %230 = vmatpush1.msra.mxu0 0.0
  %231 = vmatprep.subr.mxu0 0.0
  %232 = vmatpush1.msra.mxu0 %v91
  %233 = vmatprep.subr.mxu0 0.0
  %234 = vmatpush1.msra.mxu0 %v90
  %235 = vmatprep.subr.mxu0 0.0
  %236 = vmatpush1.msra.mxu0 %v89
  %237 = vmatprep.subr.mxu0 0.0
  %238 = vmatpush1.msra.mxu0 %v88
  %239 = vmatprep.subr.mxu0 0.0
  %240 = vmatpush1.msra.mxu0 %v87
  %241 = vmatprep.subr.mxu0 0.0
  %242 = vmatpush1.msra.mxu0 %v86
  %243 = vmatprep.subr.mxu0 0.0
  %244 = vmatpush1.msra.mxu0 %v85
  %245 = vmatprep.subr.mxu0 0.0
  %246 = vmatpush1.msra.mxu0 %v84
  %247 = vmatprep.subr.mxu0 0.0
  %248 = vmatpush2.msra.mxu0 0.0
  %249 = vmatprep.subr.mxu0 0.0
  %250 = vmatpush2.msra.mxu0 0.0
  %251 = vmatprep.subr.mxu0 0.0
  %252 = vmatpush2.msra.mxu0 0.0
  %253 = vmatprep.subr.mxu0 0.0
  %254 = vmatpush2.msra.mxu0 0.0
  %255 = vmatprep.subr.mxu0 0.0
  %256 = vmatpush2.msra.mxu0 0.0
  %257 = vmatprep.subr.mxu0 0.0
  %258 = vmatpush2.msra.mxu0 0.0
  %259 = vmatprep.subr.mxu0 0.0
  %260 = vmatpush2.msra.mxu0 0.0
  %261 = vmatprep.subr.mxu0 0.0
  %262 = vmatpush2.msra.mxu0 0.0
  %263 = vmatprep.subr.mxu0 0.0
  %264 = vmatpush2.msra.mxu0 0.0
  %265 = vmatprep.subr.mxu0 0.0
  %266 = vmatpush2.msra.mxu0 0.0
  %267 = vmatprep.subr.mxu0 0.0
  %268 = vmatpush2.msra.mxu0 0.0
  %269 = vmatprep.subr.mxu0 0.0
  %270 = vmatpush2.msra.mxu0 0.0
  %271 = vmatprep.subr.mxu0 0.0
  %272 = vmatpush2.msra.mxu0 0.0
  %273 = vmatprep.subr.mxu0 0.0
  %274 = vmatpush2.msra.mxu0 0.0
  %275 = vmatprep.subr.mxu0 0.0
  %276 = vmatpush2.msra.mxu0 0.0
  %277 = vmatprep.subr.mxu0 0.0
  %278 = vmatpush2.msra.mxu0 0.0
  %279 = vmatprep.mubr.f32.mxu0 0.0
  %280 = vmatmul.mubr.f32.gmra.mxu0 %v204
  %v281 = vpop.f32.mrf.mxu0
  %v282 = vadd.f32 %v201, %v281
  %v283 = vpop.f32.mrf.mxu0
  %284 = vmatprep.mubr.f32.mxu0 0.0
  %285 = vmatmul.mubr.f32.gmra.mxu0 %v207
  %v286 = vpop.f32.mrf.mxu0
  %v287 = vadd.f32 %v201, %v286
  %v288 = vpop.f32.mrf.mxu0
  %289 = vmatprep.mubr.f32.mxu0 0.0
  %290 = vmatmul.mubr.f32.gmra.mxu0 %v210
  %v291 = vpop.f32.mrf.mxu0
  %v292 = vadd.f32 %v201, %v291
  %v293 = vpop.f32.mrf.mxu0
  %294 = vmatprep.mubr.f32.mxu0 0.0
  %295 = vmatmul.mubr.f32.gmra.mxu0 %v213
  %v296 = vpop.f32.mrf.mxu0
  %v297 = vadd.f32 %v201, %v296
  %v298 = vpop.f32.mrf.mxu0
  %299 = vdwg.mxu0
  %304 = vrot.lane.b32.xlu0 %v179, 32
  %v305 = vpop.permute.xlu0 %304
  %306 = vrot.lane.b32.xlu0 %v184, 32
  %v307 = vpop.permute.xlu0 %306
  %308 = vrot.lane.b32.xlu0 %v189, 32
  %v309 = vpop.permute.xlu0 %308
  %310 = vrot.lane.b32.xlu0 %v194, 32
  %v311 = vpop.permute.xlu0 %310
  %316 = vrot.lane.b32.xlu0 %v179, 64
  %v317 = vpop.permute.xlu0 %316
  %318 = vrot.lane.b32.xlu0 %v184, 64
  %v319 = vpop.permute.xlu0 %318
  %320 = vrot.lane.b32.xlu0 %v189, 64
  %v321 = vpop.permute.xlu0 %320
  %322 = vrot.lane.b32.xlu0 %v194, 64
  %v323 = vpop.permute.xlu0 %322
  %328 = vrot.lane.b32.xlu0 %v179, 96
  %v329 = vpop.permute.xlu0 %328
  %330 = vrot.lane.b32.xlu0 %v184, 96
  %v331 = vpop.permute.xlu0 %330
  %332 = vrot.lane.b32.xlu0 %v189, 96
  %v333 = vpop.permute.xlu0 %332
  %334 = vrot.lane.b32.xlu0 %v194, 96
  %v335 = vpop.permute.xlu0 %334
  %vm340 = vcmask 261120
  %v341 = vsel %vm340, %v179, %v305
  %v342 = vsel %vm340, %v184, %v307
  %v343 = vsel %vm340, %v189, %v309
  %v344 = vsel %vm340, %v194, %v311
  %v345 = vsel %vm99, %v341, %v317
  %v346 = vsel %vm99, %v342, %v319
  %v347 = vsel %vm99, %v343, %v321
  %v348 = vsel %vm99, %v344, %v323
  %vm349 = vcmask 785408
  %v350 = vsel %vm349, %v345, %v329
  %v351 = vsel %vm349, %v346, %v331
  %v352 = vsel %vm349, %v347, %v333
  %v353 = vsel %vm349, %v348, %v335
  %v355 = vrot.slane %v282, 1
  %356 = vrot.lane.b32.xlu0 %v355, 32
  %v357 = vpop.permute.xlu0 %356
  %v359 = vrot.slane %v282, 2
  %360 = vrot.lane.b32.xlu0 %v359, 64
  %v361 = vpop.permute.xlu0 %360
  %v363 = vrot.slane %v282, 3
  %364 = vrot.lane.b32.xlu0 %v363, 96
  %v365 = vpop.permute.xlu0 %364
  %v367 = vrot.slane %v282, 4
  %v369 = vrot.slane %v282, 5
  %370 = vrot.lane.b32.xlu0 %v369, 32
  %v371 = vpop.permute.xlu0 %370
  %v373 = vrot.slane %v282, 6
  %374 = vrot.lane.b32.xlu0 %v373, 64
  %v375 = vpop.permute.xlu0 %374
  %v377 = vrot.slane %v282, 7
  %378 = vrot.lane.b32.xlu0 %v377, 96
  %v379 = vpop.permute.xlu0 %378
  %v382 = vrot.slane %v287, 1
  %383 = vrot.lane.b32.xlu0 %v382, 32
  %v384 = vpop.permute.xlu0 %383
  %v386 = vrot.slane %v287, 2
  %387 = vrot.lane.b32.xlu0 %v386, 64
  %v388 = vpop.permute.xlu0 %387
  %v390 = vrot.slane %v287, 3
  %391 = vrot.lane.b32.xlu0 %v390, 96
  %v392 = vpop.permute.xlu0 %391
  %v394 = vrot.slane %v287, 4
  %v396 = vrot.slane %v287, 5
  %397 = vrot.lane.b32.xlu0 %v396, 32
  %v398 = vpop.permute.xlu0 %397
  %v400 = vrot.slane %v287, 6
  %401 = vrot.lane.b32.xlu0 %v400, 64
  %v402 = vpop.permute.xlu0 %401
  %v404 = vrot.slane %v287, 7
  %405 = vrot.lane.b32.xlu0 %v404, 96
  %v406 = vpop.permute.xlu0 %405
  %v408 = vsel %vm340, %v282, %v357
  %v409 = vsel %vm99, %v408, %v361
  %v410 = vsel %vm349, %v409, %v365
  %v411 = vsel %vm340, %v367, %v371
  %v412 = vsel %vm99, %v411, %v375
  %v413 = vsel %vm349, %v412, %v379
  %v414 = vsel %vm340, %v287, %v384
  %v415 = vsel %vm99, %v414, %v388
  %v416 = vsel %vm349, %v415, %v392
  %v417 = vsel %vm340, %v394, %v398
  %v418 = vsel %vm99, %v417, %v402
  %v419 = vsel %vm349, %v418, %v406
  %v421 = vrot.slane %v292, 1
  %422 = vrot.lane.b32.xlu0 %v421, 32
  %v423 = vpop.permute.xlu0 %422
  %v425 = vrot.slane %v292, 2
  %426 = vrot.lane.b32.xlu0 %v425, 64
  %v427 = vpop.permute.xlu0 %426
  %v429 = vrot.slane %v292, 3
  %430 = vrot.lane.b32.xlu0 %v429, 96
  %v431 = vpop.permute.xlu0 %430
  %v433 = vrot.slane %v292, 4
  %v435 = vrot.slane %v292, 5
  %436 = vrot.lane.b32.xlu0 %v435, 32
  %v437 = vpop.permute.xlu0 %436
  %v439 = vrot.slane %v292, 6
  %440 = vrot.lane.b32.xlu0 %v439, 64
  %v441 = vpop.permute.xlu0 %440
  %v443 = vrot.slane %v292, 7
  %444 = vrot.lane.b32.xlu0 %v443, 96
  %v445 = vpop.permute.xlu0 %444
  %v448 = vrot.slane %v297, 1
  %449 = vrot.lane.b32.xlu0 %v448, 32
  %v450 = vpop.permute.xlu0 %449
  %v452 = vrot.slane %v297, 2
  %453 = vrot.lane.b32.xlu0 %v452, 64
  %v454 = vpop.permute.xlu0 %453
  %v456 = vrot.slane %v297, 3
  %457 = vrot.lane.b32.xlu0 %v456, 96
  %v458 = vpop.permute.xlu0 %457
  %v460 = vrot.slane %v297, 4
  %v462 = vrot.slane %v297, 5
  %463 = vrot.lane.b32.xlu0 %v462, 32
  %v464 = vpop.permute.xlu0 %463
  %v466 = vrot.slane %v297, 6
  %467 = vrot.lane.b32.xlu0 %v466, 64
  %v468 = vpop.permute.xlu0 %467
  %v470 = vrot.slane %v297, 7
  %471 = vrot.lane.b32.xlu0 %v470, 96
  %v472 = vpop.permute.xlu0 %471
  %v474 = vsel %vm340, %v292, %v423
  %v475 = vsel %vm99, %v474, %v427
  %v476 = vsel %vm349, %v475, %v431
  %v477 = vsel %vm340, %v433, %v437
  %v478 = vsel %vm99, %v477, %v441
  %v479 = vsel %vm349, %v478, %v445
  %v480 = vsel %vm340, %v297, %v450
  %v481 = vsel %vm99, %v480, %v454
  %v482 = vsel %vm349, %v481, %v458
  %v483 = vsel %vm340, %v460, %v464
  %v484 = vsel %vm99, %v483, %v468
  %v485 = vsel %vm349, %v484, %v472
  %v490 = vrot.slane %v476, 7
  %v491 = vrot.slane %v479, 7
  %v492 = vrot.slane %v482, 7
  %v493 = vrot.slane %v485, 7
  %vm498 = vcmask 1040384
  %v499 = vsel %vm498, %v410, %v490
  %v500 = vsel %vm498, %v413, %v491
  %v501 = vsel %vm498, %v416, %v492
  %v502 = vsel %vm498, %v419, %v493
  %v503 = vlaneseq
  %v504 = vshrl.u32 %v503, 7
  %v505 = vsub.s32 0, %v504
  %v506 = vrot.slane %v499, %v505
  %v507 = vlaneseq
  %v508 = vshrl.u32 %v507, 7
  %v509 = vsub.s32 0, %v508
  %v510 = vrot.slane %v500, %v509
  %v511 = vlaneseq
  %v512 = vshrl.u32 %v511, 7
  %v513 = vsub.s32 0, %v512
  %v514 = vrot.slane %v501, %v513
  %v515 = vlaneseq
  %v516 = vshrl.u32 %v515, 7
  %v517 = vsub.s32 0, %v516
  %v518 = vrot.slane %v502, %v517
  %v519 = vlaneseq
  %v520 = vshrl.u32 %v519, 7
  %v521 = vsub.s32 1, %v520
  %v522 = vrot.slane %v499, %v521
  %v523 = vlaneseq
  %v524 = vshrl.u32 %v523, 7
  %v525 = vsub.s32 1, %v524
  %v526 = vrot.slane %v500, %v525
  %v527 = vlaneseq
  %v528 = vshrl.u32 %v527, 7
  %v529 = vsub.s32 1, %v528
  %v530 = vrot.slane %v501, %v529
  %v531 = vlaneseq
  %v532 = vshrl.u32 %v531, 7
  %v533 = vsub.s32 1, %v532
  %v534 = vrot.slane %v502, %v533
  %v535 = vadd.f32 %v350, %v506
  %v536 = vadd.f32 %v350, %v510
  %v537 = vadd.f32 %v350, %v514
  %v538 = vadd.f32 %v350, %v518
  %v539 = vadd.f32 %v351, %v506
  %v540 = vadd.f32 %v351, %v510
  %v541 = vadd.f32 %v351, %v514
  %v542 = vadd.f32 %v351, %v518
  %v543 = vadd.f32 %v352, %v522
  %v544 = vadd.f32 %v352, %v526
  %v545 = vadd.f32 %v352, %v530
  %v546 = vadd.f32 %v352, %v534
  %v547 = vadd.f32 %v353, %v522
  %v548 = vadd.f32 %v353, %v526
  %v549 = vadd.f32 %v353, %v530
  %v550 = vadd.f32 %v353, %v534
  %vm551 = vcmp.gt.f32.partialorder %v535, 0.0
  %vm552 = vcmp.gt.f32.partialorder %v536, 0.0
  %vm553 = vcmp.gt.f32.partialorder %v537, 0.0
  %vm554 = vcmp.gt.f32.partialorder %v538, 0.0
  %vm555 = vcmp.gt.f32.partialorder %v539, 0.0
  %vm556 = vcmp.gt.f32.partialorder %v540, 0.0
  %vm557 = vcmp.gt.f32.partialorder %v541, 0.0
  %vm558 = vcmp.gt.f32.partialorder %v542, 0.0
  %vm559 = vcmp.gt.f32.partialorder %v543, 0.0
  %vm560 = vcmp.gt.f32.partialorder %v544, 0.0
  %vm561 = vcmp.gt.f32.partialorder %v545, 0.0
  %vm562 = vcmp.gt.f32.partialorder %v546, 0.0
  %vm563 = vcmp.gt.f32.partialorder %v547, 0.0
  %vm564 = vcmp.gt.f32.partialorder %v548, 0.0
  %vm565 = vcmp.gt.f32.partialorder %v549, 0.0
  %vm566 = vcmp.gt.f32.partialorder %v550, 0.0
  %v567 = vmul.f32 %v535, 0.33
  %v568 = vmul.f32 %v536, 0.33
  %v569 = vmul.f32 %v537, 0.33
  %v570 = vmul.f32 %v538, 0.33
  %v571 = vmul.f32 %v539, 0.33
  %v572 = vmul.f32 %v540, 0.33
  %v573 = vmul.f32 %v541, 0.33
  %v574 = vmul.f32 %v542, 0.33
  %v575 = vmul.f32 %v543, 0.33
  %v576 = vmul.f32 %v544, 0.33
  %v577 = vmul.f32 %v545, 0.33
  %v578 = vmul.f32 %v546, 0.33
  %v579 = vmul.f32 %v547, 0.33
  %v580 = vmul.f32 %v548, 0.33
  %v581 = vmul.f32 %v549, 0.33
  %v582 = vmul.f32 %v550, 0.33
  %v583 = vsel %vm551, %v535, %v567
  %v584 = vsel %vm552, %v536, %v568
  %v585 = vsel %vm553, %v537, %v569
  %v586 = vsel %vm554, %v538, %v570
  %v587 = vsel %vm555, %v539, %v571
  %v588 = vsel %vm556, %v540, %v572
  %v589 = vsel %vm557, %v541, %v573
  %v590 = vsel %vm558, %v542, %v574
  %v591 = vsel %vm559, %v543, %v575
  %v592 = vsel %vm560, %v544, %v576
  %v593 = vsel %vm561, %v545, %v577
  %v594 = vsel %vm562, %v546, %v578
  %v595 = vsel %vm563, %v547, %v579
  %v596 = vsel %vm564, %v548, %v580
  %v597 = vsel %vm565, %v549, %v581
  %v598 = vsel %vm566, %v550, %v582
  %599 = vrot.lane.b32.xlu0 %v282, 32
  %v600 = vpop.permute.xlu0 %599
  %601 = vrot.lane.b32.xlu0 %v287, 32
  %v602 = vpop.permute.xlu0 %601
  %603 = vrot.lane.b32.xlu0 %v292, 32
  %v604 = vpop.permute.xlu0 %603
  %605 = vrot.lane.b32.xlu0 %v297, 32
  %v606 = vpop.permute.xlu0 %605
  %611 = vrot.lane.b32.xlu0 %v282, 64
  %v612 = vpop.permute.xlu0 %611
  %613 = vrot.lane.b32.xlu0 %v287, 64
  %v614 = vpop.permute.xlu0 %613
  %615 = vrot.lane.b32.xlu0 %v292, 64
  %v616 = vpop.permute.xlu0 %615
  %617 = vrot.lane.b32.xlu0 %v297, 64
  %v618 = vpop.permute.xlu0 %617
  %623 = vrot.lane.b32.xlu0 %v282, 96
  %v624 = vpop.permute.xlu0 %623
  %625 = vrot.lane.b32.xlu0 %v287, 96
  %v626 = vpop.permute.xlu0 %625
  %627 = vrot.lane.b32.xlu0 %v292, 96
  %v628 = vpop.permute.xlu0 %627
  %629 = vrot.lane.b32.xlu0 %v297, 96
  %v630 = vpop.permute.xlu0 %629
  %v635 = vsel %vm340, %v282, %v600
  %v636 = vsel %vm340, %v287, %v602
  %v637 = vsel %vm340, %v292, %v604
  %v638 = vsel %vm340, %v297, %v606
  %v639 = vsel %vm99, %v635, %v612
  %v640 = vsel %vm99, %v636, %v614
  %v641 = vsel %vm99, %v637, %v616
  %v642 = vsel %vm99, %v638, %v618
  %v643 = vsel %vm349, %v639, %v624
  %v644 = vsel %vm349, %v640, %v626
  %v645 = vsel %vm349, %v641, %v628
  %v646 = vsel %vm349, %v642, %v630
  %v647 = vrot.slane %v179, 1
  %648 = vrot.lane.b32.xlu0 %v647, 32
  %v649 = vpop.permute.xlu0 %648
  %v651 = vrot.slane %v179, 2
  %652 = vrot.lane.b32.xlu0 %v651, 64
  %v653 = vpop.permute.xlu0 %652
  %v655 = vrot.slane %v179, 3
  %656 = vrot.lane.b32.xlu0 %v655, 96
  %v657 = vpop.permute.xlu0 %656
  %v659 = vrot.slane %v179, 4
  %v661 = vrot.slane %v179, 5
  %662 = vrot.lane.b32.xlu0 %v661, 32
  %v663 = vpop.permute.xlu0 %662
  %v665 = vrot.slane %v179, 6
  %666 = vrot.lane.b32.xlu0 %v665, 64
  %v667 = vpop.permute.xlu0 %666
  %v669 = vrot.slane %v179, 7
  %670 = vrot.lane.b32.xlu0 %v669, 96
  %v671 = vpop.permute.xlu0 %670
  %v673 = vrot.slane %v184, 1
  %674 = vrot.lane.b32.xlu0 %v673, 32
  %v675 = vpop.permute.xlu0 %674
  %v677 = vrot.slane %v184, 2
  %678 = vrot.lane.b32.xlu0 %v677, 64
  %v679 = vpop.permute.xlu0 %678
  %v681 = vrot.slane %v184, 3
  %682 = vrot.lane.b32.xlu0 %v681, 96
  %v683 = vpop.permute.xlu0 %682
  %v685 = vrot.slane %v184, 4
  %v687 = vrot.slane %v184, 5
  %688 = vrot.lane.b32.xlu0 %v687, 32
  %v689 = vpop.permute.xlu0 %688
  %v691 = vrot.slane %v184, 6
  %692 = vrot.lane.b32.xlu0 %v691, 64
  %v693 = vpop.permute.xlu0 %692
  %v695 = vrot.slane %v184, 7
  %696 = vrot.lane.b32.xlu0 %v695, 96
  %v697 = vpop.permute.xlu0 %696
  %v699 = vsel %vm340, %v179, %v649
  %v700 = vsel %vm99, %v699, %v653
  %v701 = vsel %vm349, %v700, %v657
  %v702 = vsel %vm340, %v659, %v663
  %v703 = vsel %vm99, %v702, %v667
  %v704 = vsel %vm349, %v703, %v671
  %v705 = vsel %vm340, %v184, %v675
  %v706 = vsel %vm99, %v705, %v679
  %v707 = vsel %vm349, %v706, %v683
  %v708 = vsel %vm340, %v685, %v689
  %v709 = vsel %vm99, %v708, %v693
  %v710 = vsel %vm349, %v709, %v697
  %v711 = vrot.slane %v189, 1
  %712 = vrot.lane.b32.xlu0 %v711, 32
  %v713 = vpop.permute.xlu0 %712
  %v715 = vrot.slane %v189, 2
  %716 = vrot.lane.b32.xlu0 %v715, 64
  %v717 = vpop.permute.xlu0 %716
  %v719 = vrot.slane %v189, 3
  %720 = vrot.lane.b32.xlu0 %v719, 96
  %v721 = vpop.permute.xlu0 %720
  %v723 = vrot.slane %v189, 4
  %v725 = vrot.slane %v189, 5
  %726 = vrot.lane.b32.xlu0 %v725, 32
  %v727 = vpop.permute.xlu0 %726
  %v729 = vrot.slane %v189, 6
  %730 = vrot.lane.b32.xlu0 %v729, 64
  %v731 = vpop.permute.xlu0 %730
  %v733 = vrot.slane %v189, 7
  %734 = vrot.lane.b32.xlu0 %v733, 96
  %v735 = vpop.permute.xlu0 %734
  %v737 = vrot.slane %v194, 1
  %738 = vrot.lane.b32.xlu0 %v737, 32
  %v739 = vpop.permute.xlu0 %738
  %v741 = vrot.slane %v194, 2
  %742 = vrot.lane.b32.xlu0 %v741, 64
  %v743 = vpop.permute.xlu0 %742
  %v745 = vrot.slane %v194, 3
  %746 = vrot.lane.b32.xlu0 %v745, 96
  %v747 = vpop.permute.xlu0 %746
  %v749 = vrot.slane %v194, 4
  %v751 = vrot.slane %v194, 5
  %752 = vrot.lane.b32.xlu0 %v751, 32
  %v753 = vpop.permute.xlu0 %752
  %v755 = vrot.slane %v194, 6
  %756 = vrot.lane.b32.xlu0 %v755, 64
  %v757 = vpop.permute.xlu0 %756
  %v759 = vrot.slane %v194, 7
  %760 = vrot.lane.b32.xlu0 %v759, 96
  %v761 = vpop.permute.xlu0 %760
  %v763 = vsel %vm340, %v189, %v713
  %v764 = vsel %vm99, %v763, %v717
  %v765 = vsel %vm349, %v764, %v721
  %v766 = vsel %vm340, %v723, %v727
  %v767 = vsel %vm99, %v766, %v731
  %v768 = vsel %vm349, %v767, %v735
  %v769 = vsel %vm340, %v194, %v739
  %v770 = vsel %vm99, %v769, %v743
  %v771 = vsel %vm349, %v770, %v747
  %v772 = vsel %vm340, %v749, %v753
  %v773 = vsel %vm99, %v772, %v757
  %v774 = vsel %vm349, %v773, %v761
  %v779 = vrot.slane %v765, 7
  %v780 = vrot.slane %v768, 7
  %v781 = vrot.slane %v771, 7
  %v782 = vrot.slane %v774, 7
  %v787 = vsel %vm498, %v701, %v779
  %v788 = vsel %vm498, %v704, %v780
  %v789 = vsel %vm498, %v707, %v781
  %v790 = vsel %vm498, %v710, %v782
  %v791 = vlaneseq
  %v792 = vshrl.u32 %v791, 7
  %v793 = vsub.s32 0, %v792
  %v794 = vrot.slane %v787, %v793
  %v795 = vlaneseq
  %v796 = vshrl.u32 %v795, 7
  %v797 = vsub.s32 0, %v796
  %v798 = vrot.slane %v788, %v797
  %v799 = vlaneseq
  %v800 = vshrl.u32 %v799, 7
  %v801 = vsub.s32 0, %v800
  %v802 = vrot.slane %v789, %v801
  %v803 = vlaneseq
  %v804 = vshrl.u32 %v803, 7
  %v805 = vsub.s32 0, %v804
  %v806 = vrot.slane %v790, %v805
  %v807 = vlaneseq
  %v808 = vshrl.u32 %v807, 7
  %v809 = vsub.s32 1, %v808
  %v810 = vrot.slane %v787, %v809
  %v811 = vlaneseq
  %v812 = vshrl.u32 %v811, 7
  %v813 = vsub.s32 1, %v812
  %v814 = vrot.slane %v788, %v813
  %v815 = vlaneseq
  %v816 = vshrl.u32 %v815, 7
  %v817 = vsub.s32 1, %v816
  %v818 = vrot.slane %v789, %v817
  %v819 = vlaneseq
  %v820 = vshrl.u32 %v819, 7
  %v821 = vsub.s32 1, %v820
  %v822 = vrot.slane %v790, %v821
  %v823 = vadd.f32 %v643, %v794
  %v824 = vadd.f32 %v643, %v798
  %v825 = vadd.f32 %v643, %v802
  %v826 = vadd.f32 %v643, %v806
  %v827 = vadd.f32 %v644, %v794
  %v828 = vadd.f32 %v644, %v798
  %v829 = vadd.f32 %v644, %v802
  %v830 = vadd.f32 %v644, %v806
  %v831 = vadd.f32 %v645, %v810
  %v832 = vadd.f32 %v645, %v814
  %v833 = vadd.f32 %v645, %v818
  %v834 = vadd.f32 %v645, %v822
  %v835 = vadd.f32 %v646, %v810
  %v836 = vadd.f32 %v646, %v814
  %v837 = vadd.f32 %v646, %v818
  %v838 = vadd.f32 %v646, %v822
  %vm839 = vcmp.gt.f32.partialorder %v823, 0.0
  %vm840 = vcmp.gt.f32.partialorder %v824, 0.0
  %vm841 = vcmp.gt.f32.partialorder %v825, 0.0
  %vm842 = vcmp.gt.f32.partialorder %v826, 0.0
  %vm843 = vcmp.gt.f32.partialorder %v827, 0.0
  %vm844 = vcmp.gt.f32.partialorder %v828, 0.0
  %vm845 = vcmp.gt.f32.partialorder %v829, 0.0
  %vm846 = vcmp.gt.f32.partialorder %v830, 0.0
  %vm847 = vcmp.gt.f32.partialorder %v831, 0.0
  %vm848 = vcmp.gt.f32.partialorder %v832, 0.0
  %vm849 = vcmp.gt.f32.partialorder %v833, 0.0
  %vm850 = vcmp.gt.f32.partialorder %v834, 0.0
  %vm851 = vcmp.gt.f32.partialorder %v835, 0.0
  %vm852 = vcmp.gt.f32.partialorder %v836, 0.0
  %vm853 = vcmp.gt.f32.partialorder %v837, 0.0
  %vm854 = vcmp.gt.f32.partialorder %v838, 0.0
  %v855 = vmul.f32 %v823, 0.33
  %v856 = vmul.f32 %v824, 0.33
  %v857 = vmul.f32 %v825, 0.33
  %v858 = vmul.f32 %v826, 0.33
  %v859 = vmul.f32 %v827, 0.33
  %v860 = vmul.f32 %v828, 0.33
  %v861 = vmul.f32 %v829, 0.33
  %v862 = vmul.f32 %v830, 0.33
  %v863 = vmul.f32 %v831, 0.33
  %v864 = vmul.f32 %v832, 0.33
  %v865 = vmul.f32 %v833, 0.33
  %v866 = vmul.f32 %v834, 0.33
  %v867 = vmul.f32 %v835, 0.33
  %v868 = vmul.f32 %v836, 0.33
  %v869 = vmul.f32 %v837, 0.33
  %v870 = vmul.f32 %v838, 0.33
  %v871 = vsel %vm839, %v823, %v855
  %v872 = vsel %vm840, %v824, %v856
  %v873 = vsel %vm841, %v825, %v857
  %v874 = vsel %vm842, %v826, %v858
  %v875 = vsel %vm843, %v827, %v859
  %v876 = vsel %vm844, %v828, %v860
  %v877 = vsel %vm845, %v829, %v861
  %v878 = vsel %vm846, %v830, %v862
  %v879 = vsel %vm847, %v831, %v863
  %v880 = vsel %vm848, %v832, %v864
  %v881 = vsel %vm849, %v833, %v865
  %v882 = vsel %vm850, %v834, %v866
  %v883 = vsel %vm851, %v835, %v867
  %v884 = vsel %vm852, %v836, %v868
  %v885 = vsel %vm853, %v837, %v869
  %v886 = vsel %vm854, %v838, %v870
  %v887 = vld [vmem:[%s6] sm:$0xff]
  %v888 = vld [vmem:[%s6 + $0x8] sm:$0xff]
  %v889 = vld [vmem:[%s6 + $0x10] sm:$0xff]
  %v890 = vld [vmem:[%s6 + $0x18] sm:$0xff]
  %v891 = vld [vmem:[%s6 + $0x20] sm:$0xff]
  %v892 = vld [vmem:[%s6 + $0x28] sm:$0xff]
  %v893 = vld [vmem:[%s6 + $0x30] sm:$0xff]
  %v894 = vld [vmem:[%s6 + $0x38] sm:$0xff]
  %v895 = vld [vmem:[%s6 + $0x40] sm:$0xff]
  %v896 = vld [vmem:[%s6 + $0x48] sm:$0xff]
  %v897 = vld [vmem:[%s6 + $0x50] sm:$0xff]
  %v898 = vld [vmem:[%s6 + $0x58] sm:$0xff]
  %v899 = vld [vmem:[%s6 + $0x60] sm:$0xff]
  %v900 = vld [vmem:[%s6 + $0x68] sm:$0xff]
  %v901 = vld [vmem:[%s6 + $0x70] sm:$0xff]
  %v902 = vld [vmem:[%s6 + $0x78] sm:$0xff]
  %v903 = vld [vmem:[%s6 + $0x80] sm:$0xff]
  %v904 = vld [vmem:[%s6 + $0x88] sm:$0xff]
  %v905 = vld [vmem:[%s6 + $0x90] sm:$0xff]
  %v906 = vld [vmem:[%s6 + $0x98] sm:$0xff]
  %v907 = vld [vmem:[%s6 + $0xa0] sm:$0xff]
  %v908 = vld [vmem:[%s6 + $0xa8] sm:$0xff]
  %v909 = vld [vmem:[%s6 + $0xb0] sm:$0xff]
  %v910 = vld [vmem:[%s6 + $0xb8] sm:$0xff]
  %v911 = vld [vmem:[%s6 + $0xc0] sm:$0xff]
  %v912 = vld [vmem:[%s6 + $0xc8] sm:$0xff]
  %v913 = vld [vmem:[%s6 + $0xd0] sm:$0xff]
  %v914 = vld [vmem:[%s6 + $0xd8] sm:$0xff]
  %v915 = vld [vmem:[%s6 + $0xe0] sm:$0xff]
  %v916 = vld [vmem:[%s6 + $0xe8] sm:$0xff]
  %v917 = vld [vmem:[%s6 + $0xf0] sm:$0xff]
  %v918 = vld [vmem:[%s6 + $0xf8] sm:$0xff]
  %v919 = vld [vmem:[%s6 + $0x100] sm:$0xff]
  %v920 = vld [vmem:[%s6 + $0x108] sm:$0xff]
  %v921 = vld [vmem:[%s6 + $0x110] sm:$0xff]
  %v922 = vld [vmem:[%s6 + $0x118] sm:$0xff]
  %v923 = vld [vmem:[%s6 + $0x120] sm:$0xff]
  %v924 = vld [vmem:[%s6 + $0x128] sm:$0xff]
  %v925 = vld [vmem:[%s6 + $0x130] sm:$0xff]
  %v926 = vld [vmem:[%s6 + $0x138] sm:$0xff]
  %v927 = vld [vmem:[%s6 + $0x140] sm:$0xff]
  %v928 = vld [vmem:[%s6 + $0x148] sm:$0xff]
  %v929 = vld [vmem:[%s6 + $0x150] sm:$0xff]
  %v930 = vld [vmem:[%s6 + $0x158] sm:$0xff]
  %v931 = vld [vmem:[%s6 + $0x160] sm:$0xff]
  %v932 = vld [vmem:[%s6 + $0x168] sm:$0xff]
  %v933 = vld [vmem:[%s6 + $0x170] sm:$0xff]
  %v934 = vld [vmem:[%s6 + $0x178] sm:$0xff]
  %v935 = vld [vmem:[%s6 + $0x180] sm:$0xff]
  %v936 = vld [vmem:[%s6 + $0x188] sm:$0xff]
  %v937 = vld [vmem:[%s6 + $0x190] sm:$0xff]
  %v938 = vld [vmem:[%s6 + $0x198] sm:$0xff]
  %v939 = vld [vmem:[%s6 + $0x1a0] sm:$0xff]
  %v940 = vld [vmem:[%s6 + $0x1a8] sm:$0xff]
  %v941 = vld [vmem:[%s6 + $0x1b0] sm:$0xff]
  %v942 = vld [vmem:[%s6 + $0x1b8] sm:$0xff]
  %v943 = vld [vmem:[%s6 + $0x1c0] sm:$0xff]
  %v944 = vld [vmem:[%s6 + $0x1c8] sm:$0xff]
  %v945 = vld [vmem:[%s6 + $0x1d0] sm:$0xff]
  %v946 = vld [vmem:[%s6 + $0x1d8] sm:$0xff]
  %v947 = vld [vmem:[%s6 + $0x1e0] sm:$0xff]
  %v948 = vld [vmem:[%s6 + $0x1e8] sm:$0xff]
  %v949 = vld [vmem:[%s6 + $0x1f0] sm:$0xff]
  %v950 = vld [vmem:[%s6 + $0x1f8] sm:$0xff]
  %v951 = vld [vmem:[%s7] sm:$0x1]
  %v952 = vld [vmem:[%s8] sm:$0xff]
  %v953 = vld [vmem:[%s8 + $0x8] sm:$0xff]
  %v954 = vld [vmem:[%s8 + $0x10] sm:$0xff]
  %v955 = vld [vmem:[%s8 + $0x18] sm:$0xff]
  %v956 = vld [vmem:[%s8 + $0x20] sm:$0xff]
  %v957 = vld [vmem:[%s8 + $0x28] sm:$0xff]
  %v958 = vld [vmem:[%s8 + $0x30] sm:$0xff]
  %v959 = vld [vmem:[%s8 + $0x38] sm:$0xff]
  %v960 = vld [vmem:[%s8 + $0x40] sm:$0xff]
  %v961 = vld [vmem:[%s8 + $0x48] sm:$0xff]
  %v962 = vld [vmem:[%s8 + $0x50] sm:$0xff]
  %v963 = vld [vmem:[%s8 + $0x58] sm:$0xff]
  %v964 = vld [vmem:[%s8 + $0x60] sm:$0xff]
  %v965 = vld [vmem:[%s8 + $0x68] sm:$0xff]
  %v966 = vld [vmem:[%s8 + $0x70] sm:$0xff]
  %v967 = vld [vmem:[%s8 + $0x78] sm:$0xff]
  %v968 = vld [vmem:[%s8 + $0x80] sm:$0xff]
  %v969 = vld [vmem:[%s8 + $0x88] sm:$0xff]
  %v970 = vld [vmem:[%s8 + $0x90] sm:$0xff]
  %v971 = vld [vmem:[%s8 + $0x98] sm:$0xff]
  %v972 = vld [vmem:[%s8 + $0xa0] sm:$0xff]
  %v973 = vld [vmem:[%s8 + $0xa8] sm:$0xff]
  %v974 = vld [vmem:[%s8 + $0xb0] sm:$0xff]
  %v975 = vld [vmem:[%s8 + $0xb8] sm:$0xff]
  %v976 = vld [vmem:[%s8 + $0xc0] sm:$0xff]
  %v977 = vld [vmem:[%s8 + $0xc8] sm:$0xff]
  %v978 = vld [vmem:[%s8 + $0xd0] sm:$0xff]
  %v979 = vld [vmem:[%s8 + $0xd8] sm:$0xff]
  %v980 = vld [vmem:[%s8 + $0xe0] sm:$0xff]
  %v981 = vld [vmem:[%s8 + $0xe8] sm:$0xff]
  %v982 = vld [vmem:[%s8 + $0xf0] sm:$0xff]
  %v983 = vld [vmem:[%s8 + $0xf8] sm:$0xff]
  %v984 = vld [vmem:[%s8 + $0x100] sm:$0xff]
  %v985 = vld [vmem:[%s8 + $0x108] sm:$0xff]
  %v986 = vld [vmem:[%s8 + $0x110] sm:$0xff]
  %v987 = vld [vmem:[%s8 + $0x118] sm:$0xff]
  %v988 = vld [vmem:[%s8 + $0x120] sm:$0xff]
  %v989 = vld [vmem:[%s8 + $0x128] sm:$0xff]
  %v990 = vld [vmem:[%s8 + $0x130] sm:$0xff]
  %v991 = vld [vmem:[%s8 + $0x138] sm:$0xff]
  %v992 = vld [vmem:[%s8 + $0x140] sm:$0xff]
  %v993 = vld [vmem:[%s8 + $0x148] sm:$0xff]
  %v994 = vld [vmem:[%s8 + $0x150] sm:$0xff]
  %v995 = vld [vmem:[%s8 + $0x158] sm:$0xff]
  %v996 = vld [vmem:[%s8 + $0x160] sm:$0xff]
  %v997 = vld [vmem:[%s8 + $0x168] sm:$0xff]
  %v998 = vld [vmem:[%s8 + $0x170] sm:$0xff]
  %v999 = vld [vmem:[%s8 + $0x178] sm:$0xff]
  %v1000 = vld [vmem:[%s8 + $0x180] sm:$0xff]
  %v1001 = vld [vmem:[%s8 + $0x188] sm:$0xff]
  %v1002 = vld [vmem:[%s8 + $0x190] sm:$0xff]
  %v1003 = vld [vmem:[%s8 + $0x198] sm:$0xff]
  %v1004 = vld [vmem:[%s8 + $0x1a0] sm:$0xff]
  %v1005 = vld [vmem:[%s8 + $0x1a8] sm:$0xff]
  %v1006 = vld [vmem:[%s8 + $0x1b0] sm:$0xff]
  %v1007 = vld [vmem:[%s8 + $0x1b8] sm:$0xff]
  %v1008 = vld [vmem:[%s8 + $0x1c0] sm:$0xff]
  %v1009 = vld [vmem:[%s8 + $0x1c8] sm:$0xff]
  %v1010 = vld [vmem:[%s8 + $0x1d0] sm:$0xff]
  %v1011 = vld [vmem:[%s8 + $0x1d8] sm:$0xff]
  %v1012 = vld [vmem:[%s8 + $0x1e0] sm:$0xff]
  %v1013 = vld [vmem:[%s8 + $0x1e8] sm:$0xff]
  %v1014 = vld [vmem:[%s8 + $0x1f0] sm:$0xff]
  %v1015 = vld [vmem:[%s8 + $0x1f8] sm:$0xff]
  %v1016 = vld [vmem:[%s9] sm:$0x1]
  %v1018 = vlaneseq
  %v1019 = vshrl.u32 %v1018, 7
  %v1020 = vsub.s32 0, %v1019
  %v1021 = vrot.slane %v951, %v1020
  %1023 = vmatprep.subr.mxu0 0.0
  %1024 = vmatpush1.msra.mxu0 %v902
  %1025 = vmatprep.subr.mxu0 0.0
  %1026 = vmatpush1.msra.mxu0 %v901
  %1027 = vmatprep.subr.mxu0 0.0
  %1028 = vmatpush1.msra.mxu0 %v900
  %1029 = vmatprep.subr.mxu0 0.0
  %1030 = vmatpush1.msra.mxu0 %v899
  %1031 = vmatprep.subr.mxu0 0.0
  %1032 = vmatpush1.msra.mxu0 %v898
  %1033 = vmatprep.subr.mxu0 0.0
  %1034 = vmatpush1.msra.mxu0 %v897
  %1035 = vmatprep.subr.mxu0 0.0
  %1036 = vmatpush1.msra.mxu0 %v896
  %1037 = vmatprep.subr.mxu0 0.0
  %1038 = vmatpush1.msra.mxu0 %v895
  %1039 = vmatprep.subr.mxu0 0.0
  %1040 = vmatpush1.msra.mxu0 %v894
  %1041 = vmatprep.subr.mxu0 0.0
  %1042 = vmatpush1.msra.mxu0 %v893
  %1043 = vmatprep.subr.mxu0 0.0
  %1044 = vmatpush1.msra.mxu0 %v892
  %1045 = vmatprep.subr.mxu0 0.0
  %1046 = vmatpush1.msra.mxu0 %v891
  %1047 = vmatprep.subr.mxu0 0.0
  %1048 = vmatpush1.msra.mxu0 %v890
  %1049 = vmatprep.subr.mxu0 0.0
  %1050 = vmatpush1.msra.mxu0 %v889
  %1051 = vmatprep.subr.mxu0 0.0
  %1052 = vmatpush1.msra.mxu0 %v888
  %1053 = vmatprep.subr.mxu0 0.0
  %1054 = vmatpush1.msra.mxu0 %v887
  %1055 = vmatprep.subr.mxu0 0.0
  %1056 = vmatpush2.msra.mxu0 %v918
  %1057 = vmatprep.subr.mxu0 0.0
  %1058 = vmatpush2.msra.mxu0 %v917
  %1059 = vmatprep.subr.mxu0 0.0
  %1060 = vmatpush2.msra.mxu0 %v916
  %1061 = vmatprep.subr.mxu0 0.0
  %1062 = vmatpush2.msra.mxu0 %v915
  %1063 = vmatprep.subr.mxu0 0.0
  %1064 = vmatpush2.msra.mxu0 %v914
  %1065 = vmatprep.subr.mxu0 0.0
  %1066 = vmatpush2.msra.mxu0 %v913
  %1067 = vmatprep.subr.mxu0 0.0
  %1068 = vmatpush2.msra.mxu0 %v912
  %1069 = vmatprep.subr.mxu0 0.0
  %1070 = vmatpush2.msra.mxu0 %v911
  %1071 = vmatprep.subr.mxu0 0.0
  %1072 = vmatpush2.msra.mxu0 %v910
  %1073 = vmatprep.subr.mxu0 0.0
  %1074 = vmatpush2.msra.mxu0 %v909
  %1075 = vmatprep.subr.mxu0 0.0
  %1076 = vmatpush2.msra.mxu0 %v908
  %1077 = vmatprep.subr.mxu0 0.0
  %1078 = vmatpush2.msra.mxu0 %v907
  %1079 = vmatprep.subr.mxu0 0.0
  %1080 = vmatpush2.msra.mxu0 %v906
  %1081 = vmatprep.subr.mxu0 0.0
  %1082 = vmatpush2.msra.mxu0 %v905
  %1083 = vmatprep.subr.mxu0 0.0
  %1084 = vmatpush2.msra.mxu0 %v904
  %1085 = vmatprep.subr.mxu0 0.0
  %1086 = vmatpush2.msra.mxu0 %v903
  %1087 = vmatprep.mubr.f32.mxu0 %v584
  %1088 = vmatmul.mubr.f32.gmra.mxu0 %v583
  %v1089 = vpop.f32.mrf.mxu0
  %v1090 = vadd.f32 %v1021, %v1089
  %v1091 = vpop.f32.mrf.mxu0
  %1092 = vmatprep.mubr.f32.mxu0 %v588
  %1093 = vmatmul.mubr.f32.gmra.mxu0 %v587
  %v1094 = vpop.f32.mrf.mxu0
  %v1095 = vadd.f32 %v1021, %v1094
  %v1096 = vpop.f32.mrf.mxu0
  %1097 = vmatprep.mubr.f32.mxu0 %v592
  %1098 = vmatmul.mubr.f32.gmra.mxu0 %v591
  %v1099 = vpop.f32.mrf.mxu0
  %v1100 = vadd.f32 %v1021, %v1099
  %v1101 = vpop.f32.mrf.mxu0
  %1102 = vmatprep.mubr.f32.mxu0 %v596
  %1103 = vmatmul.mubr.f32.gmra.mxu0 %v595
  %v1104 = vpop.f32.mrf.mxu0
  %v1105 = vadd.f32 %v1021, %v1104
  %v1106 = vpop.f32.mrf.mxu0
  %1107 = vdwg.mxu0
  %1108 = vmatprep.subr.mxu0 0.0
  %1109 = vmatpush1.msra.mxu0 %v934
  %1110 = vmatprep.subr.mxu0 0.0
  %1111 = vmatpush1.msra.mxu0 %v933
  %1112 = vmatprep.subr.mxu0 0.0
  %1113 = vmatpush1.msra.mxu0 %v932
  %1114 = vmatprep.subr.mxu0 0.0
  %1115 = vmatpush1.msra.mxu0 %v931
  %1116 = vmatprep.subr.mxu0 0.0
  %1117 = vmatpush1.msra.mxu0 %v930
  %1118 = vmatprep.subr.mxu0 0.0
  %1119 = vmatpush1.msra.mxu0 %v929
  %1120 = vmatprep.subr.mxu0 0.0
  %1121 = vmatpush1.msra.mxu0 %v928
  %1122 = vmatprep.subr.mxu0 0.0
  %1123 = vmatpush1.msra.mxu0 %v927
  %1124 = vmatprep.subr.mxu0 0.0
  %1125 = vmatpush1.msra.mxu0 %v926
  %1126 = vmatprep.subr.mxu0 0.0
  %1127 = vmatpush1.msra.mxu0 %v925
  %1128 = vmatprep.subr.mxu0 0.0
  %1129 = vmatpush1.msra.mxu0 %v924
  %1130 = vmatprep.subr.mxu0 0.0
  %1131 = vmatpush1.msra.mxu0 %v923
  %1132 = vmatprep.subr.mxu0 0.0
  %1133 = vmatpush1.msra.mxu0 %v922
  %1134 = vmatprep.subr.mxu0 0.0
  %1135 = vmatpush1.msra.mxu0 %v921
  %1136 = vmatprep.subr.mxu0 0.0
  %1137 = vmatpush1.msra.mxu0 %v920
  %1138 = vmatprep.subr.mxu0 0.0
  %1139 = vmatpush1.msra.mxu0 %v919
  %1140 = vmatprep.subr.mxu0 0.0
  %1141 = vmatpush2.msra.mxu0 %v950
  %1142 = vmatprep.subr.mxu0 0.0
  %1143 = vmatpush2.msra.mxu0 %v949
  %1144 = vmatprep.subr.mxu0 0.0
  %1145 = vmatpush2.msra.mxu0 %v948
  %1146 = vmatprep.subr.mxu0 0.0
  %1147 = vmatpush2.msra.mxu0 %v947
  %1148 = vmatprep.subr.mxu0 0.0
  %1149 = vmatpush2.msra.mxu0 %v946
  %1150 = vmatprep.subr.mxu0 0.0
  %1151 = vmatpush2.msra.mxu0 %v945
  %1152 = vmatprep.subr.mxu0 0.0
  %1153 = vmatpush2.msra.mxu0 %v944
  %1154 = vmatprep.subr.mxu0 0.0
  %1155 = vmatpush2.msra.mxu0 %v943
  %1156 = vmatprep.subr.mxu0 0.0
  %1157 = vmatpush2.msra.mxu0 %v942
  %1158 = vmatprep.subr.mxu0 0.0
  %1159 = vmatpush2.msra.mxu0 %v941
  %1160 = vmatprep.subr.mxu0 0.0
  %1161 = vmatpush2.msra.mxu0 %v940
  %1162 = vmatprep.subr.mxu0 0.0
  %1163 = vmatpush2.msra.mxu0 %v939
  %1164 = vmatprep.subr.mxu0 0.0
  %1165 = vmatpush2.msra.mxu0 %v938
  %1166 = vmatprep.subr.mxu0 0.0
  %1167 = vmatpush2.msra.mxu0 %v937
  %1168 = vmatprep.subr.mxu0 0.0
  %1169 = vmatpush2.msra.mxu0 %v936
  %1170 = vmatprep.subr.mxu0 0.0
  %1171 = vmatpush2.msra.mxu0 %v935
  %1172 = vmatprep.mubr.f32.mxu0 %v586
  %1173 = vmatmul.mubr.f32.gmra.mxu0 %v585
  %v1174 = vpop.f32.mrf.mxu0
  %v1175 = vadd.f32 %v1090, %v1174
  %v1176 = vpop.f32.mrf.mxu0
  %1177 = vmatprep.mubr.f32.mxu0 %v590
  %1178 = vmatmul.mubr.f32.gmra.mxu0 %v589
  %v1179 = vpop.f32.mrf.mxu0
  %v1180 = vadd.f32 %v1095, %v1179
  %v1181 = vpop.f32.mrf.mxu0
  %1182 = vmatprep.mubr.f32.mxu0 %v594
  %1183 = vmatmul.mubr.f32.gmra.mxu0 %v593
  %v1184 = vpop.f32.mrf.mxu0
  %v1185 = vadd.f32 %v1100, %v1184
  %v1186 = vpop.f32.mrf.mxu0
  %1187 = vmatprep.mubr.f32.mxu0 %v598
  %1188 = vmatmul.mubr.f32.gmra.mxu0 %v597
  %v1189 = vpop.f32.mrf.mxu0
  %v1190 = vadd.f32 %v1105, %v1189
  %v1191 = vpop.f32.mrf.mxu0
  %1192 = vdwg.mxu0
  %v1194 = vlaneseq
  %v1195 = vshrl.u32 %v1194, 7
  %v1196 = vsub.s32 0, %v1195
  %v1197 = vrot.slane %v1016, %v1196
  %1199 = vmatprep.subr.mxu0 0.0
  %1200 = vmatpush1.msra.mxu0 %v967
  %1201 = vmatprep.subr.mxu0 0.0
  %1202 = vmatpush1.msra.mxu0 %v966
  %1203 = vmatprep.subr.mxu0 0.0
  %1204 = vmatpush1.msra.mxu0 %v965
  %1205 = vmatprep.subr.mxu0 0.0
  %1206 = vmatpush1.msra.mxu0 %v964
  %1207 = vmatprep.subr.mxu0 0.0
  %1208 = vmatpush1.msra.mxu0 %v963
  %1209 = vmatprep.subr.mxu0 0.0
  %1210 = vmatpush1.msra.mxu0 %v962
  %1211 = vmatprep.subr.mxu0 0.0
  %1212 = vmatpush1.msra.mxu0 %v961
  %1213 = vmatprep.subr.mxu0 0.0
  %1214 = vmatpush1.msra.mxu0 %v960
  %1215 = vmatprep.subr.mxu0 0.0
  %1216 = vmatpush1.msra.mxu0 %v959
  %1217 = vmatprep.subr.mxu0 0.0
  %1218 = vmatpush1.msra.mxu0 %v958
  %1219 = vmatprep.subr.mxu0 0.0
  %1220 = vmatpush1.msra.mxu0 %v957
  %1221 = vmatprep.subr.mxu0 0.0
  %1222 = vmatpush1.msra.mxu0 %v956
  %1223 = vmatprep.subr.mxu0 0.0
  %1224 = vmatpush1.msra.mxu0 %v955
  %1225 = vmatprep.subr.mxu0 0.0
  %1226 = vmatpush1.msra.mxu0 %v954
  %1227 = vmatprep.subr.mxu0 0.0
  %1228 = vmatpush1.msra.mxu0 %v953
  %1229 = vmatprep.subr.mxu0 0.0
  %1230 = vmatpush1.msra.mxu0 %v952
  %1231 = vmatprep.subr.mxu0 0.0
  %1232 = vmatpush2.msra.mxu0 %v983
  %1233 = vmatprep.subr.mxu0 0.0
  %1234 = vmatpush2.msra.mxu0 %v982
  %1235 = vmatprep.subr.mxu0 0.0
  %1236 = vmatpush2.msra.mxu0 %v981
  %1237 = vmatprep.subr.mxu0 0.0
  %1238 = vmatpush2.msra.mxu0 %v980
  %1239 = vmatprep.subr.mxu0 0.0
  %1240 = vmatpush2.msra.mxu0 %v979
  %1241 = vmatprep.subr.mxu0 0.0
  %1242 = vmatpush2.msra.mxu0 %v978
  %1243 = vmatprep.subr.mxu0 0.0
  %1244 = vmatpush2.msra.mxu0 %v977
  %1245 = vmatprep.subr.mxu0 0.0
  %1246 = vmatpush2.msra.mxu0 %v976
  %1247 = vmatprep.subr.mxu0 0.0
  %1248 = vmatpush2.msra.mxu0 %v975
  %1249 = vmatprep.subr.mxu0 0.0
  %1250 = vmatpush2.msra.mxu0 %v974
  %1251 = vmatprep.subr.mxu0 0.0
  %1252 = vmatpush2.msra.mxu0 %v973
  %1253 = vmatprep.subr.mxu0 0.0
  %1254 = vmatpush2.msra.mxu0 %v972
  %1255 = vmatprep.subr.mxu0 0.0
  %1256 = vmatpush2.msra.mxu0 %v971
  %1257 = vmatprep.subr.mxu0 0.0
  %1258 = vmatpush2.msra.mxu0 %v970
  %1259 = vmatprep.subr.mxu0 0.0
  %1260 = vmatpush2.msra.mxu0 %v969
  %1261 = vmatprep.subr.mxu0 0.0
  %1262 = vmatpush2.msra.mxu0 %v968
  %1263 = vmatprep.mubr.f32.mxu0 %v872
  %1264 = vmatmul.mubr.f32.gmra.mxu0 %v871
  %v1265 = vpop.f32.mrf.mxu0
  %v1266 = vadd.f32 %v1197, %v1265
  %v1267 = vpop.f32.mrf.mxu0
  %1268 = vmatprep.mubr.f32.mxu0 %v876
  %1269 = vmatmul.mubr.f32.gmra.mxu0 %v875
  %v1270 = vpop.f32.mrf.mxu0
  %v1271 = vadd.f32 %v1197, %v1270
  %v1272 = vpop.f32.mrf.mxu0
  %1273 = vmatprep.mubr.f32.mxu0 %v880
  %1274 = vmatmul.mubr.f32.gmra.mxu0 %v879
  %v1275 = vpop.f32.mrf.mxu0
  %v1276 = vadd.f32 %v1197, %v1275
  %v1277 = vpop.f32.mrf.mxu0
  %1278 = vmatprep.mubr.f32.mxu0 %v884
  %1279 = vmatmul.mubr.f32.gmra.mxu0 %v883
  %v1280 = vpop.f32.mrf.mxu0
  %v1281 = vadd.f32 %v1197, %v1280
  %v1282 = vpop.f32.mrf.mxu0
  %1283 = vdwg.mxu0
  %1284 = vmatprep.subr.mxu0 0.0
  %1285 = vmatpush1.msra.mxu0 %v999
  %1286 = vmatprep.subr.mxu0 0.0
  %1287 = vmatpush1.msra.mxu0 %v998
  %1288 = vmatprep.subr.mxu0 0.0
  %1289 = vmatpush1.msra.mxu0 %v997
  %1290 = vmatprep.subr.mxu0 0.0
  %1291 = vmatpush1.msra.mxu0 %v996
  %1292 = vmatprep.subr.mxu0 0.0
  %1293 = vmatpush1.msra.mxu0 %v995
  %1294 = vmatprep.subr.mxu0 0.0
  %1295 = vmatpush1.msra.mxu0 %v994
  %1296 = vmatprep.subr.mxu0 0.0
  %1297 = vmatpush1.msra.mxu0 %v993
  %1298 = vmatprep.subr.mxu0 0.0
  %1299 = vmatpush1.msra.mxu0 %v992
  %1300 = vmatprep.subr.mxu0 0.0
  %1301 = vmatpush1.msra.mxu0 %v991
  %1302 = vmatprep.subr.mxu0 0.0
  %1303 = vmatpush1.msra.mxu0 %v990
  %1304 = vmatprep.subr.mxu0 0.0
  %1305 = vmatpush1.msra.mxu0 %v989
  %1306 = vmatprep.subr.mxu0 0.0
  %1307 = vmatpush1.msra.mxu0 %v988
  %1308 = vmatprep.subr.mxu0 0.0
  %1309 = vmatpush1.msra.mxu0 %v987
  %1310 = vmatprep.subr.mxu0 0.0
  %1311 = vmatpush1.msra.mxu0 %v986
  %1312 = vmatprep.subr.mxu0 0.0
  %1313 = vmatpush1.msra.mxu0 %v985
  %1314 = vmatprep.subr.mxu0 0.0
  %1315 = vmatpush1.msra.mxu0 %v984
  %1316 = vmatprep.subr.mxu0 0.0
  %1317 = vmatpush2.msra.mxu0 %v1015
  %1318 = vmatprep.subr.mxu0 0.0
  %1319 = vmatpush2.msra.mxu0 %v1014
  %1320 = vmatprep.subr.mxu0 0.0
  %1321 = vmatpush2.msra.mxu0 %v1013
  %1322 = vmatprep.subr.mxu0 0.0
  %1323 = vmatpush2.msra.mxu0 %v1012
  %1324 = vmatprep.subr.mxu0 0.0
  %1325 = vmatpush2.msra.mxu0 %v1011
  %1326 = vmatprep.subr.mxu0 0.0
  %1327 = vmatpush2.msra.mxu0 %v1010
  %1328 = vmatprep.subr.mxu0 0.0
  %1329 = vmatpush2.msra.mxu0 %v1009
  %1330 = vmatprep.subr.mxu0 0.0
  %1331 = vmatpush2.msra.mxu0 %v1008
  %1332 = vmatprep.subr.mxu0 0.0
  %1333 = vmatpush2.msra.mxu0 %v1007
  %1334 = vmatprep.subr.mxu0 0.0
  %1335 = vmatpush2.msra.mxu0 %v1006
  %1336 = vmatprep.subr.mxu0 0.0
  %1337 = vmatpush2.msra.mxu0 %v1005
  %1338 = vmatprep.subr.mxu0 0.0
  %1339 = vmatpush2.msra.mxu0 %v1004
  %1340 = vmatprep.subr.mxu0 0.0
  %1341 = vmatpush2.msra.mxu0 %v1003
  %1342 = vmatprep.subr.mxu0 0.0
  %1343 = vmatpush2.msra.mxu0 %v1002
  %1344 = vmatprep.subr.mxu0 0.0
  %1345 = vmatpush2.msra.mxu0 %v1001
  %1346 = vmatprep.subr.mxu0 0.0
  %1347 = vmatpush2.msra.mxu0 %v1000
  %1348 = vmatprep.mubr.f32.mxu0 %v874
  %1349 = vmatmul.mubr.f32.gmra.mxu0 %v873
  %v1350 = vpop.f32.mrf.mxu0
  %v1351 = vadd.f32 %v1266, %v1350
  %v1352 = vpop.f32.mrf.mxu0
  %1353 = vmatprep.mubr.f32.mxu0 %v878
  %1354 = vmatmul.mubr.f32.gmra.mxu0 %v877
  %v1355 = vpop.f32.mrf.mxu0
  %v1356 = vadd.f32 %v1271, %v1355
  %v1357 = vpop.f32.mrf.mxu0
  %1358 = vmatprep.mubr.f32.mxu0 %v882
  %1359 = vmatmul.mubr.f32.gmra.mxu0 %v881
  %v1360 = vpop.f32.mrf.mxu0
  %v1361 = vadd.f32 %v1276, %v1360
  %v1362 = vpop.f32.mrf.mxu0
  %1363 = vmatprep.mubr.f32.mxu0 %v886
  %1364 = vmatmul.mubr.f32.gmra.mxu0 %v885
  %v1365 = vpop.f32.mrf.mxu0
  %v1366 = vadd.f32 %v1281, %v1365
  %v1367 = vpop.f32.mrf.mxu0
  %1368 = vdwg.mxu0
  %1373 = vrot.lane.b32.xlu0 %v1175, 32
  %v1374 = vpop.permute.xlu0 %1373
  %1375 = vrot.lane.b32.xlu0 %v1180, 32
  %v1376 = vpop.permute.xlu0 %1375
  %1377 = vrot.lane.b32.xlu0 %v1185, 32
  %v1378 = vpop.permute.xlu0 %1377
  %1379 = vrot.lane.b32.xlu0 %v1190, 32
  %v1380 = vpop.permute.xlu0 %1379
  %1385 = vrot.lane.b32.xlu0 %v1175, 64
  %v1386 = vpop.permute.xlu0 %1385
  %1387 = vrot.lane.b32.xlu0 %v1180, 64
  %v1388 = vpop.permute.xlu0 %1387
  %1389 = vrot.lane.b32.xlu0 %v1185, 64
  %v1390 = vpop.permute.xlu0 %1389
  %1391 = vrot.lane.b32.xlu0 %v1190, 64
  %v1392 = vpop.permute.xlu0 %1391
  %1397 = vrot.lane.b32.xlu0 %v1175, 96
  %v1398 = vpop.permute.xlu0 %1397
  %1399 = vrot.lane.b32.xlu0 %v1180, 96
  %v1400 = vpop.permute.xlu0 %1399
  %1401 = vrot.lane.b32.xlu0 %v1185, 96
  %v1402 = vpop.permute.xlu0 %1401
  %1403 = vrot.lane.b32.xlu0 %v1190, 96
  %v1404 = vpop.permute.xlu0 %1403
  %v1409 = vsel %vm340, %v1175, %v1374
  %v1410 = vsel %vm340, %v1180, %v1376
  %v1411 = vsel %vm340, %v1185, %v1378
  %v1412 = vsel %vm340, %v1190, %v1380
  %v1413 = vsel %vm99, %v1409, %v1386
  %v1414 = vsel %vm99, %v1410, %v1388
  %v1415 = vsel %vm99, %v1411, %v1390
  %v1416 = vsel %vm99, %v1412, %v1392
  %v1417 = vsel %vm349, %v1413, %v1398
  %v1418 = vsel %vm349, %v1414, %v1400
  %v1419 = vsel %vm349, %v1415, %v1402
  %v1420 = vsel %vm349, %v1416, %v1404
  %v1422 = vrot.slane %v1351, 1
  %1423 = vrot.lane.b32.xlu0 %v1422, 32
  %v1424 = vpop.permute.xlu0 %1423
  %v1426 = vrot.slane %v1351, 2
  %1427 = vrot.lane.b32.xlu0 %v1426, 64
  %v1428 = vpop.permute.xlu0 %1427
  %v1430 = vrot.slane %v1351, 3
  %1431 = vrot.lane.b32.xlu0 %v1430, 96
  %v1432 = vpop.permute.xlu0 %1431
  %v1434 = vrot.slane %v1351, 4
  %v1436 = vrot.slane %v1351, 5
  %1437 = vrot.lane.b32.xlu0 %v1436, 32
  %v1438 = vpop.permute.xlu0 %1437
  %v1440 = vrot.slane %v1351, 6
  %1441 = vrot.lane.b32.xlu0 %v1440, 64
  %v1442 = vpop.permute.xlu0 %1441
  %v1444 = vrot.slane %v1351, 7
  %1445 = vrot.lane.b32.xlu0 %v1444, 96
  %v1446 = vpop.permute.xlu0 %1445
  %v1449 = vrot.slane %v1356, 1
  %1450 = vrot.lane.b32.xlu0 %v1449, 32
  %v1451 = vpop.permute.xlu0 %1450
  %v1453 = vrot.slane %v1356, 2
  %1454 = vrot.lane.b32.xlu0 %v1453, 64
  %v1455 = vpop.permute.xlu0 %1454
  %v1457 = vrot.slane %v1356, 3
  %1458 = vrot.lane.b32.xlu0 %v1457, 96
  %v1459 = vpop.permute.xlu0 %1458
  %v1461 = vrot.slane %v1356, 4
  %v1463 = vrot.slane %v1356, 5
  %1464 = vrot.lane.b32.xlu0 %v1463, 32
  %v1465 = vpop.permute.xlu0 %1464
  %v1467 = vrot.slane %v1356, 6
  %1468 = vrot.lane.b32.xlu0 %v1467, 64
  %v1469 = vpop.permute.xlu0 %1468
  %v1471 = vrot.slane %v1356, 7
  %1472 = vrot.lane.b32.xlu0 %v1471, 96
  %v1473 = vpop.permute.xlu0 %1472
  %v1475 = vsel %vm340, %v1351, %v1424
  %v1476 = vsel %vm99, %v1475, %v1428
  %v1477 = vsel %vm349, %v1476, %v1432
  %v1478 = vsel %vm340, %v1434, %v1438
  %v1479 = vsel %vm99, %v1478, %v1442
  %v1480 = vsel %vm349, %v1479, %v1446
  %v1481 = vsel %vm340, %v1356, %v1451
  %v1482 = vsel %vm99, %v1481, %v1455
  %v1483 = vsel %vm349, %v1482, %v1459
  %v1484 = vsel %vm340, %v1461, %v1465
  %v1485 = vsel %vm99, %v1484, %v1469
  %v1486 = vsel %vm349, %v1485, %v1473
  %v1488 = vrot.slane %v1361, 1
  %1489 = vrot.lane.b32.xlu0 %v1488, 32
  %v1490 = vpop.permute.xlu0 %1489
  %v1492 = vrot.slane %v1361, 2
  %1493 = vrot.lane.b32.xlu0 %v1492, 64
  %v1494 = vpop.permute.xlu0 %1493
  %v1496 = vrot.slane %v1361, 3
  %1497 = vrot.lane.b32.xlu0 %v1496, 96
  %v1498 = vpop.permute.xlu0 %1497
  %v1500 = vrot.slane %v1361, 4
  %v1502 = vrot.slane %v1361, 5
  %1503 = vrot.lane.b32.xlu0 %v1502, 32
  %v1504 = vpop.permute.xlu0 %1503
  %v1506 = vrot.slane %v1361, 6
  %1507 = vrot.lane.b32.xlu0 %v1506, 64
  %v1508 = vpop.permute.xlu0 %1507
  %v1510 = vrot.slane %v1361, 7
  %1511 = vrot.lane.b32.xlu0 %v1510, 96
  %v1512 = vpop.permute.xlu0 %1511
  %v1515 = vrot.slane %v1366, 1
  %1516 = vrot.lane.b32.xlu0 %v1515, 32
  %v1517 = vpop.permute.xlu0 %1516
  %v1519 = vrot.slane %v1366, 2
  %1520 = vrot.lane.b32.xlu0 %v1519, 64
  %v1521 = vpop.permute.xlu0 %1520
  %v1523 = vrot.slane %v1366, 3
  %1524 = vrot.lane.b32.xlu0 %v1523, 96
  %v1525 = vpop.permute.xlu0 %1524
  %v1527 = vrot.slane %v1366, 4
  %v1529 = vrot.slane %v1366, 5
  %1530 = vrot.lane.b32.xlu0 %v1529, 32
  %v1531 = vpop.permute.xlu0 %1530
  %v1533 = vrot.slane %v1366, 6
  %1534 = vrot.lane.b32.xlu0 %v1533, 64
  %v1535 = vpop.permute.xlu0 %1534
  %v1537 = vrot.slane %v1366, 7
  %1538 = vrot.lane.b32.xlu0 %v1537, 96
  %v1539 = vpop.permute.xlu0 %1538
  %v1541 = vsel %vm340, %v1361, %v1490
  %v1542 = vsel %vm99, %v1541, %v1494
  %v1543 = vsel %vm349, %v1542, %v1498
  %v1544 = vsel %vm340, %v1500, %v1504
  %v1545 = vsel %vm99, %v1544, %v1508
  %v1546 = vsel %vm349, %v1545, %v1512
  %v1547 = vsel %vm340, %v1366, %v1517
  %v1548 = vsel %vm99, %v1547, %v1521
  %v1549 = vsel %vm349, %v1548, %v1525
  %v1550 = vsel %vm340, %v1527, %v1531
  %v1551 = vsel %vm99, %v1550, %v1535
  %v1552 = vsel %vm349, %v1551, %v1539
  %v1557 = vrot.slane %v1543, 7
  %v1558 = vrot.slane %v1546, 7
  %v1559 = vrot.slane %v1549, 7
  %v1560 = vrot.slane %v1552, 7
  %v1565 = vsel %vm498, %v1477, %v1557
  %v1566 = vsel %vm498, %v1480, %v1558
  %v1567 = vsel %vm498, %v1483, %v1559
  %v1568 = vsel %vm498, %v1486, %v1560
  %v1569 = vlaneseq
  %v1570 = vshrl.u32 %v1569, 7
  %v1571 = vsub.s32 0, %v1570
  %v1572 = vrot.slane %v1565, %v1571
  %v1573 = vlaneseq
  %v1574 = vshrl.u32 %v1573, 7
  %v1575 = vsub.s32 0, %v1574
  %v1576 = vrot.slane %v1566, %v1575
  %v1577 = vlaneseq
  %v1578 = vshrl.u32 %v1577, 7
  %v1579 = vsub.s32 0, %v1578
  %v1580 = vrot.slane %v1567, %v1579
  %v1581 = vlaneseq
  %v1582 = vshrl.u32 %v1581, 7
  %v1583 = vsub.s32 0, %v1582
  %v1584 = vrot.slane %v1568, %v1583
  %v1585 = vlaneseq
  %v1586 = vshrl.u32 %v1585, 7
  %v1587 = vsub.s32 1, %v1586
  %v1588 = vrot.slane %v1565, %v1587
  %v1589 = vlaneseq
  %v1590 = vshrl.u32 %v1589, 7
  %v1591 = vsub.s32 1, %v1590
  %v1592 = vrot.slane %v1566, %v1591
  %v1593 = vlaneseq
  %v1594 = vshrl.u32 %v1593, 7
  %v1595 = vsub.s32 1, %v1594
  %v1596 = vrot.slane %v1567, %v1595
  %v1597 = vlaneseq
  %v1598 = vshrl.u32 %v1597, 7
  %v1599 = vsub.s32 1, %v1598
  %v1600 = vrot.slane %v1568, %v1599
  %v1601 = vadd.f32 %v1417, %v1572
  %v1602 = vadd.f32 %v1417, %v1576
  %v1603 = vadd.f32 %v1417, %v1580
  %v1604 = vadd.f32 %v1417, %v1584
  %v1605 = vadd.f32 %v1418, %v1572
  %v1606 = vadd.f32 %v1418, %v1576
  %v1607 = vadd.f32 %v1418, %v1580
  %v1608 = vadd.f32 %v1418, %v1584
  %v1609 = vadd.f32 %v1419, %v1588
  %v1610 = vadd.f32 %v1419, %v1592
  %v1611 = vadd.f32 %v1419, %v1596
  %v1612 = vadd.f32 %v1419, %v1600
  %v1613 = vadd.f32 %v1420, %v1588
  %v1614 = vadd.f32 %v1420, %v1592
  %v1615 = vadd.f32 %v1420, %v1596
  %v1616 = vadd.f32 %v1420, %v1600
  %vm1617 = vcmp.gt.f32.partialorder %v1601, 0.0
  %vm1618 = vcmp.gt.f32.partialorder %v1602, 0.0
  %vm1619 = vcmp.gt.f32.partialorder %v1603, 0.0
  %vm1620 = vcmp.gt.f32.partialorder %v1604, 0.0
  %vm1621 = vcmp.gt.f32.partialorder %v1605, 0.0
  %vm1622 = vcmp.gt.f32.partialorder %v1606, 0.0
  %vm1623 = vcmp.gt.f32.partialorder %v1607, 0.0
  %vm1624 = vcmp.gt.f32.partialorder %v1608, 0.0
  %vm1625 = vcmp.gt.f32.partialorder %v1609, 0.0
  %vm1626 = vcmp.gt.f32.partialorder %v1610, 0.0
  %vm1627 = vcmp.gt.f32.partialorder %v1611, 0.0
  %vm1628 = vcmp.gt.f32.partialorder %v1612, 0.0
  %vm1629 = vcmp.gt.f32.partialorder %v1613, 0.0
  %vm1630 = vcmp.gt.f32.partialorder %v1614, 0.0
  %vm1631 = vcmp.gt.f32.partialorder %v1615, 0.0
  %vm1632 = vcmp.gt.f32.partialorder %v1616, 0.0
  %v1633 = vmul.f32 %v1601, 0.33
  %v1634 = vmul.f32 %v1602, 0.33
  %v1635 = vmul.f32 %v1603, 0.33
  %v1636 = vmul.f32 %v1604, 0.33
  %v1637 = vmul.f32 %v1605, 0.33
  %v1638 = vmul.f32 %v1606, 0.33
  %v1639 = vmul.f32 %v1607, 0.33
  %v1640 = vmul.f32 %v1608, 0.33
  %v1641 = vmul.f32 %v1609, 0.33
  %v1642 = vmul.f32 %v1610, 0.33
  %v1643 = vmul.f32 %v1611, 0.33
  %v1644 = vmul.f32 %v1612, 0.33
  %v1645 = vmul.f32 %v1613, 0.33
  %v1646 = vmul.f32 %v1614, 0.33
  %v1647 = vmul.f32 %v1615, 0.33
  %v1648 = vmul.f32 %v1616, 0.33
  %v1649 = vsel %vm1617, %v1601, %v1633
  %v1650 = vsel %vm1618, %v1602, %v1634
  %v1651 = vsel %vm1619, %v1603, %v1635
  %v1652 = vsel %vm1620, %v1604, %v1636
  %v1653 = vsel %vm1621, %v1605, %v1637
  %v1654 = vsel %vm1622, %v1606, %v1638
  %v1655 = vsel %vm1623, %v1607, %v1639
  %v1656 = vsel %vm1624, %v1608, %v1640
  %v1657 = vsel %vm1625, %v1609, %v1641
  %v1658 = vsel %vm1626, %v1610, %v1642
  %v1659 = vsel %vm1627, %v1611, %v1643
  %v1660 = vsel %vm1628, %v1612, %v1644
  %v1661 = vsel %vm1629, %v1613, %v1645
  %v1662 = vsel %vm1630, %v1614, %v1646
  %v1663 = vsel %vm1631, %v1615, %v1647
  %v1664 = vsel %vm1632, %v1616, %v1648
  %v1665 = vld [vmem:[%s10] sm:$0xff]
  %v1666 = vld [vmem:[%s10 + $0x8] sm:$0xff]
  %v1667 = vld [vmem:[%s10 + $0x10] sm:$0xff]
  %v1668 = vld [vmem:[%s10 + $0x18] sm:$0xff]
  %v1669 = vld [vmem:[%s10 + $0x20] sm:$0xff]
  %v1670 = vld [vmem:[%s10 + $0x28] sm:$0xff]
  %v1671 = vld [vmem:[%s10 + $0x30] sm:$0xff]
  %v1672 = vld [vmem:[%s10 + $0x38] sm:$0xff]
  %v1673 = vld [vmem:[%s10 + $0x40] sm:$0xff]
  %v1674 = vld [vmem:[%s10 + $0x48] sm:$0xff]
  %v1675 = vld [vmem:[%s10 + $0x50] sm:$0xff]
  %v1676 = vld [vmem:[%s10 + $0x58] sm:$0xff]
  %v1677 = vld [vmem:[%s10 + $0x60] sm:$0xff]
  %v1678 = vld [vmem:[%s10 + $0x68] sm:$0xff]
  %v1679 = vld [vmem:[%s10 + $0x70] sm:$0xff]
  %v1680 = vld [vmem:[%s10 + $0x78] sm:$0xff]
  %v1681 = vld [vmem:[%s10 + $0x80] sm:$0xff]
  %v1682 = vld [vmem:[%s10 + $0x88] sm:$0xff]
  %v1683 = vld [vmem:[%s10 + $0x90] sm:$0xff]
  %v1684 = vld [vmem:[%s10 + $0x98] sm:$0xff]
  %v1685 = vld [vmem:[%s10 + $0xa0] sm:$0xff]
  %v1686 = vld [vmem:[%s10 + $0xa8] sm:$0xff]
  %v1687 = vld [vmem:[%s10 + $0xb0] sm:$0xff]
  %v1688 = vld [vmem:[%s10 + $0xb8] sm:$0xff]
  %v1689 = vld [vmem:[%s10 + $0xc0] sm:$0xff]
  %v1690 = vld [vmem:[%s10 + $0xc8] sm:$0xff]
  %v1691 = vld [vmem:[%s10 + $0xd0] sm:$0xff]
  %v1692 = vld [vmem:[%s10 + $0xd8] sm:$0xff]
  %v1693 = vld [vmem:[%s10 + $0xe0] sm:$0xff]
  %v1694 = vld [vmem:[%s10 + $0xe8] sm:$0xff]
  %v1695 = vld [vmem:[%s10 + $0xf0] sm:$0xff]
  %v1696 = vld [vmem:[%s10 + $0xf8] sm:$0xff]
  %v1697 = vld [vmem:[%s10 + $0x100] sm:$0xff]
  %v1698 = vld [vmem:[%s10 + $0x108] sm:$0xff]
  %v1699 = vld [vmem:[%s10 + $0x110] sm:$0xff]
  %v1700 = vld [vmem:[%s10 + $0x118] sm:$0xff]
  %v1701 = vld [vmem:[%s10 + $0x120] sm:$0xff]
  %v1702 = vld [vmem:[%s10 + $0x128] sm:$0xff]
  %v1703 = vld [vmem:[%s10 + $0x130] sm:$0xff]
  %v1704 = vld [vmem:[%s10 + $0x138] sm:$0xff]
  %v1705 = vld [vmem:[%s10 + $0x140] sm:$0xff]
  %v1706 = vld [vmem:[%s10 + $0x148] sm:$0xff]
  %v1707 = vld [vmem:[%s10 + $0x150] sm:$0xff]
  %v1708 = vld [vmem:[%s10 + $0x158] sm:$0xff]
  %v1709 = vld [vmem:[%s10 + $0x160] sm:$0xff]
  %v1710 = vld [vmem:[%s10 + $0x168] sm:$0xff]
  %v1711 = vld [vmem:[%s10 + $0x170] sm:$0xff]
  %v1712 = vld [vmem:[%s10 + $0x178] sm:$0xff]
  %v1713 = vld [vmem:[%s10 + $0x180] sm:$0xff]
  %v1714 = vld [vmem:[%s10 + $0x188] sm:$0xff]
  %v1715 = vld [vmem:[%s10 + $0x190] sm:$0xff]
  %v1716 = vld [vmem:[%s10 + $0x198] sm:$0xff]
  %v1717 = vld [vmem:[%s10 + $0x1a0] sm:$0xff]
  %v1718 = vld [vmem:[%s10 + $0x1a8] sm:$0xff]
  %v1719 = vld [vmem:[%s10 + $0x1b0] sm:$0xff]
  %v1720 = vld [vmem:[%s10 + $0x1b8] sm:$0xff]
  %v1721 = vld [vmem:[%s10 + $0x1c0] sm:$0xff]
  %v1722 = vld [vmem:[%s10 + $0x1c8] sm:$0xff]
  %v1723 = vld [vmem:[%s10 + $0x1d0] sm:$0xff]
  %v1724 = vld [vmem:[%s10 + $0x1d8] sm:$0xff]
  %v1725 = vld [vmem:[%s10 + $0x1e0] sm:$0xff]
  %v1726 = vld [vmem:[%s10 + $0x1e8] sm:$0xff]
  %v1727 = vld [vmem:[%s10 + $0x1f0] sm:$0xff]
  %v1728 = vld [vmem:[%s10 + $0x1f8] sm:$0xff]
  %v1729 = vld [vmem:[%s11] sm:$0x1]
  %v1730 = vld [vmem:[%s12] sm:$0xff]
  %v1731 = vld [vmem:[%s12 + $0x8] sm:$0xff]
  %v1732 = vld [vmem:[%s12 + $0x10] sm:$0xff]
  %v1733 = vld [vmem:[%s12 + $0x18] sm:$0xff]
  %v1734 = vld [vmem:[%s12 + $0x20] sm:$0xff]
  %v1735 = vld [vmem:[%s12 + $0x28] sm:$0xff]
  %v1736 = vld [vmem:[%s12 + $0x30] sm:$0xff]
  %v1737 = vld [vmem:[%s12 + $0x38] sm:$0xff]
  %v1738 = vld [vmem:[%s12 + $0x40] sm:$0xff]
  %v1739 = vld [vmem:[%s12 + $0x48] sm:$0xff]
  %v1740 = vld [vmem:[%s12 + $0x50] sm:$0xff]
  %v1741 = vld [vmem:[%s12 + $0x58] sm:$0xff]
  %v1742 = vld [vmem:[%s12 + $0x60] sm:$0xff]
  %v1743 = vld [vmem:[%s12 + $0x68] sm:$0xff]
  %v1744 = vld [vmem:[%s12 + $0x70] sm:$0xff]
  %v1745 = vld [vmem:[%s12 + $0x78] sm:$0xff]
  %v1746 = vld [vmem:[%s12 + $0x80] sm:$0xff]
  %v1747 = vld [vmem:[%s12 + $0x88] sm:$0xff]
  %v1748 = vld [vmem:[%s12 + $0x90] sm:$0xff]
  %v1749 = vld [vmem:[%s12 + $0x98] sm:$0xff]
  %v1750 = vld [vmem:[%s12 + $0xa0] sm:$0xff]
  %v1751 = vld [vmem:[%s12 + $0xa8] sm:$0xff]
  %v1752 = vld [vmem:[%s12 + $0xb0] sm:$0xff]
  %v1753 = vld [vmem:[%s12 + $0xb8] sm:$0xff]
  %v1754 = vld [vmem:[%s12 + $0xc0] sm:$0xff]
  %v1755 = vld [vmem:[%s12 + $0xc8] sm:$0xff]
  %v1756 = vld [vmem:[%s12 + $0xd0] sm:$0xff]
  %v1757 = vld [vmem:[%s12 + $0xd8] sm:$0xff]
  %v1758 = vld [vmem:[%s12 + $0xe0] sm:$0xff]
  %v1759 = vld [vmem:[%s12 + $0xe8] sm:$0xff]
  %v1760 = vld [vmem:[%s12 + $0xf0] sm:$0xff]
  %v1761 = vld [vmem:[%s12 + $0xf8] sm:$0xff]
  %v1762 = vld [vmem:[%s12 + $0x100] sm:$0xff]
  %v1763 = vld [vmem:[%s12 + $0x108] sm:$0xff]
  %v1764 = vld [vmem:[%s12 + $0x110] sm:$0xff]
  %v1765 = vld [vmem:[%s12 + $0x118] sm:$0xff]
  %v1766 = vld [vmem:[%s12 + $0x120] sm:$0xff]
  %v1767 = vld [vmem:[%s12 + $0x128] sm:$0xff]
  %v1768 = vld [vmem:[%s12 + $0x130] sm:$0xff]
  %v1769 = vld [vmem:[%s12 + $0x138] sm:$0xff]
  %v1770 = vld [vmem:[%s12 + $0x140] sm:$0xff]
  %v1771 = vld [vmem:[%s12 + $0x148] sm:$0xff]
  %v1772 = vld [vmem:[%s12 + $0x150] sm:$0xff]
  %v1773 = vld [vmem:[%s12 + $0x158] sm:$0xff]
  %v1774 = vld [vmem:[%s12 + $0x160] sm:$0xff]
  %v1775 = vld [vmem:[%s12 + $0x168] sm:$0xff]
  %v1776 = vld [vmem:[%s12 + $0x170] sm:$0xff]
  %v1777 = vld [vmem:[%s12 + $0x178] sm:$0xff]
  %v1778 = vld [vmem:[%s12 + $0x180] sm:$0xff]
  %v1779 = vld [vmem:[%s12 + $0x188] sm:$0xff]
  %v1780 = vld [vmem:[%s12 + $0x190] sm:$0xff]
  %v1781 = vld [vmem:[%s12 + $0x198] sm:$0xff]
  %v1782 = vld [vmem:[%s12 + $0x1a0] sm:$0xff]
  %v1783 = vld [vmem:[%s12 + $0x1a8] sm:$0xff]
  %v1784 = vld [vmem:[%s12 + $0x1b0] sm:$0xff]
  %v1785 = vld [vmem:[%s12 + $0x1b8] sm:$0xff]
  %v1786 = vld [vmem:[%s12 + $0x1c0] sm:$0xff]
  %v1787 = vld [vmem:[%s12 + $0x1c8] sm:$0xff]
  %v1788 = vld [vmem:[%s12 + $0x1d0] sm:$0xff]
  %v1789 = vld [vmem:[%s12 + $0x1d8] sm:$0xff]
  %v1790 = vld [vmem:[%s12 + $0x1e0] sm:$0xff]
  %v1791 = vld [vmem:[%s12 + $0x1e8] sm:$0xff]
  %v1792 = vld [vmem:[%s12 + $0x1f0] sm:$0xff]
  %v1793 = vld [vmem:[%s12 + $0x1f8] sm:$0xff]
  %v1794 = vld [vmem:[%s12 + $0x200] sm:$0xff]
  %v1795 = vld [vmem:[%s12 + $0x208] sm:$0xff]
  %v1796 = vld [vmem:[%s12 + $0x210] sm:$0xff]
  %v1797 = vld [vmem:[%s12 + $0x218] sm:$0xff]
  %v1798 = vld [vmem:[%s12 + $0x220] sm:$0xff]
  %v1799 = vld [vmem:[%s12 + $0x228] sm:$0xff]
  %v1800 = vld [vmem:[%s12 + $0x230] sm:$0xff]
  %v1801 = vld [vmem:[%s12 + $0x238] sm:$0xff]
  %v1802 = vld [vmem:[%s12 + $0x240] sm:$0xff]
  %v1803 = vld [vmem:[%s12 + $0x248] sm:$0xff]
  %v1804 = vld [vmem:[%s12 + $0x250] sm:$0xff]
  %v1805 = vld [vmem:[%s12 + $0x258] sm:$0xff]
  %v1806 = vld [vmem:[%s12 + $0x260] sm:$0xff]
  %v1807 = vld [vmem:[%s12 + $0x268] sm:$0xff]
  %v1808 = vld [vmem:[%s12 + $0x270] sm:$0xff]
  %v1809 = vld [vmem:[%s12 + $0x278] sm:$0xff]
  %v1810 = vld [vmem:[%s12 + $0x280] sm:$0xff]
  %v1811 = vld [vmem:[%s12 + $0x288] sm:$0xff]
  %v1812 = vld [vmem:[%s12 + $0x290] sm:$0xff]
  %v1813 = vld [vmem:[%s12 + $0x298] sm:$0xff]
  %v1814 = vld [vmem:[%s12 + $0x2a0] sm:$0xff]
  %v1815 = vld [vmem:[%s12 + $0x2a8] sm:$0xff]
  %v1816 = vld [vmem:[%s12 + $0x2b0] sm:$0xff]
  %v1817 = vld [vmem:[%s12 + $0x2b8] sm:$0xff]
  %v1818 = vld [vmem:[%s12 + $0x2c0] sm:$0xff]
  %v1819 = vld [vmem:[%s12 + $0x2c8] sm:$0xff]
  %v1820 = vld [vmem:[%s12 + $0x2d0] sm:$0xff]
  %v1821 = vld [vmem:[%s12 + $0x2d8] sm:$0xff]
  %v1822 = vld [vmem:[%s12 + $0x2e0] sm:$0xff]
  %v1823 = vld [vmem:[%s12 + $0x2e8] sm:$0xff]
  %v1824 = vld [vmem:[%s12 + $0x2f0] sm:$0xff]
  %v1825 = vld [vmem:[%s12 + $0x2f8] sm:$0xff]
  %v1826 = vld [vmem:[%s12 + $0x300] sm:$0xff]
  %v1827 = vld [vmem:[%s12 + $0x308] sm:$0xff]
  %v1828 = vld [vmem:[%s12 + $0x310] sm:$0xff]
  %v1829 = vld [vmem:[%s12 + $0x318] sm:$0xff]
  %v1830 = vld [vmem:[%s12 + $0x320] sm:$0xff]
  %v1831 = vld [vmem:[%s12 + $0x328] sm:$0xff]
  %v1832 = vld [vmem:[%s12 + $0x330] sm:$0xff]
  %v1833 = vld [vmem:[%s12 + $0x338] sm:$0xff]
  %v1834 = vld [vmem:[%s12 + $0x340] sm:$0xff]
  %v1835 = vld [vmem:[%s12 + $0x348] sm:$0xff]
  %v1836 = vld [vmem:[%s12 + $0x350] sm:$0xff]
  %v1837 = vld [vmem:[%s12 + $0x358] sm:$0xff]
  %v1838 = vld [vmem:[%s12 + $0x360] sm:$0xff]
  %v1839 = vld [vmem:[%s12 + $0x368] sm:$0xff]
  %v1840 = vld [vmem:[%s12 + $0x370] sm:$0xff]
  %v1841 = vld [vmem:[%s12 + $0x378] sm:$0xff]
  %v1842 = vld [vmem:[%s12 + $0x380] sm:$0xff]
  %v1843 = vld [vmem:[%s12 + $0x388] sm:$0xff]
  %v1844 = vld [vmem:[%s12 + $0x390] sm:$0xff]
  %v1845 = vld [vmem:[%s12 + $0x398] sm:$0xff]
  %v1846 = vld [vmem:[%s12 + $0x3a0] sm:$0xff]
  %v1847 = vld [vmem:[%s12 + $0x3a8] sm:$0xff]
  %v1848 = vld [vmem:[%s12 + $0x3b0] sm:$0xff]
  %v1849 = vld [vmem:[%s12 + $0x3b8] sm:$0xff]
  %v1850 = vld [vmem:[%s12 + $0x3c0] sm:$0xff]
  %v1851 = vld [vmem:[%s12 + $0x3c8] sm:$0xff]
  %v1852 = vld [vmem:[%s12 + $0x3d0] sm:$0xff]
  %v1853 = vld [vmem:[%s12 + $0x3d8] sm:$0xff]
  %v1854 = vld [vmem:[%s12 + $0x3e0] sm:$0xff]
  %v1855 = vld [vmem:[%s12 + $0x3e8] sm:$0xff]
  %v1856 = vld [vmem:[%s12 + $0x3f0] sm:$0xff]
  %v1857 = vld [vmem:[%s12 + $0x3f8] sm:$0xff]
  %v1858 = vld [vmem:[%s12 + $0x400] sm:$0xff]
  %v1859 = vld [vmem:[%s12 + $0x408] sm:$0xff]
  %v1860 = vld [vmem:[%s12 + $0x410] sm:$0xff]
  %v1861 = vld [vmem:[%s12 + $0x418] sm:$0xff]
  %v1862 = vld [vmem:[%s12 + $0x420] sm:$0xff]
  %v1863 = vld [vmem:[%s12 + $0x428] sm:$0xff]
  %v1864 = vld [vmem:[%s12 + $0x430] sm:$0xff]
  %v1865 = vld [vmem:[%s12 + $0x438] sm:$0xff]
  %v1866 = vld [vmem:[%s12 + $0x440] sm:$0xff]
  %v1867 = vld [vmem:[%s12 + $0x448] sm:$0xff]
  %v1868 = vld [vmem:[%s12 + $0x450] sm:$0xff]
  %v1869 = vld [vmem:[%s12 + $0x458] sm:$0xff]
  %v1870 = vld [vmem:[%s12 + $0x460] sm:$0xff]
  %v1871 = vld [vmem:[%s12 + $0x468] sm:$0xff]
  %v1872 = vld [vmem:[%s12 + $0x470] sm:$0xff]
  %v1873 = vld [vmem:[%s12 + $0x478] sm:$0xff]
  %v1874 = vld [vmem:[%s12 + $0x480] sm:$0xff]
  %v1875 = vld [vmem:[%s12 + $0x488] sm:$0xff]
  %v1876 = vld [vmem:[%s12 + $0x490] sm:$0xff]
  %v1877 = vld [vmem:[%s12 + $0x498] sm:$0xff]
  %v1878 = vld [vmem:[%s12 + $0x4a0] sm:$0xff]
  %v1879 = vld [vmem:[%s12 + $0x4a8] sm:$0xff]
  %v1880 = vld [vmem:[%s12 + $0x4b0] sm:$0xff]
  %v1881 = vld [vmem:[%s12 + $0x4b8] sm:$0xff]
  %v1882 = vld [vmem:[%s12 + $0x4c0] sm:$0xff]
  %v1883 = vld [vmem:[%s12 + $0x4c8] sm:$0xff]
  %v1884 = vld [vmem:[%s12 + $0x4d0] sm:$0xff]
  %v1885 = vld [vmem:[%s12 + $0x4d8] sm:$0xff]
  %v1886 = vld [vmem:[%s12 + $0x4e0] sm:$0xff]
  %v1887 = vld [vmem:[%s12 + $0x4e8] sm:$0xff]
  %v1888 = vld [vmem:[%s12 + $0x4f0] sm:$0xff]
  %v1889 = vld [vmem:[%s12 + $0x4f8] sm:$0xff]
  %v1890 = vld [vmem:[%s12 + $0x500] sm:$0xff]
  %v1891 = vld [vmem:[%s12 + $0x508] sm:$0xff]
  %v1892 = vld [vmem:[%s12 + $0x510] sm:$0xff]
  %v1893 = vld [vmem:[%s12 + $0x518] sm:$0xff]
  %v1894 = vld [vmem:[%s12 + $0x520] sm:$0xff]
  %v1895 = vld [vmem:[%s12 + $0x528] sm:$0xff]
  %v1896 = vld [vmem:[%s12 + $0x530] sm:$0xff]
  %v1897 = vld [vmem:[%s12 + $0x538] sm:$0xff]
  %v1898 = vld [vmem:[%s12 + $0x540] sm:$0xff]
  %v1899 = vld [vmem:[%s12 + $0x548] sm:$0xff]
  %v1900 = vld [vmem:[%s12 + $0x550] sm:$0xff]
  %v1901 = vld [vmem:[%s12 + $0x558] sm:$0xff]
  %v1902 = vld [vmem:[%s12 + $0x560] sm:$0xff]
  %v1903 = vld [vmem:[%s12 + $0x568] sm:$0xff]
  %v1904 = vld [vmem:[%s12 + $0x570] sm:$0xff]
  %v1905 = vld [vmem:[%s12 + $0x578] sm:$0xff]
  %v1906 = vld [vmem:[%s12 + $0x580] sm:$0xff]
  %v1907 = vld [vmem:[%s12 + $0x588] sm:$0xff]
  %v1908 = vld [vmem:[%s12 + $0x590] sm:$0xff]
  %v1909 = vld [vmem:[%s12 + $0x598] sm:$0xff]
  %v1910 = vld [vmem:[%s12 + $0x5a0] sm:$0xff]
  %v1911 = vld [vmem:[%s12 + $0x5a8] sm:$0xff]
  %v1912 = vld [vmem:[%s12 + $0x5b0] sm:$0xff]
  %v1913 = vld [vmem:[%s12 + $0x5b8] sm:$0xff]
  %v1914 = vld [vmem:[%s12 + $0x5c0] sm:$0xff]
  %v1915 = vld [vmem:[%s12 + $0x5c8] sm:$0xff]
  %v1916 = vld [vmem:[%s12 + $0x5d0] sm:$0xff]
  %v1917 = vld [vmem:[%s12 + $0x5d8] sm:$0xff]
  %v1918 = vld [vmem:[%s12 + $0x5e0] sm:$0xff]
  %v1919 = vld [vmem:[%s12 + $0x5e8] sm:$0xff]
  %v1920 = vld [vmem:[%s12 + $0x5f0] sm:$0xff]
  %v1921 = vld [vmem:[%s12 + $0x5f8] sm:$0xff]
  %v1922 = vld [vmem:[%s12 + $0x600] sm:$0xff]
  %v1923 = vld [vmem:[%s12 + $0x608] sm:$0xff]
  %v1924 = vld [vmem:[%s12 + $0x610] sm:$0xff]
  %v1925 = vld [vmem:[%s12 + $0x618] sm:$0xff]
  %v1926 = vld [vmem:[%s12 + $0x620] sm:$0xff]
  %v1927 = vld [vmem:[%s12 + $0x628] sm:$0xff]
  %v1928 = vld [vmem:[%s12 + $0x630] sm:$0xff]
  %v1929 = vld [vmem:[%s12 + $0x638] sm:$0xff]
  %v1930 = vld [vmem:[%s12 + $0x640] sm:$0xff]
  %v1931 = vld [vmem:[%s12 + $0x648] sm:$0xff]
  %v1932 = vld [vmem:[%s12 + $0x650] sm:$0xff]
  %v1933 = vld [vmem:[%s12 + $0x658] sm:$0xff]
  %v1934 = vld [vmem:[%s12 + $0x660] sm:$0xff]
  %v1935 = vld [vmem:[%s12 + $0x668] sm:$0xff]
  %v1936 = vld [vmem:[%s12 + $0x670] sm:$0xff]
  %v1937 = vld [vmem:[%s12 + $0x678] sm:$0xff]
  %v1938 = vld [vmem:[%s12 + $0x680] sm:$0xff]
  %v1939 = vld [vmem:[%s12 + $0x688] sm:$0xff]
  %v1940 = vld [vmem:[%s12 + $0x690] sm:$0xff]
  %v1941 = vld [vmem:[%s12 + $0x698] sm:$0xff]
  %v1942 = vld [vmem:[%s12 + $0x6a0] sm:$0xff]
  %v1943 = vld [vmem:[%s12 + $0x6a8] sm:$0xff]
  %v1944 = vld [vmem:[%s12 + $0x6b0] sm:$0xff]
  %v1945 = vld [vmem:[%s12 + $0x6b8] sm:$0xff]
  %v1946 = vld [vmem:[%s12 + $0x6c0] sm:$0xff]
  %v1947 = vld [vmem:[%s12 + $0x6c8] sm:$0xff]
  %v1948 = vld [vmem:[%s12 + $0x6d0] sm:$0xff]
  %v1949 = vld [vmem:[%s12 + $0x6d8] sm:$0xff]
  %v1950 = vld [vmem:[%s12 + $0x6e0] sm:$0xff]
  %v1951 = vld [vmem:[%s12 + $0x6e8] sm:$0xff]
  %v1952 = vld [vmem:[%s12 + $0x6f0] sm:$0xff]
  %v1953 = vld [vmem:[%s12 + $0x6f8] sm:$0xff]
  %v1954 = vld [vmem:[%s12 + $0x700] sm:$0xff]
  %v1955 = vld [vmem:[%s12 + $0x708] sm:$0xff]
  %v1956 = vld [vmem:[%s12 + $0x710] sm:$0xff]
  %v1957 = vld [vmem:[%s12 + $0x718] sm:$0xff]
  %v1958 = vld [vmem:[%s12 + $0x720] sm:$0xff]
  %v1959 = vld [vmem:[%s12 + $0x728] sm:$0xff]
  %v1960 = vld [vmem:[%s12 + $0x730] sm:$0xff]
  %v1961 = vld [vmem:[%s12 + $0x738] sm:$0xff]
  %v1962 = vld [vmem:[%s12 + $0x740] sm:$0xff]
  %v1963 = vld [vmem:[%s12 + $0x748] sm:$0xff]
  %v1964 = vld [vmem:[%s12 + $0x750] sm:$0xff]
  %v1965 = vld [vmem:[%s12 + $0x758] sm:$0xff]
  %v1966 = vld [vmem:[%s12 + $0x760] sm:$0xff]
  %v1967 = vld [vmem:[%s12 + $0x768] sm:$0xff]
  %v1968 = vld [vmem:[%s12 + $0x770] sm:$0xff]
  %v1969 = vld [vmem:[%s12 + $0x778] sm:$0xff]
  %v1970 = vld [vmem:[%s12 + $0x780] sm:$0xff]
  %v1971 = vld [vmem:[%s12 + $0x788] sm:$0xff]
  %v1972 = vld [vmem:[%s12 + $0x790] sm:$0xff]
  %v1973 = vld [vmem:[%s12 + $0x798] sm:$0xff]
  %v1974 = vld [vmem:[%s12 + $0x7a0] sm:$0xff]
  %v1975 = vld [vmem:[%s12 + $0x7a8] sm:$0xff]
  %v1976 = vld [vmem:[%s12 + $0x7b0] sm:$0xff]
  %v1977 = vld [vmem:[%s12 + $0x7b8] sm:$0xff]
  %v1978 = vld [vmem:[%s12 + $0x7c0] sm:$0xff]
  %v1979 = vld [vmem:[%s12 + $0x7c8] sm:$0xff]
  %v1980 = vld [vmem:[%s12 + $0x7d0] sm:$0xff]
  %v1981 = vld [vmem:[%s12 + $0x7d8] sm:$0xff]
  %v1982 = vld [vmem:[%s12 + $0x7e0] sm:$0xff]
  %v1983 = vld [vmem:[%s12 + $0x7e8] sm:$0xff]
  %v1984 = vld [vmem:[%s12 + $0x7f0] sm:$0xff]
  %v1985 = vld [vmem:[%s12 + $0x7f8] sm:$0xff]
  %v1986 = vld [vmem:[%s13] sm:$0x3]
  %v1987 = vld [vmem:[%s14] sm:$0xff]
  %v1988 = vld [vmem:[%s14 + $0x8] sm:$0xff]
  %v1989 = vld [vmem:[%s14 + $0x10] sm:$0xff]
  %v1990 = vld [vmem:[%s14 + $0x18] sm:$0xff]
  %v1991 = vld [vmem:[%s14 + $0x20] sm:$0xff]
  %v1992 = vld [vmem:[%s14 + $0x28] sm:$0xff]
  %v1993 = vld [vmem:[%s14 + $0x30] sm:$0xff]
  %v1994 = vld [vmem:[%s14 + $0x38] sm:$0xff]
  %v1995 = vld [vmem:[%s14 + $0x40] sm:$0xff]
  %v1996 = vld [vmem:[%s14 + $0x48] sm:$0xff]
  %v1997 = vld [vmem:[%s14 + $0x50] sm:$0xff]
  %v1998 = vld [vmem:[%s14 + $0x58] sm:$0xff]
  %v1999 = vld [vmem:[%s14 + $0x60] sm:$0xff]
  %v2000 = vld [vmem:[%s14 + $0x68] sm:$0xff]
  %v2001 = vld [vmem:[%s14 + $0x70] sm:$0xff]
  %v2002 = vld [vmem:[%s14 + $0x78] sm:$0xff]
  %v2003 = vld [vmem:[%s14 + $0x80] sm:$0xff]
  %v2004 = vld [vmem:[%s14 + $0x88] sm:$0xff]
  %v2005 = vld [vmem:[%s14 + $0x90] sm:$0xff]
  %v2006 = vld [vmem:[%s14 + $0x98] sm:$0xff]
  %v2007 = vld [vmem:[%s14 + $0xa0] sm:$0xff]
  %v2008 = vld [vmem:[%s14 + $0xa8] sm:$0xff]
  %v2009 = vld [vmem:[%s14 + $0xb0] sm:$0xff]
  %v2010 = vld [vmem:[%s14 + $0xb8] sm:$0xff]
  %v2011 = vld [vmem:[%s14 + $0xc0] sm:$0xff]
  %v2012 = vld [vmem:[%s14 + $0xc8] sm:$0xff]
  %v2013 = vld [vmem:[%s14 + $0xd0] sm:$0xff]
  %v2014 = vld [vmem:[%s14 + $0xd8] sm:$0xff]
  %v2015 = vld [vmem:[%s14 + $0xe0] sm:$0xff]
  %v2016 = vld [vmem:[%s14 + $0xe8] sm:$0xff]
  %v2017 = vld [vmem:[%s14 + $0xf0] sm:$0xff]
  %v2018 = vld [vmem:[%s14 + $0xf8] sm:$0xff]
  %v2019 = vld [vmem:[%s15] sm:$0x1]
  %v2020 = vld [vmem:[%s16] sm:$0xff]
  %v2021 = vld [vmem:[%s16 + $0x8] sm:$0xff]
  %v2022 = vld [vmem:[%s16 + $0x10] sm:$0xff]
  %v2023 = vld [vmem:[%s16 + $0x18] sm:$0xff]
  %v2024 = vld [vmem:[%s16 + $0x20] sm:$0xff]
  %v2025 = vld [vmem:[%s16 + $0x28] sm:$0xff]
  %v2026 = vld [vmem:[%s16 + $0x30] sm:$0xff]
  %v2027 = vld [vmem:[%s16 + $0x38] sm:$0xff]
  %v2028 = vld [vmem:[%s16 + $0x40] sm:$0xff]
  %v2029 = vld [vmem:[%s16 + $0x48] sm:$0xff]
  %v2030 = vld [vmem:[%s16 + $0x50] sm:$0xff]
  %v2031 = vld [vmem:[%s16 + $0x58] sm:$0xff]
  %v2032 = vld [vmem:[%s16 + $0x60] sm:$0xff]
  %v2033 = vld [vmem:[%s16 + $0x68] sm:$0xff]
  %v2034 = vld [vmem:[%s16 + $0x70] sm:$0xff]
  %v2035 = vld [vmem:[%s16 + $0x78] sm:$0xff]
  %v2036 = vld [vmem:[%s17] sm:$0x1]
  %v2037 = vld [vmem:[%s18] sm:$0xff]
  %v2038 = vld [vmem:[%s18 + $0x8] sm:$0xff]
  %v2039 = vld [vmem:[%s18 + $0x10] sm:$0xff]
  %v2040 = vld [vmem:[%s18 + $0x18] sm:$0x3f]
  %v2041 = vld [vmem:[#allocation2] sm:$0x1]
  %v2043 = vlaneseq
  %v2044 = vshrl.u32 %v2043, 7
  %v2045 = vsub.s32 0, %v2044
  %v2046 = vrot.slane %v1729, %v2045
  %2048 = vmatprep.subr.mxu0 0.0
  %2049 = vmatpush1.msra.mxu0 %v1680
  %2050 = vmatprep.subr.mxu0 0.0
  %2051 = vmatpush1.msra.mxu0 %v1679
  %2052 = vmatprep.subr.mxu0 0.0
  %2053 = vmatpush1.msra.mxu0 %v1678
  %2054 = vmatprep.subr.mxu0 0.0
  %2055 = vmatpush1.msra.mxu0 %v1677
  %2056 = vmatprep.subr.mxu0 0.0
  %2057 = vmatpush1.msra.mxu0 %v1676
  %2058 = vmatprep.subr.mxu0 0.0
  %2059 = vmatpush1.msra.mxu0 %v1675
  %2060 = vmatprep.subr.mxu0 0.0
  %2061 = vmatpush1.msra.mxu0 %v1674
  %2062 = vmatprep.subr.mxu0 0.0
  %2063 = vmatpush1.msra.mxu0 %v1673
  %2064 = vmatprep.subr.mxu0 0.0
  %2065 = vmatpush1.msra.mxu0 %v1672
  %2066 = vmatprep.subr.mxu0 0.0
  %2067 = vmatpush1.msra.mxu0 %v1671
  %2068 = vmatprep.subr.mxu0 0.0
  %2069 = vmatpush1.msra.mxu0 %v1670
  %2070 = vmatprep.subr.mxu0 0.0
  %2071 = vmatpush1.msra.mxu0 %v1669
  %2072 = vmatprep.subr.mxu0 0.0
  %2073 = vmatpush1.msra.mxu0 %v1668
  %2074 = vmatprep.subr.mxu0 0.0
  %2075 = vmatpush1.msra.mxu0 %v1667
  %2076 = vmatprep.subr.mxu0 0.0
  %2077 = vmatpush1.msra.mxu0 %v1666
  %2078 = vmatprep.subr.mxu0 0.0
  %2079 = vmatpush1.msra.mxu0 %v1665
  %2080 = vmatprep.subr.mxu0 0.0
  %2081 = vmatpush2.msra.mxu0 %v1696
  %2082 = vmatprep.subr.mxu0 0.0
  %2083 = vmatpush2.msra.mxu0 %v1695
  %2084 = vmatprep.subr.mxu0 0.0
  %2085 = vmatpush2.msra.mxu0 %v1694
  %2086 = vmatprep.subr.mxu0 0.0
  %2087 = vmatpush2.msra.mxu0 %v1693
  %2088 = vmatprep.subr.mxu0 0.0
  %2089 = vmatpush2.msra.mxu0 %v1692
  %2090 = vmatprep.subr.mxu0 0.0
  %2091 = vmatpush2.msra.mxu0 %v1691
  %2092 = vmatprep.subr.mxu0 0.0
  %2093 = vmatpush2.msra.mxu0 %v1690
  %2094 = vmatprep.subr.mxu0 0.0
  %2095 = vmatpush2.msra.mxu0 %v1689
  %2096 = vmatprep.subr.mxu0 0.0
  %2097 = vmatpush2.msra.mxu0 %v1688
  %2098 = vmatprep.subr.mxu0 0.0
  %2099 = vmatpush2.msra.mxu0 %v1687
  %2100 = vmatprep.subr.mxu0 0.0
  %2101 = vmatpush2.msra.mxu0 %v1686
  %2102 = vmatprep.subr.mxu0 0.0
  %2103 = vmatpush2.msra.mxu0 %v1685
  %2104 = vmatprep.subr.mxu0 0.0
  %2105 = vmatpush2.msra.mxu0 %v1684
  %2106 = vmatprep.subr.mxu0 0.0
  %2107 = vmatpush2.msra.mxu0 %v1683
  %2108 = vmatprep.subr.mxu0 0.0
  %2109 = vmatpush2.msra.mxu0 %v1682
  %2110 = vmatprep.subr.mxu0 0.0
  %2111 = vmatpush2.msra.mxu0 %v1681
  %2112 = vmatprep.mubr.f32.mxu0 %v1650
  %2113 = vmatmul.mubr.f32.gmra.mxu0 %v1649
  %v2114 = vpop.f32.mrf.mxu0
  %v2115 = vadd.f32 %v2046, %v2114
  %v2116 = vpop.f32.mrf.mxu0
  %2117 = vmatprep.mubr.f32.mxu0 %v1654
  %2118 = vmatmul.mubr.f32.gmra.mxu0 %v1653
  %v2119 = vpop.f32.mrf.mxu0
  %v2120 = vadd.f32 %v2046, %v2119
  %v2121 = vpop.f32.mrf.mxu0
  %2122 = vmatprep.mubr.f32.mxu0 %v1658
  %2123 = vmatmul.mubr.f32.gmra.mxu0 %v1657
  %v2124 = vpop.f32.mrf.mxu0
  %v2125 = vadd.f32 %v2046, %v2124
  %v2126 = vpop.f32.mrf.mxu0
  %2127 = vmatprep.mubr.f32.mxu0 %v1662
  %2128 = vmatmul.mubr.f32.gmra.mxu0 %v1661
  %v2129 = vpop.f32.mrf.mxu0
  %v2130 = vadd.f32 %v2046, %v2129
  %v2131 = vpop.f32.mrf.mxu0
  %2132 = vdwg.mxu0
  %2133 = vmatprep.subr.mxu0 0.0
  %2134 = vmatpush1.msra.mxu0 %v1712
  %2135 = vmatprep.subr.mxu0 0.0
  %2136 = vmatpush1.msra.mxu0 %v1711
  %2137 = vmatprep.subr.mxu0 0.0
  %2138 = vmatpush1.msra.mxu0 %v1710
  %2139 = vmatprep.subr.mxu0 0.0
  %2140 = vmatpush1.msra.mxu0 %v1709
  %2141 = vmatprep.subr.mxu0 0.0
  %2142 = vmatpush1.msra.mxu0 %v1708
  %2143 = vmatprep.subr.mxu0 0.0
  %2144 = vmatpush1.msra.mxu0 %v1707
  %2145 = vmatprep.subr.mxu0 0.0
  %2146 = vmatpush1.msra.mxu0 %v1706
  %2147 = vmatprep.subr.mxu0 0.0
  %2148 = vmatpush1.msra.mxu0 %v1705
  %2149 = vmatprep.subr.mxu0 0.0
  %2150 = vmatpush1.msra.mxu0 %v1704
  %2151 = vmatprep.subr.mxu0 0.0
  %2152 = vmatpush1.msra.mxu0 %v1703
  %2153 = vmatprep.subr.mxu0 0.0
  %2154 = vmatpush1.msra.mxu0 %v1702
  %2155 = vmatprep.subr.mxu0 0.0
  %2156 = vmatpush1.msra.mxu0 %v1701
  %2157 = vmatprep.subr.mxu0 0.0
  %2158 = vmatpush1.msra.mxu0 %v1700
  %2159 = vmatprep.subr.mxu0 0.0
  %2160 = vmatpush1.msra.mxu0 %v1699
  %2161 = vmatprep.subr.mxu0 0.0
  %2162 = vmatpush1.msra.mxu0 %v1698
  %2163 = vmatprep.subr.mxu0 0.0
  %2164 = vmatpush1.msra.mxu0 %v1697
  %2165 = vmatprep.subr.mxu0 0.0
  %2166 = vmatpush2.msra.mxu0 %v1728
  %2167 = vmatprep.subr.mxu0 0.0
  %2168 = vmatpush2.msra.mxu0 %v1727
  %2169 = vmatprep.subr.mxu0 0.0
  %2170 = vmatpush2.msra.mxu0 %v1726
  %2171 = vmatprep.subr.mxu0 0.0
  %2172 = vmatpush2.msra.mxu0 %v1725
  %2173 = vmatprep.subr.mxu0 0.0
  %2174 = vmatpush2.msra.mxu0 %v1724
  %2175 = vmatprep.subr.mxu0 0.0
  %2176 = vmatpush2.msra.mxu0 %v1723
  %2177 = vmatprep.subr.mxu0 0.0
  %2178 = vmatpush2.msra.mxu0 %v1722
  %2179 = vmatprep.subr.mxu0 0.0
  %2180 = vmatpush2.msra.mxu0 %v1721
  %2181 = vmatprep.subr.mxu0 0.0
  %2182 = vmatpush2.msra.mxu0 %v1720
  %2183 = vmatprep.subr.mxu0 0.0
  %2184 = vmatpush2.msra.mxu0 %v1719
  %2185 = vmatprep.subr.mxu0 0.0
  %2186 = vmatpush2.msra.mxu0 %v1718
  %2187 = vmatprep.subr.mxu0 0.0
  %2188 = vmatpush2.msra.mxu0 %v1717
  %2189 = vmatprep.subr.mxu0 0.0
  %2190 = vmatpush2.msra.mxu0 %v1716
  %2191 = vmatprep.subr.mxu0 0.0
  %2192 = vmatpush2.msra.mxu0 %v1715
  %2193 = vmatprep.subr.mxu0 0.0
  %2194 = vmatpush2.msra.mxu0 %v1714
  %2195 = vmatprep.subr.mxu0 0.0
  %2196 = vmatpush2.msra.mxu0 %v1713
  %2197 = vmatprep.mubr.f32.mxu0 %v1652
  %2198 = vmatmul.mubr.f32.gmra.mxu0 %v1651
  %v2199 = vpop.f32.mrf.mxu0
  %v2200 = vadd.f32 %v2115, %v2199
  %v2201 = vpop.f32.mrf.mxu0
  %2202 = vmatprep.mubr.f32.mxu0 %v1656
  %2203 = vmatmul.mubr.f32.gmra.mxu0 %v1655
  %v2204 = vpop.f32.mrf.mxu0
  %v2205 = vadd.f32 %v2120, %v2204
  %v2206 = vpop.f32.mrf.mxu0
  %2207 = vmatprep.mubr.f32.mxu0 %v1660
  %2208 = vmatmul.mubr.f32.gmra.mxu0 %v1659
  %v2209 = vpop.f32.mrf.mxu0
  %v2210 = vadd.f32 %v2125, %v2209
  %v2211 = vpop.f32.mrf.mxu0
  %2212 = vmatprep.mubr.f32.mxu0 %v1664
  %2213 = vmatmul.mubr.f32.gmra.mxu0 %v1663
  %v2214 = vpop.f32.mrf.mxu0
  %v2215 = vadd.f32 %v2130, %v2214
  %v2216 = vpop.f32.mrf.mxu0
  %2217 = vdwg.mxu0
  %vm2218 = vcmp.gt.f32.partialorder %v2200, 0.0
  %vm2219 = vcmp.gt.f32.partialorder %v2205, 0.0
  %vm2220 = vcmp.gt.f32.partialorder %v2210, 0.0
  %vm2221 = vcmp.gt.f32.partialorder %v2215, 0.0
  %v2222 = vmul.f32 %v2200, 0.33
  %v2223 = vmul.f32 %v2205, 0.33
  %v2224 = vmul.f32 %v2210, 0.33
  %v2225 = vmul.f32 %v2215, 0.33
  %v2226 = vsel %vm2218, %v2200, %v2222
  %v2227 = vsel %vm2219, %v2205, %v2223
  %v2228 = vsel %vm2220, %v2210, %v2224
  %v2229 = vsel %vm2221, %v2215, %v2225
  %v2231 = vrot.slane %v2226, 1
  %2232 = vrot.lane.b32.xlu0 %v2231, 64
  %v2233 = vpop.permute.xlu0 %2232
  %v2235 = vrot.slane %v2226, 2
  %v2237 = vrot.slane %v2226, 3
  %2238 = vrot.lane.b32.xlu0 %v2237, 64
  %v2239 = vpop.permute.xlu0 %2238
  %v2241 = vrot.slane %v2226, 4
  %v2243 = vrot.slane %v2226, 5
  %2244 = vrot.lane.b32.xlu0 %v2243, 64
  %v2245 = vpop.permute.xlu0 %2244
  %v2247 = vrot.slane %v2226, 6
  %v2249 = vrot.slane %v2226, 7
  %2250 = vrot.lane.b32.xlu0 %v2249, 64
  %v2251 = vpop.permute.xlu0 %2250
  %v2254 = vrot.slane %v2227, 1
  %2255 = vrot.lane.b32.xlu0 %v2254, 64
  %v2256 = vpop.permute.xlu0 %2255
  %v2258 = vrot.slane %v2227, 2
  %v2260 = vrot.slane %v2227, 3
  %2261 = vrot.lane.b32.xlu0 %v2260, 64
  %v2262 = vpop.permute.xlu0 %2261
  %v2264 = vrot.slane %v2227, 4
  %v2266 = vrot.slane %v2227, 5
  %2267 = vrot.lane.b32.xlu0 %v2266, 64
  %v2268 = vpop.permute.xlu0 %2267
  %v2270 = vrot.slane %v2227, 6
  %v2272 = vrot.slane %v2227, 7
  %2273 = vrot.lane.b32.xlu0 %v2272, 64
  %v2274 = vpop.permute.xlu0 %2273
  %v2276 = vsel %vm99, %v2226, %v2233
  %v2277 = vsel %vm99, %v2235, %v2239
  %v2278 = vsel %vm99, %v2241, %v2245
  %v2279 = vsel %vm99, %v2247, %v2251
  %v2280 = vsel %vm99, %v2227, %v2256
  %v2281 = vsel %vm99, %v2258, %v2262
  %v2282 = vsel %vm99, %v2264, %v2268
  %v2283 = vsel %vm99, %v2270, %v2274
  %v2285 = vrot.slane %v2228, 1
  %2286 = vrot.lane.b32.xlu0 %v2285, 64
  %v2287 = vpop.permute.xlu0 %2286
  %v2289 = vrot.slane %v2228, 2
  %v2291 = vrot.slane %v2228, 3
  %2292 = vrot.lane.b32.xlu0 %v2291, 64
  %v2293 = vpop.permute.xlu0 %2292
  %v2295 = vrot.slane %v2228, 4
  %v2297 = vrot.slane %v2228, 5
  %2298 = vrot.lane.b32.xlu0 %v2297, 64
  %v2299 = vpop.permute.xlu0 %2298
  %v2301 = vrot.slane %v2228, 6
  %v2303 = vrot.slane %v2228, 7
  %2304 = vrot.lane.b32.xlu0 %v2303, 64
  %v2305 = vpop.permute.xlu0 %2304
  %v2308 = vrot.slane %v2229, 1
  %2309 = vrot.lane.b32.xlu0 %v2308, 64
  %v2310 = vpop.permute.xlu0 %2309
  %v2312 = vrot.slane %v2229, 2
  %v2314 = vrot.slane %v2229, 3
  %2315 = vrot.lane.b32.xlu0 %v2314, 64
  %v2316 = vpop.permute.xlu0 %2315
  %v2318 = vrot.slane %v2229, 4
  %v2320 = vrot.slane %v2229, 5
  %2321 = vrot.lane.b32.xlu0 %v2320, 64
  %v2322 = vpop.permute.xlu0 %2321
  %v2324 = vrot.slane %v2229, 6
  %v2326 = vrot.slane %v2229, 7
  %2327 = vrot.lane.b32.xlu0 %v2326, 64
  %v2328 = vpop.permute.xlu0 %2327
  %v2330 = vsel %vm99, %v2228, %v2287
  %v2331 = vsel %vm99, %v2289, %v2293
  %v2332 = vsel %vm99, %v2295, %v2299
  %v2333 = vsel %vm99, %v2301, %v2305
  %v2334 = vsel %vm99, %v2229, %v2310
  %v2335 = vsel %vm99, %v2312, %v2316
  %v2336 = vsel %vm99, %v2318, %v2322
  %v2337 = vsel %vm99, %v2324, %v2328
  %v2346 = vrot.slane %v2330, 7
  %v2347 = vrot.slane %v2331, 7
  %v2348 = vrot.slane %v2332, 7
  %v2349 = vrot.slane %v2333, 7
  %v2350 = vrot.slane %v2334, 7
  %v2351 = vrot.slane %v2335, 7
  %v2352 = vrot.slane %v2336, 7
  %v2353 = vrot.slane %v2337, 7
  %v2362 = vsel %vm498, %v2276, %v2346
  %v2363 = vsel %vm498, %v2277, %v2347
  %v2364 = vsel %vm498, %v2278, %v2348
  %v2365 = vsel %vm498, %v2279, %v2349
  %v2366 = vsel %vm498, %v2280, %v2350
  %v2367 = vsel %vm498, %v2281, %v2351
  %v2368 = vsel %vm498, %v2282, %v2352
  %v2369 = vsel %vm498, %v2283, %v2353
  %v2371 = vlaneseq
  %v2372 = vshrl.u32 %v2371, 7
  %v2373 = vsub.s32 0, %v2372
  %v2374 = vrot.slane %v1986, %v2373
  %v2375 = vlaneseq
  %v2376 = vshrl.u32 %v2375, 7
  %v2377 = vsub.s32 1, %v2376
  %v2378 = vrot.slane %v1986, %v2377
  %2381 = vmatprep.subr.mxu0 %v1761
  %2382 = vmatpush1.msra.mxu0 %v1760
  %2383 = vmatprep.subr.mxu0 %v1759
  %2384 = vmatpush1.msra.mxu0 %v1758
  %2385 = vmatprep.subr.mxu0 %v1757
  %2386 = vmatpush1.msra.mxu0 %v1756
  %2387 = vmatprep.subr.mxu0 %v1755
  %2388 = vmatpush1.msra.mxu0 %v1754
  %2389 = vmatprep.subr.mxu0 %v1753
  %2390 = vmatpush1.msra.mxu0 %v1752
  %2391 = vmatprep.subr.mxu0 %v1751
  %2392 = vmatpush1.msra.mxu0 %v1750
  %2393 = vmatprep.subr.mxu0 %v1749
  %2394 = vmatpush1.msra.mxu0 %v1748
  %2395 = vmatprep.subr.mxu0 %v1747
  %2396 = vmatpush1.msra.mxu0 %v1746
  %2397 = vmatprep.subr.mxu0 %v1745
  %2398 = vmatpush1.msra.mxu0 %v1744
  %2399 = vmatprep.subr.mxu0 %v1743
  %2400 = vmatpush1.msra.mxu0 %v1742
  %2401 = vmatprep.subr.mxu0 %v1741
  %2402 = vmatpush1.msra.mxu0 %v1740
  %2403 = vmatprep.subr.mxu0 %v1739
  %2404 = vmatpush1.msra.mxu0 %v1738
  %2405 = vmatprep.subr.mxu0 %v1737
  %2406 = vmatpush1.msra.mxu0 %v1736
  %2407 = vmatprep.subr.mxu0 %v1735
  %2408 = vmatpush1.msra.mxu0 %v1734
  %2409 = vmatprep.subr.mxu0 %v1733
  %2410 = vmatpush1.msra.mxu0 %v1732
  %2411 = vmatprep.subr.mxu0 %v1731
  %2412 = vmatpush1.msra.mxu0 %v1730
  %2413 = vmatprep.subr.mxu0 %v1793
  %2414 = vmatpush2.msra.mxu0 %v1792
  %2415 = vmatprep.subr.mxu0 %v1791
  %2416 = vmatpush2.msra.mxu0 %v1790
  %2417 = vmatprep.subr.mxu0 %v1789
  %2418 = vmatpush2.msra.mxu0 %v1788
  %2419 = vmatprep.subr.mxu0 %v1787
  %2420 = vmatpush2.msra.mxu0 %v1786
  %2421 = vmatprep.subr.mxu0 %v1785
  %2422 = vmatpush2.msra.mxu0 %v1784
  %2423 = vmatprep.subr.mxu0 %v1783
  %2424 = vmatpush2.msra.mxu0 %v1782
  %2425 = vmatprep.subr.mxu0 %v1781
  %2426 = vmatpush2.msra.mxu0 %v1780
  %2427 = vmatprep.subr.mxu0 %v1779
  %2428 = vmatpush2.msra.mxu0 %v1778
  %2429 = vmatprep.subr.mxu0 %v1777
  %2430 = vmatpush2.msra.mxu0 %v1776
  %2431 = vmatprep.subr.mxu0 %v1775
  %2432 = vmatpush2.msra.mxu0 %v1774
  %2433 = vmatprep.subr.mxu0 %v1773
  %2434 = vmatpush2.msra.mxu0 %v1772
  %2435 = vmatprep.subr.mxu0 %v1771
  %2436 = vmatpush2.msra.mxu0 %v1770
  %2437 = vmatprep.subr.mxu0 %v1769
  %2438 = vmatpush2.msra.mxu0 %v1768
  %2439 = vmatprep.subr.mxu0 %v1767
  %2440 = vmatpush2.msra.mxu0 %v1766
  %2441 = vmatprep.subr.mxu0 %v1765
  %2442 = vmatpush2.msra.mxu0 %v1764
  %2443 = vmatprep.subr.mxu0 %v1763
  %2444 = vmatpush2.msra.mxu0 %v1762
  %2445 = vmatprep.mubr.f32.mxu0 %v2363
  %2446 = vmatmul.mubr.f32.gmra.mxu0 %v2362
  %v2447 = vpop.f32.mrf.mxu0
  %v2448 = vadd.f32 %v2374, %v2447
  %v2449 = vpop.f32.mrf.mxu0
  %v2450 = vadd.f32 %v2378, %v2449
  %2451 = vdwg.mxu0
  %2452 = vmatprep.subr.mxu0 %v1825
  %2453 = vmatpush1.msra.mxu0 %v1824
  %2454 = vmatprep.subr.mxu0 %v1823
  %2455 = vmatpush1.msra.mxu0 %v1822
  %2456 = vmatprep.subr.mxu0 %v1821
  %2457 = vmatpush1.msra.mxu0 %v1820
  %2458 = vmatprep.subr.mxu0 %v1819
  %2459 = vmatpush1.msra.mxu0 %v1818
  %2460 = vmatprep.subr.mxu0 %v1817
  %2461 = vmatpush1.msra.mxu0 %v1816
  %2462 = vmatprep.subr.mxu0 %v1815
  %2463 = vmatpush1.msra.mxu0 %v1814
  %2464 = vmatprep.subr.mxu0 %v1813
  %2465 = vmatpush1.msra.mxu0 %v1812
  %2466 = vmatprep.subr.mxu0 %v1811
  %2467 = vmatpush1.msra.mxu0 %v1810
  %2468 = vmatprep.subr.mxu0 %v1809
  %2469 = vmatpush1.msra.mxu0 %v1808
  %2470 = vmatprep.subr.mxu0 %v1807
  %2471 = vmatpush1.msra.mxu0 %v1806
  %2472 = vmatprep.subr.mxu0 %v1805
  %2473 = vmatpush1.msra.mxu0 %v1804
  %2474 = vmatprep.subr.mxu0 %v1803
  %2475 = vmatpush1.msra.mxu0 %v1802
  %2476 = vmatprep.subr.mxu0 %v1801
  %2477 = vmatpush1.msra.mxu0 %v1800
  %2478 = vmatprep.subr.mxu0 %v1799
  %2479 = vmatpush1.msra.mxu0 %v1798
  %2480 = vmatprep.subr.mxu0 %v1797
  %2481 = vmatpush1.msra.mxu0 %v1796
  %2482 = vmatprep.subr.mxu0 %v1795
  %2483 = vmatpush1.msra.mxu0 %v1794
  %2484 = vmatprep.subr.mxu0 %v1857
  %2485 = vmatpush2.msra.mxu0 %v1856
  %2486 = vmatprep.subr.mxu0 %v1855
  %2487 = vmatpush2.msra.mxu0 %v1854
  %2488 = vmatprep.subr.mxu0 %v1853
  %2489 = vmatpush2.msra.mxu0 %v1852
  %2490 = vmatprep.subr.mxu0 %v1851
  %2491 = vmatpush2.msra.mxu0 %v1850
  %2492 = vmatprep.subr.mxu0 %v1849
  %2493 = vmatpush2.msra.mxu0 %v1848
  %2494 = vmatprep.subr.mxu0 %v1847
  %2495 = vmatpush2.msra.mxu0 %v1846
  %2496 = vmatprep.subr.mxu0 %v1845
  %2497 = vmatpush2.msra.mxu0 %v1844
  %2498 = vmatprep.subr.mxu0 %v1843
  %2499 = vmatpush2.msra.mxu0 %v1842
  %2500 = vmatprep.subr.mxu0 %v1841
  %2501 = vmatpush2.msra.mxu0 %v1840
  %2502 = vmatprep.subr.mxu0 %v1839
  %2503 = vmatpush2.msra.mxu0 %v1838
  %2504 = vmatprep.subr.mxu0 %v1837
  %2505 = vmatpush2.msra.mxu0 %v1836
  %2506 = vmatprep.subr.mxu0 %v1835
  %2507 = vmatpush2.msra.mxu0 %v1834
  %2508 = vmatprep.subr.mxu0 %v1833
  %2509 = vmatpush2.msra.mxu0 %v1832
  %2510 = vmatprep.subr.mxu0 %v1831
  %2511 = vmatpush2.msra.mxu0 %v1830
  %2512 = vmatprep.subr.mxu0 %v1829
  %2513 = vmatpush2.msra.mxu0 %v1828
  %2514 = vmatprep.subr.mxu0 %v1827
  %2515 = vmatpush2.msra.mxu0 %v1826
  %2516 = vmatprep.mubr.f32.mxu0 %v2365
  %2517 = vmatmul.mubr.f32.gmra.mxu0 %v2364
  %v2518 = vpop.f32.mrf.mxu0
  %v2519 = vadd.f32 %v2448, %v2518
  %v2520 = vpop.f32.mrf.mxu0
  %v2521 = vadd.f32 %v2450, %v2520
  %2522 = vdwg.mxu0
  %2523 = vmatprep.subr.mxu0 %v1889
  %2524 = vmatpush1.msra.mxu0 %v1888
  %2525 = vmatprep.subr.mxu0 %v1887
  %2526 = vmatpush1.msra.mxu0 %v1886
  %2527 = vmatprep.subr.mxu0 %v1885
  %2528 = vmatpush1.msra.mxu0 %v1884
  %2529 = vmatprep.subr.mxu0 %v1883
  %2530 = vmatpush1.msra.mxu0 %v1882
  %2531 = vmatprep.subr.mxu0 %v1881
  %2532 = vmatpush1.msra.mxu0 %v1880
  %2533 = vmatprep.subr.mxu0 %v1879
  %2534 = vmatpush1.msra.mxu0 %v1878
  %2535 = vmatprep.subr.mxu0 %v1877
  %2536 = vmatpush1.msra.mxu0 %v1876
  %2537 = vmatprep.subr.mxu0 %v1875
  %2538 = vmatpush1.msra.mxu0 %v1874
  %2539 = vmatprep.subr.mxu0 %v1873
  %2540 = vmatpush1.msra.mxu0 %v1872
  %2541 = vmatprep.subr.mxu0 %v1871
  %2542 = vmatpush1.msra.mxu0 %v1870
  %2543 = vmatprep.subr.mxu0 %v1869
  %2544 = vmatpush1.msra.mxu0 %v1868
  %2545 = vmatprep.subr.mxu0 %v1867
  %2546 = vmatpush1.msra.mxu0 %v1866
  %2547 = vmatprep.subr.mxu0 %v1865
  %2548 = vmatpush1.msra.mxu0 %v1864
  %2549 = vmatprep.subr.mxu0 %v1863
  %2550 = vmatpush1.msra.mxu0 %v1862
  %2551 = vmatprep.subr.mxu0 %v1861
  %2552 = vmatpush1.msra.mxu0 %v1860
  %2553 = vmatprep.subr.mxu0 %v1859
  %2554 = vmatpush1.msra.mxu0 %v1858
  %2555 = vmatprep.subr.mxu0 %v1921
  %2556 = vmatpush2.msra.mxu0 %v1920
  %2557 = vmatprep.subr.mxu0 %v1919
  %2558 = vmatpush2.msra.mxu0 %v1918
  %2559 = vmatprep.subr.mxu0 %v1917
  %2560 = vmatpush2.msra.mxu0 %v1916
  %2561 = vmatprep.subr.mxu0 %v1915
  %2562 = vmatpush2.msra.mxu0 %v1914
  %2563 = vmatprep.subr.mxu0 %v1913
  %2564 = vmatpush2.msra.mxu0 %v1912
  %2565 = vmatprep.subr.mxu0 %v1911
  %2566 = vmatpush2.msra.mxu0 %v1910
  %2567 = vmatprep.subr.mxu0 %v1909
  %2568 = vmatpush2.msra.mxu0 %v1908
  %2569 = vmatprep.subr.mxu0 %v1907
  %2570 = vmatpush2.msra.mxu0 %v1906
  %2571 = vmatprep.subr.mxu0 %v1905
  %2572 = vmatpush2.msra.mxu0 %v1904
  %2573 = vmatprep.subr.mxu0 %v1903
  %2574 = vmatpush2.msra.mxu0 %v1902
  %2575 = vmatprep.subr.mxu0 %v1901
  %2576 = vmatpush2.msra.mxu0 %v1900
  %2577 = vmatprep.subr.mxu0 %v1899
  %2578 = vmatpush2.msra.mxu0 %v1898
  %2579 = vmatprep.subr.mxu0 %v1897
  %2580 = vmatpush2.msra.mxu0 %v1896
  %2581 = vmatprep.subr.mxu0 %v1895
  %2582 = vmatpush2.msra.mxu0 %v1894
  %2583 = vmatprep.subr.mxu0 %v1893
  %2584 = vmatpush2.msra.mxu0 %v1892
  %2585 = vmatprep.subr.mxu0 %v1891
  %2586 = vmatpush2.msra.mxu0 %v1890
  %2587 = vmatprep.mubr.f32.mxu0 %v2367
  %2588 = vmatmul.mubr.f32.gmra.mxu0 %v2366
  %v2589 = vpop.f32.mrf.mxu0
  %v2590 = vadd.f32 %v2519, %v2589
  %v2591 = vpop.f32.mrf.mxu0
  %v2592 = vadd.f32 %v2521, %v2591
  %2593 = vdwg.mxu0
  %2594 = vmatprep.subr.mxu0 %v1953
  %2595 = vmatpush1.msra.mxu0 %v1952
  %2596 = vmatprep.subr.mxu0 %v1951
  %2597 = vmatpush1.msra.mxu0 %v1950
  %2598 = vmatprep.subr.mxu0 %v1949
  %2599 = vmatpush1.msra.mxu0 %v1948
  %2600 = vmatprep.subr.mxu0 %v1947
  %2601 = vmatpush1.msra.mxu0 %v1946
  %2602 = vmatprep.subr.mxu0 %v1945
  %2603 = vmatpush1.msra.mxu0 %v1944
  %2604 = vmatprep.subr.mxu0 %v1943
  %2605 = vmatpush1.msra.mxu0 %v1942
  %2606 = vmatprep.subr.mxu0 %v1941
  %2607 = vmatpush1.msra.mxu0 %v1940
  %2608 = vmatprep.subr.mxu0 %v1939
  %2609 = vmatpush1.msra.mxu0 %v1938
  %2610 = vmatprep.subr.mxu0 %v1937
  %2611 = vmatpush1.msra.mxu0 %v1936
  %2612 = vmatprep.subr.mxu0 %v1935
  %2613 = vmatpush1.msra.mxu0 %v1934
  %2614 = vmatprep.subr.mxu0 %v1933
  %2615 = vmatpush1.msra.mxu0 %v1932
  %2616 = vmatprep.subr.mxu0 %v1931
  %2617 = vmatpush1.msra.mxu0 %v1930
  %2618 = vmatprep.subr.mxu0 %v1929
  %2619 = vmatpush1.msra.mxu0 %v1928
  %2620 = vmatprep.subr.mxu0 %v1927
  %2621 = vmatpush1.msra.mxu0 %v1926
  %2622 = vmatprep.subr.mxu0 %v1925
  %2623 = vmatpush1.msra.mxu0 %v1924
  %2624 = vmatprep.subr.mxu0 %v1923
  %2625 = vmatpush1.msra.mxu0 %v1922
  %2626 = vmatprep.subr.mxu0 %v1985
  %2627 = vmatpush2.msra.mxu0 %v1984
  %2628 = vmatprep.subr.mxu0 %v1983
  %2629 = vmatpush2.msra.mxu0 %v1982
  %2630 = vmatprep.subr.mxu0 %v1981
  %2631 = vmatpush2.msra.mxu0 %v1980
  %2632 = vmatprep.subr.mxu0 %v1979
  %2633 = vmatpush2.msra.mxu0 %v1978
  %2634 = vmatprep.subr.mxu0 %v1977
  %2635 = vmatpush2.msra.mxu0 %v1976
  %2636 = vmatprep.subr.mxu0 %v1975
  %2637 = vmatpush2.msra.mxu0 %v1974
  %2638 = vmatprep.subr.mxu0 %v1973
  %2639 = vmatpush2.msra.mxu0 %v1972
  %2640 = vmatprep.subr.mxu0 %v1971
  %2641 = vmatpush2.msra.mxu0 %v1970
  %2642 = vmatprep.subr.mxu0 %v1969
  %2643 = vmatpush2.msra.mxu0 %v1968
  %2644 = vmatprep.subr.mxu0 %v1967
  %2645 = vmatpush2.msra.mxu0 %v1966
  %2646 = vmatprep.subr.mxu0 %v1965
  %2647 = vmatpush2.msra.mxu0 %v1964
  %2648 = vmatprep.subr.mxu0 %v1963
  %2649 = vmatpush2.msra.mxu0 %v1962
  %2650 = vmatprep.subr.mxu0 %v1961
  %2651 = vmatpush2.msra.mxu0 %v1960
  %2652 = vmatprep.subr.mxu0 %v1959
  %2653 = vmatpush2.msra.mxu0 %v1958
  %2654 = vmatprep.subr.mxu0 %v1957
  %2655 = vmatpush2.msra.mxu0 %v1956
  %2656 = vmatprep.subr.mxu0 %v1955
  %2657 = vmatpush2.msra.mxu0 %v1954
  %2658 = vmatprep.mubr.f32.mxu0 %v2369
  %2659 = vmatmul.mubr.f32.gmra.mxu0 %v2368
  %v2660 = vpop.f32.mrf.mxu0
  %v2661 = vadd.f32 %v2590, %v2660
  %v2662 = vpop.f32.mrf.mxu0
  %v2663 = vadd.f32 %v2592, %v2662
  %2664 = vdwg.mxu0
  %vm2665 = vcmp.gt.f32.partialorder %v2661, 0.0
  %vm2666 = vcmp.gt.f32.partialorder %v2663, 0.0
  %v2667 = vmul.f32 %v2661, 0.33
  %v2668 = vmul.f32 %v2663, 0.33
  %v2669 = vsel %vm2665, %v2661, %v2667
  %v2670 = vsel %vm2666, %v2663, %v2668
  %v2672 = vlaneseq
  %v2673 = vshrl.u32 %v2672, 7
  %v2674 = vsub.s32 0, %v2673
  %v2675 = vrot.slane %v2019, %v2674
  %2677 = vmatprep.subr.mxu0 0.0
  %2678 = vmatpush1.msra.mxu0 %v2002
  %2679 = vmatprep.subr.mxu0 0.0
  %2680 = vmatpush1.msra.mxu0 %v2001
  %2681 = vmatprep.subr.mxu0 0.0
  %2682 = vmatpush1.msra.mxu0 %v2000
  %2683 = vmatprep.subr.mxu0 0.0
  %2684 = vmatpush1.msra.mxu0 %v1999
  %2685 = vmatprep.subr.mxu0 0.0
  %2686 = vmatpush1.msra.mxu0 %v1998
  %2687 = vmatprep.subr.mxu0 0.0
  %2688 = vmatpush1.msra.mxu0 %v1997
  %2689 = vmatprep.subr.mxu0 0.0
  %2690 = vmatpush1.msra.mxu0 %v1996
  %2691 = vmatprep.subr.mxu0 0.0
  %2692 = vmatpush1.msra.mxu0 %v1995
  %2693 = vmatprep.subr.mxu0 0.0
  %2694 = vmatpush1.msra.mxu0 %v1994
  %2695 = vmatprep.subr.mxu0 0.0
  %2696 = vmatpush1.msra.mxu0 %v1993
  %2697 = vmatprep.subr.mxu0 0.0
  %2698 = vmatpush1.msra.mxu0 %v1992
  %2699 = vmatprep.subr.mxu0 0.0
  %2700 = vmatpush1.msra.mxu0 %v1991
  %2701 = vmatprep.subr.mxu0 0.0
  %2702 = vmatpush1.msra.mxu0 %v1990
  %2703 = vmatprep.subr.mxu0 0.0
  %2704 = vmatpush1.msra.mxu0 %v1989
  %2705 = vmatprep.subr.mxu0 0.0
  %2706 = vmatpush1.msra.mxu0 %v1988
  %2707 = vmatprep.subr.mxu0 0.0
  %2708 = vmatpush1.msra.mxu0 %v1987
  %2709 = vmatprep.subr.mxu0 0.0
  %2710 = vmatpush2.msra.mxu0 %v2018
  %2711 = vmatprep.subr.mxu0 0.0
  %2712 = vmatpush2.msra.mxu0 %v2017
  %2713 = vmatprep.subr.mxu0 0.0
  %2714 = vmatpush2.msra.mxu0 %v2016
  %2715 = vmatprep.subr.mxu0 0.0
  %2716 = vmatpush2.msra.mxu0 %v2015
  %2717 = vmatprep.subr.mxu0 0.0
  %2718 = vmatpush2.msra.mxu0 %v2014
  %2719 = vmatprep.subr.mxu0 0.0
  %2720 = vmatpush2.msra.mxu0 %v2013
  %2721 = vmatprep.subr.mxu0 0.0
  %2722 = vmatpush2.msra.mxu0 %v2012
  %2723 = vmatprep.subr.mxu0 0.0
  %2724 = vmatpush2.msra.mxu0 %v2011
  %2725 = vmatprep.subr.mxu0 0.0
  %2726 = vmatpush2.msra.mxu0 %v2010
  %2727 = vmatprep.subr.mxu0 0.0
  %2728 = vmatpush2.msra.mxu0 %v2009
  %2729 = vmatprep.subr.mxu0 0.0
  %2730 = vmatpush2.msra.mxu0 %v2008
  %2731 = vmatprep.subr.mxu0 0.0
  %2732 = vmatpush2.msra.mxu0 %v2007
  %2733 = vmatprep.subr.mxu0 0.0
  %2734 = vmatpush2.msra.mxu0 %v2006
  %2735 = vmatprep.subr.mxu0 0.0
  %2736 = vmatpush2.msra.mxu0 %v2005
  %2737 = vmatprep.subr.mxu0 0.0
  %2738 = vmatpush2.msra.mxu0 %v2004
  %2739 = vmatprep.subr.mxu0 0.0
  %2740 = vmatpush2.msra.mxu0 %v2003
  %2741 = vmatprep.mubr.f32.mxu0 %v2670
  %2742 = vmatmul.mubr.f32.gmra.mxu0 %v2669
  %v2743 = vpop.f32.mrf.mxu0
  %v2744 = vadd.f32 %v2675, %v2743
  %v2745 = vpop.f32.mrf.mxu0
  %2746 = vdwg.mxu0
  %vm2747 = vcmp.gt.f32.partialorder %v2744, 0.0
  %v2748 = vmul.f32 %v2744, 0.33
  %v2749 = vsel %vm2747, %v2744, %v2748
  %v2750 = vmul.f32 %v2749, 0.999995
  %v2752 = vlaneseq
  %v2753 = vshrl.u32 %v2752, 7
  %v2754 = vsub.s32 0, %v2753
  %v2755 = vrot.slane %v2036, %v2754
  %2757 = vmatprep.subr.mxu0 0.0
  %2758 = vmatpush1.msra.mxu0 %v2035
  %2759 = vmatprep.subr.mxu0 0.0
  %2760 = vmatpush1.msra.mxu0 %v2034
  %2761 = vmatprep.subr.mxu0 0.0
  %2762 = vmatpush1.msra.mxu0 %v2033
  %2763 = vmatprep.subr.mxu0 0.0
  %2764 = vmatpush1.msra.mxu0 %v2032
  %2765 = vmatprep.subr.mxu0 0.0
  %2766 = vmatpush1.msra.mxu0 %v2031
  %2767 = vmatprep.subr.mxu0 0.0
  %2768 = vmatpush1.msra.mxu0 %v2030
  %2769 = vmatprep.subr.mxu0 0.0
  %2770 = vmatpush1.msra.mxu0 %v2029
  %2771 = vmatprep.subr.mxu0 0.0
  %2772 = vmatpush1.msra.mxu0 %v2028
  %2773 = vmatprep.subr.mxu0 0.0
  %2774 = vmatpush1.msra.mxu0 %v2027
  %2775 = vmatprep.subr.mxu0 0.0
  %2776 = vmatpush1.msra.mxu0 %v2026
  %2777 = vmatprep.subr.mxu0 0.0
  %2778 = vmatpush1.msra.mxu0 %v2025
  %2779 = vmatprep.subr.mxu0 0.0
  %2780 = vmatpush1.msra.mxu0 %v2024
  %2781 = vmatprep.subr.mxu0 0.0
  %2782 = vmatpush1.msra.mxu0 %v2023
  %2783 = vmatprep.subr.mxu0 0.0
  %2784 = vmatpush1.msra.mxu0 %v2022
  %2785 = vmatprep.subr.mxu0 0.0
  %2786 = vmatpush1.msra.mxu0 %v2021
  %2787 = vmatprep.subr.mxu0 0.0
  %2788 = vmatpush1.msra.mxu0 %v2020
  %2789 = vmatprep.subr.mxu0 0.0
  %2790 = vmatpush2.msra.mxu0 0.0
  %2791 = vmatprep.subr.mxu0 0.0
  %2792 = vmatpush2.msra.mxu0 0.0
  %2793 = vmatprep.subr.mxu0 0.0
  %2794 = vmatpush2.msra.mxu0 0.0
  %2795 = vmatprep.subr.mxu0 0.0
  %2796 = vmatpush2.msra.mxu0 0.0
  %2797 = vmatprep.subr.mxu0 0.0
  %2798 = vmatpush2.msra.mxu0 0.0
  %2799 = vmatprep.subr.mxu0 0.0
  %2800 = vmatpush2.msra.mxu0 0.0
  %2801 = vmatprep.subr.mxu0 0.0
  %2802 = vmatpush2.msra.mxu0 0.0
  %2803 = vmatprep.subr.mxu0 0.0
  %2804 = vmatpush2.msra.mxu0 0.0
  %2805 = vmatprep.subr.mxu0 0.0
  %2806 = vmatpush2.msra.mxu0 0.0
  %2807 = vmatprep.subr.mxu0 0.0
  %2808 = vmatpush2.msra.mxu0 0.0
  %2809 = vmatprep.subr.mxu0 0.0
  %2810 = vmatpush2.msra.mxu0 0.0
  %2811 = vmatprep.subr.mxu0 0.0
  %2812 = vmatpush2.msra.mxu0 0.0
  %2813 = vmatprep.subr.mxu0 0.0
  %2814 = vmatpush2.msra.mxu0 0.0
  %2815 = vmatprep.subr.mxu0 0.0
  %2816 = vmatpush2.msra.mxu0 0.0
  %2817 = vmatprep.subr.mxu0 0.0
  %2818 = vmatpush2.msra.mxu0 0.0
  %2819 = vmatprep.subr.mxu0 0.0
  %2820 = vmatpush2.msra.mxu0 0.0
  %2821 = vmatprep.mubr.f32.mxu0 0.0
  %2822 = vmatmul.mubr.f32.gmra.mxu0 %v2750
  %v2823 = vpop.f32.mrf.mxu0
  %v2824 = vadd.f32 %v2755, %v2823
  %v2825 = vpop.f32.mrf.mxu0
  %2826 = vdwg.mxu0
  %vm2827 = vcmp.gt.f32.partialorder %v2824, 0.0
  %v2828 = vmul.f32 %v2824, 0.33
  %v2829 = vsel %vm2827, %v2824, %v2828
  %v2830 = vmul.f32 %v2829, 0.999995
  %v2832 = vlaneseq
  %v2833 = vshrl.u32 %v2832, 7
  %v2834 = vsub.s32 0, %v2833
  %v2835 = vrot.slane %v2041, %v2834
  %vm2837 = vcmask 244736
  %v2839 = vsel %vm2837, %v2830, 0
  %vm2841 = vcmask 1045504
  %v2843 = vsel %vm2841, %v2040, 0
  %2845 = vmatprep.subr.mxu0 0.0
  %2846 = vmatpush1.msra.mxu0 0.0
  %2847 = vmatprep.subr.mxu0 0.0
  %2848 = vmatpush1.msra.mxu0 0.0
  %2849 = vmatprep.subr.mxu0 0.0
  %2850 = vmatpush1.msra.mxu0 0.0
  %2851 = vmatprep.subr.mxu0 0.0
  %2852 = vmatpush1.msra.mxu0 0.0
  %2853 = vmatprep.subr.mxu0 0.0
  %2854 = vmatpush1.msra.mxu0 0.0
  %2855 = vmatprep.subr.mxu0 0.0
  %2856 = vmatpush1.msra.mxu0 0.0
  %2857 = vmatprep.subr.mxu0 0.0
  %2858 = vmatpush1.msra.mxu0 0.0
  %2859 = vmatprep.subr.mxu0 0.0
  %2860 = vmatpush1.msra.mxu0 0.0
  %2861 = vmatprep.subr.mxu0 0.0
  %2862 = vmatpush1.msra.mxu0 0.0
  %2863 = vmatprep.subr.mxu0 0.0
  %2864 = vmatpush1.msra.mxu0 0.0
  %2865 = vmatprep.subr.mxu0 0.0
  %2866 = vmatpush1.msra.mxu0 0.0
  %2867 = vmatprep.subr.mxu0 0.0
  %2868 = vmatpush1.msra.mxu0 0.0
  %2869 = vmatprep.subr.mxu0 0.0
  %2870 = vmatpush1.msra.mxu0 %v2843
  %2871 = vmatprep.subr.mxu0 0.0
  %2872 = vmatpush1.msra.mxu0 %v2039
  %2873 = vmatprep.subr.mxu0 0.0
  %2874 = vmatpush1.msra.mxu0 %v2038
  %2875 = vmatprep.subr.mxu0 0.0
  %2876 = vmatpush1.msra.mxu0 %v2037
  %2877 = vmatprep.subr.mxu0 0.0
  %2878 = vmatpush2.msra.mxu0 0.0
  %2879 = vmatprep.subr.mxu0 0.0
  %2880 = vmatpush2.msra.mxu0 0.0
  %2881 = vmatprep.subr.mxu0 0.0
  %2882 = vmatpush2.msra.mxu0 0.0
  %2883 = vmatprep.subr.mxu0 0.0
  %2884 = vmatpush2.msra.mxu0 0.0
  %2885 = vmatprep.subr.mxu0 0.0
  %2886 = vmatpush2.msra.mxu0 0.0
  %2887 = vmatprep.subr.mxu0 0.0
  %2888 = vmatpush2.msra.mxu0 0.0
  %2889 = vmatprep.subr.mxu0 0.0
  %2890 = vmatpush2.msra.mxu0 0.0
  %2891 = vmatprep.subr.mxu0 0.0
  %2892 = vmatpush2.msra.mxu0 0.0
  %2893 = vmatprep.subr.mxu0 0.0
  %2894 = vmatpush2.msra.mxu0 0.0
  %2895 = vmatprep.subr.mxu0 0.0
  %2896 = vmatpush2.msra.mxu0 0.0
  %2897 = vmatprep.subr.mxu0 0.0
  %2898 = vmatpush2.msra.mxu0 0.0
  %2899 = vmatprep.subr.mxu0 0.0
  %2900 = vmatpush2.msra.mxu0 0.0
  %2901 = vmatprep.subr.mxu0 0.0
  %2902 = vmatpush2.msra.mxu0 0.0
  %2903 = vmatprep.subr.mxu0 0.0
  %2904 = vmatpush2.msra.mxu0 0.0
  %2905 = vmatprep.subr.mxu0 0.0
  %2906 = vmatpush2.msra.mxu0 0.0
  %2907 = vmatprep.subr.mxu0 0.0
  %2908 = vmatpush2.msra.mxu0 0.0
  %2909 = vmatprep.mubr.f32.mxu0 0.0
  %2910 = vmatmul.mubr.f32.gmra.mxu0 %v2839
  %v2911 = vpop.f32.mrf.mxu0
  %v2912 = vadd.f32 %v2835, %v2911
  %v2913 = vpop.f32.mrf.mxu0
  %2914 = vdwg.mxu0
  %vm2915 = vcmask 1024
  %2916 = vst.msk [vmem:[%s20] sm:$0x3] %vm2915, %v2912
  // Predicated region
  $region82: #{brainnet_cnn_forward.1} parent=0 // pred_check
    _
  $region83: #{brainnet_cnn_forward.1} parent=0 // pred_check_branch
    %2918 = sbr.rel (0) target = $region85
  $region84: #{brainnet_cnn_forward.1} parent=0 // pred_region
    _
  $region85: #{brainnet_cnn_forward.1} parent=0 // pred_fallthru
    _
  // Predicated region
  $region86: #{brainnet_cnn_forward.1} parent=0 // pred_check
    _
  $region87: #{brainnet_cnn_forward.1} parent=0 // pred_check_branch
    %2920 = sbr.rel (0) target = $region89
  $region88: #{brainnet_cnn_forward.1} parent=0 // pred_region
    _
  $region89: #{brainnet_cnn_forward.1} parent=0 // pred_fallthru
    _

</llo_original>
